<compile_context>
chip_gen: v7x
topology: tpu7x:2x2x1
jax: 0.10.0
libtpu: 0.0.40
codegen_flags: <defaults>
</compile_context>

<pallas_src>
import math

import jax
import jax.numpy as jnp
from jax.experimental import pallas as pl
from jax.experimental.pallas import tpu as pltpu

# ----------------------------- config ---------------------------------------
B = 2               # batch
T = 8               # text seq len
VOCAB = 64
D = 32              # hidden size (both towers)
H = 2               # attention heads
DH = D // H
FFN = 64
IMG = 32            # image H=W
CIN = 3
PATCH = 8
NPATCH = (IMG // PATCH) ** 2          # 16
NV = NPATCH + 1                       # +CLS = 17
PDIM = CIN * PATCH * PATCH            # 192
PROJ = 16                             # per-tower projection dim
EMB = 2 * PROJ                        # concatenated embedding size ("1024" role)
HID = 16                              # head hidden dim
N_SOURCE = 5
N_TYPE = 5                            # use_redundant_labels=True
NOUT = 1 + N_TYPE + N_SOURCE          # 11 logits total
OUT_PAD = 128                         # lane-dense output width

# rows of the packed [NVEC, 128] vector slab
(VT_LN1G, VT_LN1B, VT_BQKV, VT_BO, VT_LN2G, VT_LN2B, VT_B1, VT_B2,
 VT_LNFG, VT_LNFB, VT_PROJB,
 VV_PATCHB, VV_CLS, VV_LNPREG, VV_LNPREB, VV_LN1G, VV_LN1B, VV_BQKV, VV_BO,
 VV_LN2G, VV_LN2B, VV_B1, VV_B2, VV_LNPOSTG, VV_LNPOSTB, VV_PROJB,
 VH_B1, VH_B2) = range(28)
NVEC = 28

_COMPILER_PARAMS = pltpu.CompilerParams(vmem_limit_bytes=8 * 1024 * 1024)


# ----------------------- in-kernel value helpers ------------------------------
def _layernorm(x, g, b):
    mu = jnp.mean(x, axis=-1, keepdims=True)
    var = jnp.mean((x - mu) ** 2, axis=-1, keepdims=True)
    return (x - mu) * jax.lax.rsqrt(var + 1e-5) * g + b


def _encoder_layer(x, n, bias, ln1_g, ln1_b, wqkv, bqkv, wo, bo,
                   ln2_g, ln2_b, w1, b1, w2, b2):
    """Pre-LN CLIP transformer layer on a [B*n, D] f32 slab.

    Weights are bf16 (activations cast at the matmul boundary); biases/gains
    and all LN / softmax math stay f32.  The 1/sqrt(DH) scale is pre-folded
    into the Q columns of wqkv/bqkv host-side.
    bias: optional [B, n, n] additive attention bias (None for vision tower).
    """
    h = _layernorm(x, ln1_g, ln1_b)

    # fused QKV: one MXU push of [B*n, D] x [D, 3D]
    qkv = jnp.dot(h.astype(jnp.bfloat16), wqkv,
                  preferred_element_type=jnp.float32) + bqkv            # [B*n, 3D]
    q = qkv[:, 0 * D:1 * D].reshape(B, n, D)
    k = qkv[:, 1 * D:2 * D].reshape(B, n, D)
    v = qkv[:, 2 * D:3 * D].reshape(B, n, D)

    attn = None
    for hh in range(H):                                   # static unroll, H=2
        sl = slice(hh * DH, (hh + 1) * DH)
        s = jnp.einsum("bqd,bkd->bqk",
                       q[..., sl].astype(jnp.bfloat16),
                       k[..., sl].astype(jnp.bfloat16),
                       preferred_element_type=jnp.float32)              # [B, n, n]
        if bias is not None:
            s = s + bias
        s = s - jnp.max(s, axis=-1, keepdims=True)
        p = jnp.exp(s)
        p = p * pl.reciprocal(jnp.sum(p, axis=-1, keepdims=True), approx=True)
        o_h = jnp.einsum("bqk,bkd->bqd",
                         p.astype(jnp.bfloat16),
                         v[..., sl].astype(jnp.bfloat16),
                         preferred_element_type=jnp.float32)            # [B, n, DH]
        # per-head out-projection accumulation (avoids lane concat of heads)
        contrib = jnp.dot(o_h.reshape(B * n, DH).astype(jnp.bfloat16),
                          wo[sl, :], preferred_element_type=jnp.float32)
        attn = contrib if attn is None else attn + contrib
    x = x + attn + bo

    h = _layernorm(x, ln2_g, ln2_b)
    f = jnp.dot(h.astype(jnp.bfloat16), w1, preferred_element_type=jnp.float32) + b1
    f = f * jax.nn.sigmoid(1.702 * f)                                   # quick-gelu
    f = jnp.dot(f.astype(jnp.bfloat16), w2, preferred_element_type=jnp.float32) + b2
    return x + f


# ----------------------------- fused kernel ----------------------------------
def clip_fused_kernel(x_text_ref, mask_ref, patches_ref, pos_v_ref, vec_ref,
                      wqkv_ref, wo_ref, w1_ref, w2_ref, projw_ref,
                      patchw_ref, hw1t_ref, hw1i_ref, hw2_ref,
                      out_ref, xv_ref):
    vec = vec_ref[...]                                    # [NVEC, 128] f32

    def V(i, w):
        return vec[i:i + 1, :w]                           # (1, w) static slice

    # ------------------------------ text tower ------------------------------
    xt = x_text_ref[...]                                  # [B*T, D]
    mask = mask_ref[...]                                  # [B, T] f32 (1/0)

    qi = jax.lax.broadcasted_iota(jnp.int32, (T, T), 0)
    ki = jax.lax.broadcasted_iota(jnp.int32, (T, T), 1)
    causal = jnp.where(ki <= qi, 0.0, -1e9).astype(jnp.float32)          # [T, T]
    pad = jnp.where(mask > 0.0, 0.0, -1e9).astype(jnp.float32)           # [B, T]
    bias = causal[None, :, :] + pad[:, None, :]                          # [B, T, T]

    xt = _encoder_layer(
        xt, T, bias,
        V(VT_LN1G, D), V(VT_LN1B, D), wqkv_ref[0], V(VT_BQKV, 3 * D),
        wo_ref[0], V(VT_BO, D), V(VT_LN2G, D), V(VT_LN2B, D),
        w1_ref[0], V(VT_B1, FFN), w2_ref[0], V(VT_B2, D))

    # EOS pooling (last real token per row) as a one-hot matmul on the MXU
    eos = jnp.sum(mask, axis=-1, keepdims=True) - 1.0                    # [B, 1]
    col = jax.lax.broadcasted_iota(jnp.int32, (B, B * T), 1).astype(jnp.float32)
    row = jax.lax.broadcasted_iota(jnp.int32, (B, B * T), 0).astype(jnp.float32)
    sel_t = (col == row * T + eos).astype(jnp.float32)                   # [B, B*T]
    pooled_t = jnp.dot(sel_t, xt, preferred_element_type=jnp.float32)    # [B, D]
    pooled_t = _layernorm(pooled_t, V(VT_LNFG, D), V(VT_LNFB, D))
    tf = jnp.dot(pooled_t.astype(jnp.bfloat16), projw_ref[0],
                 preferred_element_type=jnp.float32) + V(VT_PROJB, PROJ)  # [B, PROJ]

    # ----------------------------- vision tower -----------------------------
    # patch embedding on the 32 real patch rows only (sublane aligned)
    pe = jnp.dot(patches_ref[...].astype(jnp.bfloat16), patchw_ref[...],
                 preferred_element_type=jnp.float32)                     # [B*NPATCH, D]
    pos = pos_v_ref[...]                                                 # [NV, D]
    cls_row = V(VV_CLS, D) + pos[0:1, :]                                 # [1, D]
    patch_b = V(VV_PATCHB, D)
    for b in range(B):                                     # static, B=2: row stores
        xv_ref[b * NV:b * NV + 1, :] = cls_row
        xv_ref[b * NV + 1:b * NV + 1 + NPATCH, :] = (
            pe[b * NPATCH:(b + 1) * NPATCH, :] + patch_b + pos[1:NV, :])
    xv = xv_ref[...]                                                     # [B*NV, D]

    xv = _layernorm(xv, V(VV_LNPREG, D), V(VV_LNPREB, D))
    xv = _encoder_layer(
        xv, NV, None,
        V(VV_LN1G, D), V(VV_LN1B, D), wqkv_ref[1], V(VV_BQKV, 3 * D),
        wo_ref[1], V(VV_BO, D), V(VV_LN2G, D), V(VV_LN2B, D),
        w1_ref[1], V(VV_B1, FFN), w2_ref[1], V(VV_B2, D))

    # CLS pooling as a one-hot matmul
    colv = jax.lax.broadcasted_iota(jnp.int32, (B, B * NV), 1)
    rowv = jax.lax.broadcasted_iota(jnp.int32, (B, B * NV), 0)
    sel_v = (colv == rowv * NV).astype(jnp.float32)                      # [B, B*NV]
    pooled_v = jnp.dot(sel_v, xv, preferred_element_type=jnp.float32)    # [B, D]
    pooled_v = _layernorm(pooled_v, V(VV_LNPOSTG, D), V(VV_LNPOSTB, D))
    vf = jnp.dot(pooled_v.astype(jnp.bfloat16), projw_ref[1],
                 preferred_element_type=jnp.float32) + V(VV_PROJB, PROJ)  # [B, PROJ]

    # ------------------------------- heads ----------------------------------
    # emb = concat([text, image]); w1 split into halves so no lane concat is
    # needed; all 3 heads fused in one hidden slab; block-diag w2 -> [B, 128]
    h = (jnp.dot(tf.astype(jnp.bfloat16), hw1t_ref[...],
                 preferred_element_type=jnp.float32)
         + jnp.dot(vf.astype(jnp.bfloat16), hw1i_ref[...],
                   preferred_element_type=jnp.float32)
         + V(VH_B1, 3 * HID))                                            # [B, 48]
    h = jnp.maximum(h, 0.0)
    out = jnp.dot(h.astype(jnp.bfloat16), hw2_ref[...],
                  preferred_element_type=jnp.float32) + vec[VH_B2:VH_B2 + 1, :]
    out_ref[...] = out                                                   # [B, 128]


# ----------------------------- pallas_call wrapper ----------------------------
@jax.jit
def _forward_impl(params, ids, mask, pixels):
    # host/XLA side: pure layout glue only
    x_text = (params["tok_emb"][ids] + params["pos_t"][None, :, :]).reshape(B * T, D)
    mask_f = mask.astype(jnp.float32)
    # patch extraction: stride==kernel==PATCH "conv" as pure layout op (NCHW)
    patches = pixels.reshape(B, CIN, IMG // PATCH, PATCH, IMG // PATCH, PATCH)
    patches = patches.transpose(0, 2, 4, 1, 3, 5).reshape(B * NPATCH, PDIM)

    args = (x_text, mask_f, patches, params["pos_v"], params["vec"],
            params["wqkv"], params["wo"], params["w1"], params["w2"],
            params["projw"], params["patch_w"], params["hw1t"],
            params["hw1i"], params["hw2"])

    vspec = pl.BlockSpec(memory_space=pltpu.MemorySpace.VMEM)
    out = pl.pallas_call(
        clip_fused_kernel,
        out_shape=jax.ShapeDtypeStruct((B, OUT_PAD), jnp.float32),
        in_specs=[vspec] * len(args),
        out_specs=vspec,
        scratch_shapes=[pltpu.VMEM((B * NV, D), jnp.float32)],
        compiler_params=_COMPILER_PARAMS,
    )(*args)

    binary_pred = out[:, 0:1]
    multilabel_pred = out[:, 1:1 + N_TYPE]
    source_pred = out[:, 1 + N_TYPE:NOUT]
    return binary_pred, multilabel_pred, source_pred


def clip_model_forward(params, inputs):
    """Mirrors clip_model.forward: inputs is a list of dicts with
    'input_ids' [1,T], 'attention_mask' [1,T], 'pixel_values' [1,3,32,32]."""
    ids = jnp.stack([e["input_ids"][0] for e in inputs])
    mask = jnp.stack([e["attention_mask"][0] for e in inputs])
    pixels = jnp.stack([e["pixel_values"][0] for e in inputs])
    return _forward_impl(params, ids, mask, pixels)


# ----------------------------- params (pre-packed) ----------------------------
def _padrow(v):
    r = jnp.zeros((128,), jnp.float32)
    return r.at[:v.shape[0]].set(v.astype(jnp.float32))


def init_params(key):
    ks = iter(jax.random.split(key, 32))

    def nrm(shape, scale=0.02):
        return jax.random.normal(next(ks), shape, jnp.float32) * scale

    def layer_raw():
        return dict(
            ln1_g=jnp.ones((D,), jnp.float32), ln1_b=jnp.zeros((D,), jnp.float32),
            wqkv=nrm((D, 3 * D)), bqkv=jnp.zeros((3 * D,), jnp.float32),
            wo=nrm((D, D)), bo=jnp.zeros((D,), jnp.float32),
            ln2_g=jnp.ones((D,), jnp.float32), ln2_b=jnp.zeros((D,), jnp.float32),
            w1=nrm((D, FFN)), b1=jnp.zeros((FFN,), jnp.float32),
            w2=nrm((FFN, D)), b2=jnp.zeros((D,), jnp.float32))

    tl = layer_raw()
    vl = layer_raw()

    tok_emb = nrm((VOCAB, D))
    pos_t = nrm((T, D))
    lnf_g = jnp.ones((D,), jnp.float32); lnf_b = jnp.zeros((D,), jnp.float32)
    proj_t_w = nrm((D, PROJ)); proj_t_b = jnp.zeros((PROJ,), jnp.float32)

    patch_w = nrm((PDIM, D)); patch_b = jnp.zeros((D,), jnp.float32)
    cls_emb = nrm((D,))
    pos_v = nrm((NV, D))
    lnpre_g = jnp.ones((D,), jnp.float32); lnpre_b = jnp.zeros((D,), jnp.float32)
    lnpost_g = jnp.ones((D,), jnp.float32); lnpost_b = jnp.zeros((D,), jnp.float32)
    proj_v_w = nrm((D, PROJ)); proj_v_b = jnp.zeros((PROJ,), jnp.float32)

    def head_raw(out_dim):
        return dict(w1=nrm((EMB, HID)), b1=jnp.zeros((HID,), jnp.float32),
                    w2=nrm((HID, out_dim)), b2=jnp.zeros((out_dim,), jnp.float32))
    hb, hm, hs = head_raw(1), head_raw(N_TYPE), head_raw(N_SOURCE)

    # fold attention scale 1/sqrt(DH) into the Q columns of wqkv / bqkv
    scale = 1.0 / math.sqrt(DH)
    t_wqkv = tl["wqkv"].at[:, :D].multiply(scale)
    t_bqkv = tl["bqkv"].at[:D].multiply(scale)
    v_wqkv = vl["wqkv"].at[:, :D].multiply(scale)
    v_bqkv = vl["bqkv"].at[:D].multiply(scale)

    # packed vector slab [NVEC, 128] f32
    rows = [None] * NVEC
    rows[VT_LN1G] = tl["ln1_g"]; rows[VT_LN1B] = tl["ln1_b"]
    rows[VT_BQKV] = t_bqkv; rows[VT_BO] = tl["bo"]
    rows[VT_LN2G] = tl["ln2_g"]; rows[VT_LN2B] = tl["ln2_b"]
    rows[VT_B1] = tl["b1"]; rows[VT_B2] = tl["b2"]
    rows[VT_LNFG] = lnf_g; rows[VT_LNFB] = lnf_b; rows[VT_PROJB] = proj_t_b
    rows[VV_PATCHB] = patch_b; rows[VV_CLS] = cls_emb
    rows[VV_LNPREG] = lnpre_g; rows[VV_LNPREB] = lnpre_b
    rows[VV_LN1G] = vl["ln1_g"]; rows[VV_LN1B] = vl["ln1_b"]
    rows[VV_BQKV] = v_bqkv; rows[VV_BO] = vl["bo"]
    rows[VV_LN2G] = vl["ln2_g"]; rows[VV_LN2B] = vl["ln2_b"]
    rows[VV_B1] = vl["b1"]; rows[VV_B2] = vl["b2"]
    rows[VV_LNPOSTG] = lnpost_g; rows[VV_LNPOSTB] = lnpost_b
    rows[VV_PROJB] = proj_v_b
    rows[VH_B1] = jnp.concatenate([hb["b1"], hm["b1"], hs["b1"]])
    b2_all = jnp.zeros((OUT_PAD,), jnp.float32)
    b2_all = b2_all.at[0:1].set(hb["b2"])
    b2_all = b2_all.at[1:1 + N_TYPE].set(hm["b2"])
    b2_all = b2_all.at[1 + N_TYPE:NOUT].set(hs["b2"])
    rows[VH_B2] = b2_all
    vec = jnp.stack([_padrow(r) for r in rows])

    bf = jnp.bfloat16
    # stacked bf16 weights: index 0 = text tower, 1 = vision tower
    wqkv_s = jnp.stack([t_wqkv, v_wqkv]).astype(bf)
    wo_s = jnp.stack([tl["wo"], vl["wo"]]).astype(bf)
    w1_s = jnp.stack([tl["w1"], vl["w1"]]).astype(bf)
    w2_s = jnp.stack([tl["w2"], vl["w2"]]).astype(bf)
    projw_s = jnp.stack([proj_t_w, proj_v_w]).astype(bf)

    # heads: split first layer (text/image halves), fuse the 3 heads,
    # block-diagonal second layer padded to lane-dense 128 output columns
    hw1t = jnp.concatenate([hb["w1"][:PROJ], hm["w1"][:PROJ], hs["w1"][:PROJ]],
                           axis=1).astype(bf)                            # [PROJ, 48]
    hw1i = jnp.concatenate([hb["w1"][PROJ:], hm["w1"][PROJ:], hs["w1"][PROJ:]],
                           axis=1).astype(bf)                            # [PROJ, 48]
    hw2 = jnp.zeros((3 * HID, OUT_PAD), jnp.float32)
    hw2 = hw2.at[0:HID, 0:1].set(hb["w2"])
    hw2 = hw2.at[HID:2 * HID, 1:1 + N_TYPE].set(hm["w2"])
    hw2 = hw2.at[2 * HID:3 * HID, 1 + N_TYPE:NOUT].set(hs["w2"])
    hw2 = hw2.astype(bf)

    return dict(
        tok_emb=tok_emb, pos_t=pos_t, pos_v=pos_v, vec=vec,
        wqkv=wqkv_s, wo=wo_s, w1=w1_s, w2=w2_s, projw=projw_s,
        patch_w=patch_w.astype(bf), hw1t=hw1t, hw1i=hw1i, hw2=hw2)


# ----------------------------- main --------------------------------------------
if __name__ == "__main__":
    root = jax.random.PRNGKey(0)
    pkey, ikey = jax.random.split(root)
    params = init_params(pkey)

    # build the list-of-dicts input exactly like the PyTorch forward expects
    inputs = []
    for b in range(B):
        k1, k2, ikey = jax.random.split(ikey, 3)
        ids = jax.random.randint(k1, (1, T), 1, VOCAB)
        mask = jnp.ones((1, T), jnp.int32)
        if b == 1:  # some padding on the second example
            mask = mask.at[0, T - 2:].set(0)
        pix = jax.random.normal(k2, (1, CIN, IMG, IMG), jnp.float32)
        inputs.append({"input_ids": ids, "attention_mask": mask, "pixel_values": pix})

    binary_pred, multilabel_pred, source_pred = clip_model_forward(params, inputs)
    jax.block_until_ready((binary_pred, multilabel_pred, source_pred))

    assert binary_pred.shape == (B, 1)
    assert multilabel_pred.shape == (B, N_TYPE)
    assert source_pred.shape == (B, N_SOURCE)
    assert bool(jnp.all(jnp.isfinite(binary_pred)))
    assert bool(jnp.all(jnp.isfinite(multilabel_pred)))
    assert bool(jnp.all(jnp.isfinite(source_pred)))
    print("KERNEL_OK")
</pallas_src>

<mosaic_0001>
module attributes {stable_mosaic.version = 11 : i64} {
  func.func @clip_fused_kernel(%arg0: memref<16x32xf32, #tpu.memory_space<vmem>>, %arg1: memref<2x8xf32, #tpu.memory_space<vmem>>, %arg2: memref<32x192xf32, #tpu.memory_space<vmem>>, %arg3: memref<17x32xf32, #tpu.memory_space<vmem>>, %arg4: memref<28x128xf32, #tpu.memory_space<vmem>>, %arg5: memref<2x32x96xbf16, #tpu.memory_space<vmem>>, %arg6: memref<2x32x32xbf16, #tpu.memory_space<vmem>>, %arg7: memref<2x32x64xbf16, #tpu.memory_space<vmem>>, %arg8: memref<2x64x32xbf16, #tpu.memory_space<vmem>>, %arg9: memref<2x32x16xbf16, #tpu.memory_space<vmem>>, %arg10: memref<192x32xbf16, #tpu.memory_space<vmem>>, %arg11: memref<16x48xbf16, #tpu.memory_space<vmem>>, %arg12: memref<16x48xbf16, #tpu.memory_space<vmem>>, %arg13: memref<48x128xbf16, #tpu.memory_space<vmem>>, %arg14: memref<2x128xf32, #tpu.memory_space<vmem>>, %arg15: memref<34x32xf32, #tpu.memory_space<vmem>>) attributes {dimension_semantics = [], scalar_prefetch = 0 : i64, scratch_operands = 1 : i64, tpu.core_type = #tpu.core_type<tc>} {
    %c0 = arith.constant 0 : index
    %c0_0 = arith.constant 0 : index
    %0 = vector.load %arg4[%c0, %c0_0] : memref<28x128xf32, #tpu.memory_space<vmem>>, vector<28x128xf32>
    %c0_1 = arith.constant 0 : index
    %c0_2 = arith.constant 0 : index
    %1 = vector.load %arg0[%c0_1, %c0_2] : memref<16x32xf32, #tpu.memory_space<vmem>>, vector<16x32xf32>
    %c0_3 = arith.constant 0 : index
    %c0_4 = arith.constant 0 : index
    %2 = vector.load %arg1[%c0_3, %c0_4] : memref<2x8xf32, #tpu.memory_space<vmem>>, vector<2x8xf32>
    %3 = tpu.iota {dimensions = array<i32: 0>} : vector<8x8xi32>
    %4 = tpu.iota {dimensions = array<i32: 1>} : vector<8x8xi32>
    %5 = arith.cmpi sle, %4, %3 : vector<8x8xi32>
    %cst = arith.constant 0.000000e+00 : f32
    %cst_5 = arith.constant -1.000000e+09 : f32
    %6 = vector.broadcast %cst : f32 to vector<8x8xf32>
    %7 = vector.broadcast %cst_5 : f32 to vector<8x8xf32>
    %8 = arith.select %5, %6, %7 : vector<8x8xi1>, vector<8x8xf32>
    %cst_6 = arith.constant 0.000000e+00 : f32
    %9 = vector.broadcast %cst_6 : f32 to vector<2x8xf32>
    %10 = arith.cmpf ogt, %2, %9 : vector<2x8xf32>
    %cst_7 = arith.constant 0.000000e+00 : f32
    %cst_8 = arith.constant -1.000000e+09 : f32
    %11 = vector.broadcast %cst_7 : f32 to vector<2x8xf32>
    %12 = vector.broadcast %cst_8 : f32 to vector<2x8xf32>
    %13 = arith.select %10, %11, %12 : vector<2x8xi1>, vector<2x8xf32>
    %14 = vector.shape_cast %8 : vector<8x8xf32> to vector<1x8x8xf32>
    %15 = vector.shape_cast %13 : vector<2x8xf32> to vector<2x1x8xf32>
    %16 = vector.broadcast %14 : vector<1x8x8xf32> to vector<2x8x8xf32>
    %17 = vector.broadcast %15 : vector<2x1x8xf32> to vector<2x8x8xf32>
    %18 = arith.addf %16, %17 : vector<2x8x8xf32>
    %19 = vector.extract_strided_slice %0 {offsets = [0, 0], sizes = [1, 32], strides = [1, 1]} : vector<28x128xf32> to vector<1x32xf32>
    %20 = vector.extract_strided_slice %0 {offsets = [1, 0], sizes = [1, 32], strides = [1, 1]} : vector<28x128xf32> to vector<1x32xf32>
    %c0_9 = arith.constant 0 : index
    %c0_10 = arith.constant 0 : index
    %c0_11 = arith.constant 0 : index
    %21 = vector.load %arg5[%c0_9, %c0_10, %c0_11] : memref<2x32x96xbf16, #tpu.memory_space<vmem>>, vector<1x32x96xbf16>
    %22 = vector.shape_cast %21 : vector<1x32x96xbf16> to vector<32x96xbf16>
    %23 = vector.extract_strided_slice %0 {offsets = [2, 0], sizes = [1, 96], strides = [1, 1]} : vector<28x128xf32> to vector<1x96xf32>
    %c0_12 = arith.constant 0 : index
    %c0_13 = arith.constant 0 : index
    %c0_14 = arith.constant 0 : index
    %24 = vector.load %arg6[%c0_12, %c0_13, %c0_14] : memref<2x32x32xbf16, #tpu.memory_space<vmem>>, vector<1x32x32xbf16>
    %25 = vector.shape_cast %24 : vector<1x32x32xbf16> to vector<32x32xbf16>
    %26 = vector.extract_strided_slice %0 {offsets = [3, 0], sizes = [1, 32], strides = [1, 1]} : vector<28x128xf32> to vector<1x32xf32>
    %27 = vector.extract_strided_slice %0 {offsets = [4, 0], sizes = [1, 32], strides = [1, 1]} : vector<28x128xf32> to vector<1x32xf32>
    %28 = vector.extract_strided_slice %0 {offsets = [5, 0], sizes = [1, 32], strides = [1, 1]} : vector<28x128xf32> to vector<1x32xf32>
    %c0_15 = arith.constant 0 : index
    %c0_16 = arith.constant 0 : index
    %c0_17 = arith.constant 0 : index
    %29 = vector.load %arg7[%c0_15, %c0_16, %c0_17] : memref<2x32x64xbf16, #tpu.memory_space<vmem>>, vector<1x32x64xbf16>
    %30 = vector.shape_cast %29 : vector<1x32x64xbf16> to vector<32x64xbf16>
    %31 = vector.extract_strided_slice %0 {offsets = [6, 0], sizes = [1, 64], strides = [1, 1]} : vector<28x128xf32> to vector<1x64xf32>
    %c0_18 = arith.constant 0 : index
    %c0_19 = arith.constant 0 : index
    %c0_20 = arith.constant 0 : index
    %32 = vector.load %arg8[%c0_18, %c0_19, %c0_20] : memref<2x64x32xbf16, #tpu.memory_space<vmem>>, vector<1x64x32xbf16>
    %33 = vector.shape_cast %32 : vector<1x64x32xbf16> to vector<64x32xbf16>
    %34 = vector.extract_strided_slice %0 {offsets = [7, 0], sizes = [1, 32], strides = [1, 1]} : vector<28x128xf32> to vector<1x32xf32>
    %cst_21 = arith.constant dense<0.000000e+00> : vector<16xf32>
    %35 = vector.multi_reduction <add>, %1, %cst_21 [1] : vector<16x32xf32> to vector<16xf32>
    %36 = vector.shape_cast %35 : vector<16xf32> to vector<16x1xf32>
    %cst_22 = arith.constant 3.200000e+01 : f32
    %37 = vector.broadcast %cst_22 : f32 to vector<16x1xf32>
    %38 = arith.divf %36, %37 : vector<16x1xf32>
    %39 = vector.broadcast %38 : vector<16x1xf32> to vector<16x32xf32>
    %40 = arith.subf %1, %39 : vector<16x32xf32>
    %41 = arith.mulf %40, %40 : vector<16x32xf32>
    %cst_23 = arith.constant dense<0.000000e+00> : vector<16xf32>
    %42 = vector.multi_reduction <add>, %41, %cst_23 [1] : vector<16x32xf32> to vector<16xf32>
    %43 = vector.shape_cast %42 : vector<16xf32> to vector<16x1xf32>
    %cst_24 = arith.constant 3.200000e+01 : f32
    %44 = vector.broadcast %cst_24 : f32 to vector<16x1xf32>
    %45 = arith.divf %43, %44 : vector<16x1xf32>
    %46 = vector.broadcast %38 : vector<16x1xf32> to vector<16x32xf32>
    %47 = arith.subf %1, %46 : vector<16x32xf32>
    %cst_25 = arith.constant 9.99999974E-6 : f32
    %48 = vector.broadcast %cst_25 : f32 to vector<16x1xf32>
    %49 = arith.addf %45, %48 : vector<16x1xf32>
    %50 = math.rsqrt %49 : vector<16x1xf32>
    %51 = vector.broadcast %50 : vector<16x1xf32> to vector<16x32xf32>
    %52 = arith.mulf %47, %51 : vector<16x32xf32>
    %53 = vector.broadcast %19 : vector<1x32xf32> to vector<16x32xf32>
    %54 = arith.mulf %52, %53 : vector<16x32xf32>
    %55 = vector.broadcast %20 : vector<1x32xf32> to vector<16x32xf32>
    %56 = arith.addf %54, %55 : vector<16x32xf32>
    %57 = arith.truncf %56 : vector<16x32xf32> to vector<16x32xbf16>
    %cst_26 = arith.constant dense<0.000000e+00> : vector<16x96xf32>
    %58 = tpu.matmul %57, %22, %cst_26 {dimension_numbers = #tpu.dot_dimension_numbers<[1], [0], [0], [1], [0, 0, 1, 1], [], []>} : vector<16x32xbf16>, vector<32x96xbf16>, vector<16x96xf32> -> vector<16x96xf32>
    %59 = vector.broadcast %23 : vector<1x96xf32> to vector<16x96xf32>
    %60 = arith.addf %58, %59 : vector<16x96xf32>
    %61 = vector.extract_strided_slice %60 {offsets = [0, 0], sizes = [16, 32], strides = [1, 1]} : vector<16x96xf32> to vector<16x32xf32>
    %62 = vector.shape_cast %61 : vector<16x32xf32> to vector<2x8x32xf32>
    %63 = vector.extract_strided_slice %60 {offsets = [0, 32], sizes = [16, 32], strides = [1, 1]} : vector<16x96xf32> to vector<16x32xf32>
    %64 = vector.shape_cast %63 : vector<16x32xf32> to vector<2x8x32xf32>
    %65 = vector.extract_strided_slice %60 {offsets = [0, 64], sizes = [16, 32], strides = [1, 1]} : vector<16x96xf32> to vector<16x32xf32>
    %66 = vector.shape_cast %65 : vector<16x32xf32> to vector<2x8x32xf32>
    %67 = vector.extract_strided_slice %62 {offsets = [0, 0, 0], sizes = [2, 8, 16], strides = [1, 1, 1]} : vector<2x8x32xf32> to vector<2x8x16xf32>
    %68 = arith.truncf %67 : vector<2x8x16xf32> to vector<2x8x16xbf16>
    %69 = vector.extract_strided_slice %64 {offsets = [0, 0, 0], sizes = [2, 8, 16], strides = [1, 1, 1]} : vector<2x8x32xf32> to vector<2x8x16xf32>
    %70 = arith.truncf %69 : vector<2x8x16xf32> to vector<2x8x16xbf16>
    "tpu.trace_start"() <{level = 10 : i32, message = "bqd,bkd->bqk"}> : () -> ()
    %cst_27 = arith.constant dense<0.000000e+00> : vector<2x8x8xf32>
    %71 = tpu.matmul %68, %70, %cst_27 {dimension_numbers = #tpu.dot_dimension_numbers<[2], [2], [1], [1], [0, 0, 0, 1, 1, 1], [0], [0]>} : vector<2x8x16xbf16>, vector<2x8x16xbf16>, vector<2x8x8xf32> -> vector<2x8x8xf32>
    "tpu.trace_stop"() : () -> ()
    %72 = arith.addf %71, %18 : vector<2x8x8xf32>
    %cst_28 = arith.constant dense<0xFF800000> : vector<2x8xf32>
    %73 = vector.multi_reduction <maximumf>, %72, %cst_28 [2] : vector<2x8x8xf32> to vector<2x8xf32>
    %74 = vector.shape_cast %73 : vector<2x8xf32> to vector<2x8x1xf32>
    %75 = vector.broadcast %74 : vector<2x8x1xf32> to vector<2x8x8xf32>
    %76 = arith.subf %72, %75 : vector<2x8x8xf32>
    %77 = math.exp %76 : vector<2x8x8xf32>
    %cst_29 = arith.constant dense<0.000000e+00> : vector<2x8xf32>
    %78 = vector.multi_reduction <add>, %77, %cst_29 [2] : vector<2x8x8xf32> to vector<2x8xf32>
    %79 = vector.shape_cast %78 : vector<2x8xf32> to vector<2x8x1xf32>
    %80 = tpu.reciprocal %79 {approx = true} : vector<2x8x1xf32> -> vector<2x8x1xf32>
    %81 = vector.broadcast %80 : vector<2x8x1xf32> to vector<2x8x8xf32>
    %82 = arith.mulf %77, %81 : vector<2x8x8xf32>
    %83 = arith.truncf %82 : vector<2x8x8xf32> to vector<2x8x8xbf16>
    %84 = vector.extract_strided_slice %66 {offsets = [0, 0, 0], sizes = [2, 8, 16], strides = [1, 1, 1]} : vector<2x8x32xf32> to vector<2x8x16xf32>
    %85 = arith.truncf %84 : vector<2x8x16xf32> to vector<2x8x16xbf16>
    "tpu.trace_start"() <{level = 10 : i32, message = "bqk,bkd->bqd"}> : () -> ()
    %cst_30 = arith.constant dense<0.000000e+00> : vector<2x8x16xf32>
    %86 = tpu.matmul %83, %85, %cst_30 {dimension_numbers = #tpu.dot_dimension_numbers<[2], [1], [1], [2], [0, 0, 0, 1, 1, 2], [0], [0]>} : vector<2x8x8xbf16>, vector<2x8x16xbf16>, vector<2x8x16xf32> -> vector<2x8x16xf32>
    "tpu.trace_stop"() : () -> ()
    %87 = vector.shape_cast %86 : vector<2x8x16xf32> to vector<16x16xf32>
    %88 = arith.truncf %87 : vector<16x16xf32> to vector<16x16xbf16>
    %89 = vector.extract_strided_slice %25 {offsets = [0, 0], sizes = [16, 32], strides = [1, 1]} : vector<32x32xbf16> to vector<16x32xbf16>
    %cst_31 = arith.constant dense<0.000000e+00> : vector<16x32xf32>
    %90 = tpu.matmul %88, %89, %cst_31 {dimension_numbers = #tpu.dot_dimension_numbers<[1], [0], [0], [1], [0, 0, 1, 1], [], []>} : vector<16x16xbf16>, vector<16x32xbf16>, vector<16x32xf32> -> vector<16x32xf32>
    %91 = vector.extract_strided_slice %62 {offsets = [0, 0, 16], sizes = [2, 8, 16], strides = [1, 1, 1]} : vector<2x8x32xf32> to vector<2x8x16xf32>
    %92 = arith.truncf %91 : vector<2x8x16xf32> to vector<2x8x16xbf16>
    %93 = vector.extract_strided_slice %64 {offsets = [0, 0, 16], sizes = [2, 8, 16], strides = [1, 1, 1]} : vector<2x8x32xf32> to vector<2x8x16xf32>
    %94 = arith.truncf %93 : vector<2x8x16xf32> to vector<2x8x16xbf16>
    "tpu.trace_start"() <{level = 10 : i32, message = "bqd,bkd->bqk"}> : () -> ()
    %cst_32 = arith.constant dense<0.000000e+00> : vector<2x8x8xf32>
    %95 = tpu.matmul %92, %94, %cst_32 {dimension_numbers = #tpu.dot_dimension_numbers<[2], [2], [1], [1], [0, 0, 0, 1, 1, 1], [0], [0]>} : vector<2x8x16xbf16>, vector<2x8x16xbf16>, vector<2x8x8xf32> -> vector<2x8x8xf32>
    "tpu.trace_stop"() : () -> ()
    %96 = arith.addf %95, %18 : vector<2x8x8xf32>
    %cst_33 = arith.constant dense<0xFF800000> : vector<2x8xf32>
    %97 = vector.multi_reduction <maximumf>, %96, %cst_33 [2] : vector<2x8x8xf32> to vector<2x8xf32>
    %98 = vector.shape_cast %97 : vector<2x8xf32> to vector<2x8x1xf32>
    %99 = vector.broadcast %98 : vector<2x8x1xf32> to vector<2x8x8xf32>
    %100 = arith.subf %96, %99 : vector<2x8x8xf32>
    %101 = math.exp %100 : vector<2x8x8xf32>
    %cst_34 = arith.constant dense<0.000000e+00> : vector<2x8xf32>
    %102 = vector.multi_reduction <add>, %101, %cst_34 [2] : vector<2x8x8xf32> to vector<2x8xf32>
    %103 = vector.shape_cast %102 : vector<2x8xf32> to vector<2x8x1xf32>
    %104 = tpu.reciprocal %103 {approx = true} : vector<2x8x1xf32> -> vector<2x8x1xf32>
    %105 = vector.broadcast %104 : vector<2x8x1xf32> to vector<2x8x8xf32>
    %106 = arith.mulf %101, %105 : vector<2x8x8xf32>
    %107 = arith.truncf %106 : vector<2x8x8xf32> to vector<2x8x8xbf16>
    %108 = vector.extract_strided_slice %66 {offsets = [0, 0, 16], sizes = [2, 8, 16], strides = [1, 1, 1]} : vector<2x8x32xf32> to vector<2x8x16xf32>
    %109 = arith.truncf %108 : vector<2x8x16xf32> to vector<2x8x16xbf16>
    "tpu.trace_start"() <{level = 10 : i32, message = "bqk,bkd->bqd"}> : () -> ()
    %cst_35 = arith.constant dense<0.000000e+00> : vector<2x8x16xf32>
    %110 = tpu.matmul %107, %109, %cst_35 {dimension_numbers = #tpu.dot_dimension_numbers<[2], [1], [1], [2], [0, 0, 0, 1, 1, 2], [0], [0]>} : vector<2x8x8xbf16>, vector<2x8x16xbf16>, vector<2x8x16xf32> -> vector<2x8x16xf32>
    "tpu.trace_stop"() : () -> ()
    %111 = vector.shape_cast %110 : vector<2x8x16xf32> to vector<16x16xf32>
    %112 = arith.truncf %111 : vector<16x16xf32> to vector<16x16xbf16>
    %113 = vector.extract_strided_slice %25 {offsets = [16, 0], sizes = [16, 32], strides = [1, 1]} : vector<32x32xbf16> to vector<16x32xbf16>
    %cst_36 = arith.constant dense<0.000000e+00> : vector<16x32xf32>
    %114 = tpu.matmul %112, %113, %cst_36 {dimension_numbers = #tpu.dot_dimension_numbers<[1], [0], [0], [1], [0, 0, 1, 1], [], []>} : vector<16x16xbf16>, vector<16x32xbf16>, vector<16x32xf32> -> vector<16x32xf32>
    %115 = arith.addf %90, %114 : vector<16x32xf32>
    %116 = arith.addf %1, %115 : vector<16x32xf32>
    %117 = vector.broadcast %26 : vector<1x32xf32> to vector<16x32xf32>
    %118 = arith.addf %116, %117 : vector<16x32xf32>
    %cst_37 = arith.constant dense<0.000000e+00> : vector<16xf32>
    %119 = vector.multi_reduction <add>, %118, %cst_37 [1] : vector<16x32xf32> to vector<16xf32>
    %120 = vector.shape_cast %119 : vector<16xf32> to vector<16x1xf32>
    %cst_38 = arith.constant 3.200000e+01 : f32
    %121 = vector.broadcast %cst_38 : f32 to vector<16x1xf32>
    %122 = arith.divf %120, %121 : vector<16x1xf32>
    %123 = vector.broadcast %122 : vector<16x1xf32> to vector<16x32xf32>
    %124 = arith.subf %118, %123 : vector<16x32xf32>
    %125 = arith.mulf %124, %124 : vector<16x32xf32>
    %cst_39 = arith.constant dense<0.000000e+00> : vector<16xf32>
    %126 = vector.multi_reduction <add>, %125, %cst_39 [1] : vector<16x32xf32> to vector<16xf32>
    %127 = vector.shape_cast %126 : vector<16xf32> to vector<16x1xf32>
    %cst_40 = arith.constant 3.200000e+01 : f32
    %128 = vector.broadcast %cst_40 : f32 to vector<16x1xf32>
    %129 = arith.divf %127, %128 : vector<16x1xf32>
    %130 = vector.broadcast %122 : vector<16x1xf32> to vector<16x32xf32>
    %131 = arith.subf %118, %130 : vector<16x32xf32>
    %cst_41 = arith.constant 9.99999974E-6 : f32
    %132 = vector.broadcast %cst_41 : f32 to vector<16x1xf32>
    %133 = arith.addf %129, %132 : vector<16x1xf32>
    %134 = math.rsqrt %133 : vector<16x1xf32>
    %135 = vector.broadcast %134 : vector<16x1xf32> to vector<16x32xf32>
    %136 = arith.mulf %131, %135 : vector<16x32xf32>
    %137 = vector.broadcast %27 : vector<1x32xf32> to vector<16x32xf32>
    %138 = arith.mulf %136, %137 : vector<16x32xf32>
    %139 = vector.broadcast %28 : vector<1x32xf32> to vector<16x32xf32>
    %140 = arith.addf %138, %139 : vector<16x32xf32>
    %141 = arith.truncf %140 : vector<16x32xf32> to vector<16x32xbf16>
    %cst_42 = arith.constant dense<0.000000e+00> : vector<16x64xf32>
    %142 = tpu.matmul %141, %30, %cst_42 {dimension_numbers = #tpu.dot_dimension_numbers<[1], [0], [0], [1], [0, 0, 1, 1], [], []>} : vector<16x32xbf16>, vector<32x64xbf16>, vector<16x64xf32> -> vector<16x64xf32>
    %143 = vector.broadcast %31 : vector<1x64xf32> to vector<16x64xf32>
    %144 = arith.addf %142, %143 : vector<16x64xf32>
    %cst_43 = arith.constant 1.702000e+00 : f32
    %145 = vector.broadcast %cst_43 : f32 to vector<16x64xf32>
    %146 = arith.mulf %145, %144 : vector<16x64xf32>
    %147 = arith.negf %146 : vector<16x64xf32>
    %148 = math.exp %147 : vector<16x64xf32>
    %cst_44 = arith.constant 1.000000e+00 : f32
    %149 = vector.broadcast %cst_44 : f32 to vector<16x64xf32>
    %150 = arith.addf %149, %148 : vector<16x64xf32>
    %151 = arith.divf %149, %150 : vector<16x64xf32>
    %152 = arith.mulf %144, %151 : vector<16x64xf32>
    %153 = arith.truncf %152 : vector<16x64xf32> to vector<16x64xbf16>
    %cst_45 = arith.constant dense<0.000000e+00> : vector<16x32xf32>
    %154 = tpu.matmul %153, %33, %cst_45 {dimension_numbers = #tpu.dot_dimension_numbers<[1], [0], [0], [1], [0, 0, 1, 1], [], []>} : vector<16x64xbf16>, vector<64x32xbf16>, vector<16x32xf32> -> vector<16x32xf32>
    %155 = vector.broadcast %34 : vector<1x32xf32> to vector<16x32xf32>
    %156 = arith.addf %154, %155 : vector<16x32xf32>
    %157 = arith.addf %118, %156 : vector<16x32xf32>
    %cst_46 = arith.constant dense<0.000000e+00> : vector<2xf32>
    %158 = vector.multi_reduction <add>, %2, %cst_46 [1] : vector<2x8xf32> to vector<2xf32>
    %159 = vector.shape_cast %158 : vector<2xf32> to vector<2x1xf32>
    %cst_47 = arith.constant 1.000000e+00 : f32
    %160 = vector.broadcast %cst_47 : f32 to vector<2x1xf32>
    %161 = arith.subf %159, %160 : vector<2x1xf32>
    %162 = tpu.iota {dimensions = array<i32: 1>} : vector<2x16xi32>
    %163 = arith.sitofp %162 : vector<2x16xi32> to vector<2x16xf32>
    %164 = tpu.iota {dimensions = array<i32: 0>} : vector<2x16xi32>
    %165 = arith.sitofp %164 : vector<2x16xi32> to vector<2x16xf32>
    %cst_48 = arith.constant 8.000000e+00 : f32
    %166 = vector.broadcast %cst_48 : f32 to vector<2x16xf32>
    %167 = arith.mulf %165, %166 : vector<2x16xf32>
    %168 = vector.broadcast %161 : vector<2x1xf32> to vector<2x16xf32>
    %169 = arith.addf %167, %168 : vector<2x16xf32>
    %170 = arith.cmpf oeq, %163, %169 : vector<2x16xf32>
    %171 = arith.extui %170 : vector<2x16xi1> to vector<2x16xi32>
    %172 = arith.sitofp %171 : vector<2x16xi32> to vector<2x16xf32>
    %cst_49 = arith.constant dense<0.000000e+00> : vector<2x32xf32>
    %173 = tpu.matmul %172, %157, %cst_49 {dimension_numbers = #tpu.dot_dimension_numbers<[1], [0], [0], [1], [0, 0, 1, 1], [], []>} : vector<2x16xf32>, vector<16x32xf32>, vector<2x32xf32> -> vector<2x32xf32>
    %174 = vector.extract_strided_slice %0 {offsets = [8, 0], sizes = [1, 32], strides = [1, 1]} : vector<28x128xf32> to vector<1x32xf32>
    %175 = vector.extract_strided_slice %0 {offsets = [9, 0], sizes = [1, 32], strides = [1, 1]} : vector<28x128xf32> to vector<1x32xf32>
    %cst_50 = arith.constant dense<0.000000e+00> : vector<2xf32>
    %176 = vector.multi_reduction <add>, %173, %cst_50 [1] : vector<2x32xf32> to vector<2xf32>
    %177 = vector.shape_cast %176 : vector<2xf32> to vector<2x1xf32>
    %cst_51 = arith.constant 3.200000e+01 : f32
    %178 = vector.broadcast %cst_51 : f32 to vector<2x1xf32>
    %179 = arith.divf %177, %178 : vector<2x1xf32>
    %180 = vector.broadcast %179 : vector<2x1xf32> to vector<2x32xf32>
    %181 = arith.subf %173, %180 : vector<2x32xf32>
    %182 = arith.mulf %181, %181 : vector<2x32xf32>
    %cst_52 = arith.constant dense<0.000000e+00> : vector<2xf32>
    %183 = vector.multi_reduction <add>, %182, %cst_52 [1] : vector<2x32xf32> to vector<2xf32>
    %184 = vector.shape_cast %183 : vector<2xf32> to vector<2x1xf32>
    %cst_53 = arith.constant 3.200000e+01 : f32
    %185 = vector.broadcast %cst_53 : f32 to vector<2x1xf32>
    %186 = arith.divf %184, %185 : vector<2x1xf32>
    %187 = vector.broadcast %179 : vector<2x1xf32> to vector<2x32xf32>
    %188 = arith.subf %173, %187 : vector<2x32xf32>
    %cst_54 = arith.constant 9.99999974E-6 : f32
    %189 = vector.broadcast %cst_54 : f32 to vector<2x1xf32>
    %190 = arith.addf %186, %189 : vector<2x1xf32>
    %191 = math.rsqrt %190 : vector<2x1xf32>
    %192 = vector.broadcast %191 : vector<2x1xf32> to vector<2x32xf32>
    %193 = arith.mulf %188, %192 : vector<2x32xf32>
    %194 = vector.broadcast %174 : vector<1x32xf32> to vector<2x32xf32>
    %195 = arith.mulf %193, %194 : vector<2x32xf32>
    %196 = vector.broadcast %175 : vector<1x32xf32> to vector<2x32xf32>
    %197 = arith.addf %195, %196 : vector<2x32xf32>
    %198 = arith.truncf %197 : vector<2x32xf32> to vector<2x32xbf16>
    %c0_55 = arith.constant 0 : index
    %c0_56 = arith.constant 0 : index
    %c0_57 = arith.constant 0 : index
    %199 = vector.load %arg9[%c0_55, %c0_56, %c0_57] : memref<2x32x16xbf16, #tpu.memory_space<vmem>>, vector<1x32x16xbf16>
    %200 = vector.shape_cast %199 : vector<1x32x16xbf16> to vector<32x16xbf16>
    %cst_58 = arith.constant dense<0.000000e+00> : vector<2x16xf32>
    %201 = tpu.matmul %198, %200, %cst_58 {dimension_numbers = #tpu.dot_dimension_numbers<[1], [0], [0], [1], [0, 0, 1, 1], [], []>} : vector<2x32xbf16>, vector<32x16xbf16>, vector<2x16xf32> -> vector<2x16xf32>
    %202 = vector.extract_strided_slice %0 {offsets = [10, 0], sizes = [1, 16], strides = [1, 1]} : vector<28x128xf32> to vector<1x16xf32>
    %203 = vector.broadcast %202 : vector<1x16xf32> to vector<2x16xf32>
    %204 = arith.addf %201, %203 : vector<2x16xf32>
    %c0_59 = arith.constant 0 : index
    %c0_60 = arith.constant 0 : index
    %205 = vector.load %arg2[%c0_59, %c0_60] : memref<32x192xf32, #tpu.memory_space<vmem>>, vector<32x192xf32>
    %206 = arith.truncf %205 : vector<32x192xf32> to vector<32x192xbf16>
    %c0_61 = arith.constant 0 : index
    %c0_62 = arith.constant 0 : index
    %207 = vector.load %arg10[%c0_61, %c0_62] : memref<192x32xbf16, #tpu.memory_space<vmem>>, vector<192x32xbf16>
    %cst_63 = arith.constant dense<0.000000e+00> : vector<32x32xf32>
    %208 = tpu.matmul %206, %207, %cst_63 {dimension_numbers = #tpu.dot_dimension_numbers<[1], [0], [0], [1], [0, 0, 1, 1], [], []>} : vector<32x192xbf16>, vector<192x32xbf16>, vector<32x32xf32> -> vector<32x32xf32>
    %c0_64 = arith.constant 0 : index
    %c0_65 = arith.constant 0 : index
    %209 = vector.load %arg3[%c0_64, %c0_65] : memref<17x32xf32, #tpu.memory_space<vmem>>, vector<17x32xf32>
    %210 = vector.extract_strided_slice %0 {offsets = [12, 0], sizes = [1, 32], strides = [1, 1]} : vector<28x128xf32> to vector<1x32xf32>
    %211 = vector.extract_strided_slice %209 {offsets = [0, 0], sizes = [1, 32], strides = [1, 1]} : vector<17x32xf32> to vector<1x32xf32>
    %212 = arith.addf %210, %211 : vector<1x32xf32>
    %213 = vector.extract_strided_slice %0 {offsets = [11, 0], sizes = [1, 32], strides = [1, 1]} : vector<28x128xf32> to vector<1x32xf32>
    %c0_66 = arith.constant 0 : index
    %c0_67 = arith.constant 0 : index
    %214 = vector.load %arg15[%c0_66, %c0_67] : memref<34x32xf32, #tpu.memory_space<vmem>>, vector<1x32xf32>
    tpu.vector_store %arg15[%c0_66, %c0_67], %212 {strides = array<i32>} : memref<34x32xf32, #tpu.memory_space<vmem>>, vector<1x32xf32>,
    %215 = vector.extract_strided_slice %208 {offsets = [0, 0], sizes = [16, 32], strides = [1, 1]} : vector<32x32xf32> to vector<16x32xf32>
    %216 = vector.broadcast %213 : vector<1x32xf32> to vector<16x32xf32>
    %217 = arith.addf %215, %216 : vector<16x32xf32>
    %218 = vector.extract_strided_slice %209 {offsets = [1, 0], sizes = [16, 32], strides = [1, 1]} : vector<17x32xf32> to vector<16x32xf32>
    %219 = arith.addf %217, %218 : vector<16x32xf32>
    %c1 = arith.constant 1 : index
    %c0_68 = arith.constant 0 : index
    %220 = vector.load %arg15[%c1, %c0_68] : memref<34x32xf32, #tpu.memory_space<vmem>>, vector<16x32xf32>
    tpu.vector_store %arg15[%c1, %c0_68], %219 {strides = array<i32>} : memref<34x32xf32, #tpu.memory_space<vmem>>, vector<16x32xf32>,
    %c17 = arith.constant 17 : index
    %c0_69 = arith.constant 0 : index
    %221 = vector.load %arg15[%c17, %c0_69] : memref<34x32xf32, #tpu.memory_space<vmem>>, vector<1x32xf32>
    tpu.vector_store %arg15[%c17, %c0_69], %212 {strides = array<i32>} : memref<34x32xf32, #tpu.memory_space<vmem>>, vector<1x32xf32>,
    %222 = vector.extract_strided_slice %208 {offsets = [16, 0], sizes = [16, 32], strides = [1, 1]} : vector<32x32xf32> to vector<16x32xf32>
    %223 = vector.broadcast %213 : vector<1x32xf32> to vector<16x32xf32>
    %224 = arith.addf %222, %223 : vector<16x32xf32>
    %225 = vector.extract_strided_slice %209 {offsets = [1, 0], sizes = [16, 32], strides = [1, 1]} : vector<17x32xf32> to vector<16x32xf32>
    %226 = arith.addf %224, %225 : vector<16x32xf32>
    %c18 = arith.constant 18 : index
    %c0_70 = arith.constant 0 : index
    %227 = vector.load %arg15[%c18, %c0_70] : memref<34x32xf32, #tpu.memory_space<vmem>>, vector<16x32xf32>
    tpu.vector_store %arg15[%c18, %c0_70], %226 {strides = array<i32>} : memref<34x32xf32, #tpu.memory_space<vmem>>, vector<16x32xf32>,
    %c0_71 = arith.constant 0 : index
    %c0_72 = arith.constant 0 : index
    %228 = vector.load %arg15[%c0_71, %c0_72] : memref<34x32xf32, #tpu.memory_space<vmem>>, vector<34x32xf32>
    %229 = vector.extract_strided_slice %0 {offsets = [13, 0], sizes = [1, 32], strides = [1, 1]} : vector<28x128xf32> to vector<1x32xf32>
    %230 = vector.extract_strided_slice %0 {offsets = [14, 0], sizes = [1, 32], strides = [1, 1]} : vector<28x128xf32> to vector<1x32xf32>
    %cst_73 = arith.constant dense<0.000000e+00> : vector<34xf32>
    %231 = vector.multi_reduction <add>, %228, %cst_73 [1] : vector<34x32xf32> to vector<34xf32>
    %232 = vector.shape_cast %231 : vector<34xf32> to vector<34x1xf32>
    %cst_74 = arith.constant 3.200000e+01 : f32
    %233 = vector.broadcast %cst_74 : f32 to vector<34x1xf32>
    %234 = arith.divf %232, %233 : vector<34x1xf32>
    %235 = vector.broadcast %234 : vector<34x1xf32> to vector<34x32xf32>
    %236 = arith.subf %228, %235 : vector<34x32xf32>
    %237 = arith.mulf %236, %236 : vector<34x32xf32>
    %cst_75 = arith.constant dense<0.000000e+00> : vector<34xf32>
    %238 = vector.multi_reduction <add>, %237, %cst_75 [1] : vector<34x32xf32> to vector<34xf32>
    %239 = vector.shape_cast %238 : vector<34xf32> to vector<34x1xf32>
    %cst_76 = arith.constant 3.200000e+01 : f32
    %240 = vector.broadcast %cst_76 : f32 to vector<34x1xf32>
    %241 = arith.divf %239, %240 : vector<34x1xf32>
    %242 = vector.broadcast %234 : vector<34x1xf32> to vector<34x32xf32>
    %243 = arith.subf %228, %242 : vector<34x32xf32>
    %cst_77 = arith.constant 9.99999974E-6 : f32
    %244 = vector.broadcast %cst_77 : f32 to vector<34x1xf32>
    %245 = arith.addf %241, %244 : vector<34x1xf32>
    %246 = math.rsqrt %245 : vector<34x1xf32>
    %247 = vector.broadcast %246 : vector<34x1xf32> to vector<34x32xf32>
    %248 = arith.mulf %243, %247 : vector<34x32xf32>
    %249 = vector.broadcast %229 : vector<1x32xf32> to vector<34x32xf32>
    %250 = arith.mulf %248, %249 : vector<34x32xf32>
    %251 = vector.broadcast %230 : vector<1x32xf32> to vector<34x32xf32>
    %252 = arith.addf %250, %251 : vector<34x32xf32>
    %253 = vector.extract_strided_slice %0 {offsets = [15, 0], sizes = [1, 32], strides = [1, 1]} : vector<28x128xf32> to vector<1x32xf32>
    %254 = vector.extract_strided_slice %0 {offsets = [16, 0], sizes = [1, 32], strides = [1, 1]} : vector<28x128xf32> to vector<1x32xf32>
    %c1_78 = arith.constant 1 : index
    %c0_79 = arith.constant 0 : index
    %c0_80 = arith.constant 0 : index
    %255 = vector.load %arg5[%c1_78, %c0_79, %c0_80] : memref<2x32x96xbf16, #tpu.memory_space<vmem>>, vector<1x32x96xbf16>
    %256 = vector.shape_cast %255 : vector<1x32x96xbf16> to vector<32x96xbf16>
    %257 = vector.extract_strided_slice %0 {offsets = [17, 0], sizes = [1, 96], strides = [1, 1]} : vector<28x128xf32> to vector<1x96xf32>
    %c1_81 = arith.constant 1 : index
    %c0_82 = arith.constant 0 : index
    %c0_83 = arith.constant 0 : index
    %258 = vector.load %arg6[%c1_81, %c0_82, %c0_83] : memref<2x32x32xbf16, #tpu.memory_space<vmem>>, vector<1x32x32xbf16>
    %259 = vector.shape_cast %258 : vector<1x32x32xbf16> to vector<32x32xbf16>
    %260 = vector.extract_strided_slice %0 {offsets = [18, 0], sizes = [1, 32], strides = [1, 1]} : vector<28x128xf32> to vector<1x32xf32>
    %261 = vector.extract_strided_slice %0 {offsets = [19, 0], sizes = [1, 32], strides = [1, 1]} : vector<28x128xf32> to vector<1x32xf32>
    %262 = vector.extract_strided_slice %0 {offsets = [20, 0], sizes = [1, 32], strides = [1, 1]} : vector<28x128xf32> to vector<1x32xf32>
    %c1_84 = arith.constant 1 : index
    %c0_85 = arith.constant 0 : index
    %c0_86 = arith.constant 0 : index
    %263 = vector.load %arg7[%c1_84, %c0_85, %c0_86] : memref<2x32x64xbf16, #tpu.memory_space<vmem>>, vector<1x32x64xbf16>
    %264 = vector.shape_cast %263 : vector<1x32x64xbf16> to vector<32x64xbf16>
    %265 = vector.extract_strided_slice %0 {offsets = [21, 0], sizes = [1, 64], strides = [1, 1]} : vector<28x128xf32> to vector<1x64xf32>
    %c1_87 = arith.constant 1 : index
    %c0_88 = arith.constant 0 : index
    %c0_89 = arith.constant 0 : index
    %266 = vector.load %arg8[%c1_87, %c0_88, %c0_89] : memref<2x64x32xbf16, #tpu.memory_space<vmem>>, vector<1x64x32xbf16>
    %267 = vector.shape_cast %266 : vector<1x64x32xbf16> to vector<64x32xbf16>
    %268 = vector.extract_strided_slice %0 {offsets = [22, 0], sizes = [1, 32], strides = [1, 1]} : vector<28x128xf32> to vector<1x32xf32>
    %cst_90 = arith.constant dense<0.000000e+00> : vector<34xf32>
    %269 = vector.multi_reduction <add>, %252, %cst_90 [1] : vector<34x32xf32> to vector<34xf32>
    %270 = vector.shape_cast %269 : vector<34xf32> to vector<34x1xf32>
    %cst_91 = arith.constant 3.200000e+01 : f32
    %271 = vector.broadcast %cst_91 : f32 to vector<34x1xf32>
    %272 = arith.divf %270, %271 : vector<34x1xf32>
    %273 = vector.broadcast %272 : vector<34x1xf32> to vector<34x32xf32>
    %274 = arith.subf %252, %273 : vector<34x32xf32>
    %275 = arith.mulf %274, %274 : vector<34x32xf32>
    %cst_92 = arith.constant dense<0.000000e+00> : vector<34xf32>
    %276 = vector.multi_reduction <add>, %275, %cst_92 [1] : vector<34x32xf32> to vector<34xf32>
    %277 = vector.shape_cast %276 : vector<34xf32> to vector<34x1xf32>
    %cst_93 = arith.constant 3.200000e+01 : f32
    %278 = vector.broadcast %cst_93 : f32 to vector<34x1xf32>
    %279 = arith.divf %277, %278 : vector<34x1xf32>
    %280 = vector.broadcast %272 : vector<34x1xf32> to vector<34x32xf32>
    %281 = arith.subf %252, %280 : vector<34x32xf32>
    %cst_94 = arith.constant 9.99999974E-6 : f32
    %282 = vector.broadcast %cst_94 : f32 to vector<34x1xf32>
    %283 = arith.addf %279, %282 : vector<34x1xf32>
    %284 = math.rsqrt %283 : vector<34x1xf32>
    %285 = vector.broadcast %284 : vector<34x1xf32> to vector<34x32xf32>
    %286 = arith.mulf %281, %285 : vector<34x32xf32>
    %287 = vector.broadcast %253 : vector<1x32xf32> to vector<34x32xf32>
    %288 = arith.mulf %286, %287 : vector<34x32xf32>
    %289 = vector.broadcast %254 : vector<1x32xf32> to vector<34x32xf32>
    %290 = arith.addf %288, %289 : vector<34x32xf32>
    %291 = arith.truncf %290 : vector<34x32xf32> to vector<34x32xbf16>
    %cst_95 = arith.constant dense<0.000000e+00> : vector<34x96xf32>
    %292 = tpu.matmul %291, %256, %cst_95 {dimension_numbers = #tpu.dot_dimension_numbers<[1], [0], [0], [1], [0, 0, 1, 1], [], []>} : vector<34x32xbf16>, vector<32x96xbf16>, vector<34x96xf32> -> vector<34x96xf32>
    %293 = vector.broadcast %257 : vector<1x96xf32> to vector<34x96xf32>
    %294 = arith.addf %292, %293 : vector<34x96xf32>
    %295 = vector.extract_strided_slice %294 {offsets = [0, 0], sizes = [34, 32], strides = [1, 1]} : vector<34x96xf32> to vector<34x32xf32>
    %296 = vector.shape_cast %295 : vector<34x32xf32> to vector<2x17x32xf32>
    %297 = vector.extract_strided_slice %294 {offsets = [0, 32], sizes = [34, 32], strides = [1, 1]} : vector<34x96xf32> to vector<34x32xf32>
    %298 = vector.shape_cast %297 : vector<34x32xf32> to vector<2x17x32xf32>
    %299 = vector.extract_strided_slice %294 {offsets = [0, 64], sizes = [34, 32], strides = [1, 1]} : vector<34x96xf32> to vector<34x32xf32>
    %300 = vector.shape_cast %299 : vector<34x32xf32> to vector<2x17x32xf32>
    %301 = vector.extract_strided_slice %296 {offsets = [0, 0, 0], sizes = [2, 17, 16], strides = [1, 1, 1]} : vector<2x17x32xf32> to vector<2x17x16xf32>
    %302 = arith.truncf %301 : vector<2x17x16xf32> to vector<2x17x16xbf16>
    %303 = vector.extract_strided_slice %298 {offsets = [0, 0, 0], sizes = [2, 17, 16], strides = [1, 1, 1]} : vector<2x17x32xf32> to vector<2x17x16xf32>
    %304 = arith.truncf %303 : vector<2x17x16xf32> to vector<2x17x16xbf16>
    "tpu.trace_start"() <{level = 10 : i32, message = "bqd,bkd->bqk"}> : () -> ()
    %cst_96 = arith.constant dense<0.000000e+00> : vector<2x17x17xf32>
    %305 = tpu.matmul %302, %304, %cst_96 {dimension_numbers = #tpu.dot_dimension_numbers<[2], [2], [1], [1], [0, 0, 0, 1, 1, 1], [0], [0]>} : vector<2x17x16xbf16>, vector<2x17x16xbf16>, vector<2x17x17xf32> -> vector<2x17x17xf32>
    "tpu.trace_stop"() : () -> ()
    %cst_97 = arith.constant dense<0xFF800000> : vector<2x17xf32>
    %306 = vector.multi_reduction <maximumf>, %305, %cst_97 [2] : vector<2x17x17xf32> to vector<2x17xf32>
    %307 = vector.shape_cast %306 : vector<2x17xf32> to vector<2x17x1xf32>
    %308 = vector.broadcast %307 : vector<2x17x1xf32> to vector<2x17x17xf32>
    %309 = arith.subf %305, %308 : vector<2x17x17xf32>
    %310 = math.exp %309 : vector<2x17x17xf32>
    %cst_98 = arith.constant dense<0.000000e+00> : vector<2x17xf32>
    %311 = vector.multi_reduction <add>, %310, %cst_98 [2] : vector<2x17x17xf32> to vector<2x17xf32>
    %312 = vector.shape_cast %311 : vector<2x17xf32> to vector<2x17x1xf32>
    %313 = tpu.reciprocal %312 {approx = true} : vector<2x17x1xf32> -> vector<2x17x1xf32>
    %314 = vector.broadcast %313 : vector<2x17x1xf32> to vector<2x17x17xf32>
    %315 = arith.mulf %310, %314 : vector<2x17x17xf32>
    %316 = arith.truncf %315 : vector<2x17x17xf32> to vector<2x17x17xbf16>
    %317 = vector.extract_strided_slice %300 {offsets = [0, 0, 0], sizes = [2, 17, 16], strides = [1, 1, 1]} : vector<2x17x32xf32> to vector<2x17x16xf32>
    %318 = arith.truncf %317 : vector<2x17x16xf32> to vector<2x17x16xbf16>
    "tpu.trace_start"() <{level = 10 : i32, message = "bqk,bkd->bqd"}> : () -> ()
    %cst_99 = arith.constant dense<0.000000e+00> : vector<2x17x16xf32>
    %319 = tpu.matmul %316, %318, %cst_99 {dimension_numbers = #tpu.dot_dimension_numbers<[2], [1], [1], [2], [0, 0, 0, 1, 1, 2], [0], [0]>} : vector<2x17x17xbf16>, vector<2x17x16xbf16>, vector<2x17x16xf32> -> vector<2x17x16xf32>
    "tpu.trace_stop"() : () -> ()
    %320 = vector.shape_cast %319 : vector<2x17x16xf32> to vector<34x16xf32>
    %321 = arith.truncf %320 : vector<34x16xf32> to vector<34x16xbf16>
    %322 = vector.extract_strided_slice %259 {offsets = [0, 0], sizes = [16, 32], strides = [1, 1]} : vector<32x32xbf16> to vector<16x32xbf16>
    %cst_100 = arith.constant dense<0.000000e+00> : vector<34x32xf32>
    %323 = tpu.matmul %321, %322, %cst_100 {dimension_numbers = #tpu.dot_dimension_numbers<[1], [0], [0], [1], [0, 0, 1, 1], [], []>} : vector<34x16xbf16>, vector<16x32xbf16>, vector<34x32xf32> -> vector<34x32xf32>
    %324 = vector.extract_strided_slice %296 {offsets = [0, 0, 16], sizes = [2, 17, 16], strides = [1, 1, 1]} : vector<2x17x32xf32> to vector<2x17x16xf32>
    %325 = arith.truncf %324 : vector<2x17x16xf32> to vector<2x17x16xbf16>
    %326 = vector.extract_strided_slice %298 {offsets = [0, 0, 16], sizes = [2, 17, 16], strides = [1, 1, 1]} : vector<2x17x32xf32> to vector<2x17x16xf32>
    %327 = arith.truncf %326 : vector<2x17x16xf32> to vector<2x17x16xbf16>
    "tpu.trace_start"() <{level = 10 : i32, message = "bqd,bkd->bqk"}> : () -> ()
    %cst_101 = arith.constant dense<0.000000e+00> : vector<2x17x17xf32>
    %328 = tpu.matmul %325, %327, %cst_101 {dimension_numbers = #tpu.dot_dimension_numbers<[2], [2], [1], [1], [0, 0, 0, 1, 1, 1], [0], [0]>} : vector<2x17x16xbf16>, vector<2x17x16xbf16>, vector<2x17x17xf32> -> vector<2x17x17xf32>
    "tpu.trace_stop"() : () -> ()
    %cst_102 = arith.constant dense<0xFF800000> : vector<2x17xf32>
    %329 = vector.multi_reduction <maximumf>, %328, %cst_102 [2] : vector<2x17x17xf32> to vector<2x17xf32>
    %330 = vector.shape_cast %329 : vector<2x17xf32> to vector<2x17x1xf32>
    %331 = vector.broadcast %330 : vector<2x17x1xf32> to vector<2x17x17xf32>
    %332 = arith.subf %328, %331 : vector<2x17x17xf32>
    %333 = math.exp %332 : vector<2x17x17xf32>
    %cst_103 = arith.constant dense<0.000000e+00> : vector<2x17xf32>
    %334 = vector.multi_reduction <add>, %333, %cst_103 [2] : vector<2x17x17xf32> to vector<2x17xf32>
    %335 = vector.shape_cast %334 : vector<2x17xf32> to vector<2x17x1xf32>
    %336 = tpu.reciprocal %335 {approx = true} : vector<2x17x1xf32> -> vector<2x17x1xf32>
    %337 = vector.broadcast %336 : vector<2x17x1xf32> to vector<2x17x17xf32>
    %338 = arith.mulf %333, %337 : vector<2x17x17xf32>
    %339 = arith.truncf %338 : vector<2x17x17xf32> to vector<2x17x17xbf16>
    %340 = vector.extract_strided_slice %300 {offsets = [0, 0, 16], sizes = [2, 17, 16], strides = [1, 1, 1]} : vector<2x17x32xf32> to vector<2x17x16xf32>
    %341 = arith.truncf %340 : vector<2x17x16xf32> to vector<2x17x16xbf16>
    "tpu.trace_start"() <{level = 10 : i32, message = "bqk,bkd->bqd"}> : () -> ()
    %cst_104 = arith.constant dense<0.000000e+00> : vector<2x17x16xf32>
    %342 = tpu.matmul %339, %341, %cst_104 {dimension_numbers = #tpu.dot_dimension_numbers<[2], [1], [1], [2], [0, 0, 0, 1, 1, 2], [0], [0]>} : vector<2x17x17xbf16>, vector<2x17x16xbf16>, vector<2x17x16xf32> -> vector<2x17x16xf32>
    "tpu.trace_stop"() : () -> ()
    %343 = vector.shape_cast %342 : vector<2x17x16xf32> to vector<34x16xf32>
    %344 = arith.truncf %343 : vector<34x16xf32> to vector<34x16xbf16>
    %345 = vector.extract_strided_slice %259 {offsets = [16, 0], sizes = [16, 32], strides = [1, 1]} : vector<32x32xbf16> to vector<16x32xbf16>
    %cst_105 = arith.constant dense<0.000000e+00> : vector<34x32xf32>
    %346 = tpu.matmul %344, %345, %cst_105 {dimension_numbers = #tpu.dot_dimension_numbers<[1], [0], [0], [1], [0, 0, 1, 1], [], []>} : vector<34x16xbf16>, vector<16x32xbf16>, vector<34x32xf32> -> vector<34x32xf32>
    %347 = arith.addf %323, %346 : vector<34x32xf32>
    %348 = arith.addf %252, %347 : vector<34x32xf32>
    %349 = vector.broadcast %260 : vector<1x32xf32> to vector<34x32xf32>
    %350 = arith.addf %348, %349 : vector<34x32xf32>
    %cst_106 = arith.constant dense<0.000000e+00> : vector<34xf32>
    %351 = vector.multi_reduction <add>, %350, %cst_106 [1] : vector<34x32xf32> to vector<34xf32>
    %352 = vector.shape_cast %351 : vector<34xf32> to vector<34x1xf32>
    %cst_107 = arith.constant 3.200000e+01 : f32
    %353 = vector.broadcast %cst_107 : f32 to vector<34x1xf32>
    %354 = arith.divf %352, %353 : vector<34x1xf32>
    %355 = vector.broadcast %354 : vector<34x1xf32> to vector<34x32xf32>
    %356 = arith.subf %350, %355 : vector<34x32xf32>
    %357 = arith.mulf %356, %356 : vector<34x32xf32>
    %cst_108 = arith.constant dense<0.000000e+00> : vector<34xf32>
    %358 = vector.multi_reduction <add>, %357, %cst_108 [1] : vector<34x32xf32> to vector<34xf32>
    %359 = vector.shape_cast %358 : vector<34xf32> to vector<34x1xf32>
    %cst_109 = arith.constant 3.200000e+01 : f32
    %360 = vector.broadcast %cst_109 : f32 to vector<34x1xf32>
    %361 = arith.divf %359, %360 : vector<34x1xf32>
    %362 = vector.broadcast %354 : vector<34x1xf32> to vector<34x32xf32>
    %363 = arith.subf %350, %362 : vector<34x32xf32>
    %cst_110 = arith.constant 9.99999974E-6 : f32
    %364 = vector.broadcast %cst_110 : f32 to vector<34x1xf32>
    %365 = arith.addf %361, %364 : vector<34x1xf32>
    %366 = math.rsqrt %365 : vector<34x1xf32>
    %367 = vector.broadcast %366 : vector<34x1xf32> to vector<34x32xf32>
    %368 = arith.mulf %363, %367 : vector<34x32xf32>
    %369 = vector.broadcast %261 : vector<1x32xf32> to vector<34x32xf32>
    %370 = arith.mulf %368, %369 : vector<34x32xf32>
    %371 = vector.broadcast %262 : vector<1x32xf32> to vector<34x32xf32>
    %372 = arith.addf %370, %371 : vector<34x32xf32>
    %373 = arith.truncf %372 : vector<34x32xf32> to vector<34x32xbf16>
    %cst_111 = arith.constant dense<0.000000e+00> : vector<34x64xf32>
    %374 = tpu.matmul %373, %264, %cst_111 {dimension_numbers = #tpu.dot_dimension_numbers<[1], [0], [0], [1], [0, 0, 1, 1], [], []>} : vector<34x32xbf16>, vector<32x64xbf16>, vector<34x64xf32> -> vector<34x64xf32>
    %375 = vector.broadcast %265 : vector<1x64xf32> to vector<34x64xf32>
    %376 = arith.addf %374, %375 : vector<34x64xf32>
    %cst_112 = arith.constant 1.702000e+00 : f32
    %377 = vector.broadcast %cst_112 : f32 to vector<34x64xf32>
    %378 = arith.mulf %377, %376 : vector<34x64xf32>
    %379 = arith.negf %378 : vector<34x64xf32>
    %380 = math.exp %379 : vector<34x64xf32>
    %cst_113 = arith.constant 1.000000e+00 : f32
    %381 = vector.broadcast %cst_113 : f32 to vector<34x64xf32>
    %382 = arith.addf %381, %380 : vector<34x64xf32>
    %383 = arith.divf %381, %382 : vector<34x64xf32>
    %384 = arith.mulf %376, %383 : vector<34x64xf32>
    %385 = arith.truncf %384 : vector<34x64xf32> to vector<34x64xbf16>
    %cst_114 = arith.constant dense<0.000000e+00> : vector<34x32xf32>
    %386 = tpu.matmul %385, %267, %cst_114 {dimension_numbers = #tpu.dot_dimension_numbers<[1], [0], [0], [1], [0, 0, 1, 1], [], []>} : vector<34x64xbf16>, vector<64x32xbf16>, vector<34x32xf32> -> vector<34x32xf32>
    %387 = vector.broadcast %268 : vector<1x32xf32> to vector<34x32xf32>
    %388 = arith.addf %386, %387 : vector<34x32xf32>
    %389 = arith.addf %350, %388 : vector<34x32xf32>
    %390 = tpu.iota {dimensions = array<i32: 1>} : vector<2x34xi32>
    %391 = tpu.iota {dimensions = array<i32: 0>} : vector<2x34xi32>
    %c17_i32 = arith.constant 17 : i32
    %392 = vector.broadcast %c17_i32 : i32 to vector<2x34xi32>
    %393 = arith.muli %391, %392 : vector<2x34xi32>
    %394 = arith.cmpi eq, %390, %393 : vector<2x34xi32>
    %395 = arith.extui %394 : vector<2x34xi1> to vector<2x34xi32>
    %396 = arith.sitofp %395 : vector<2x34xi32> to vector<2x34xf32>
    %cst_115 = arith.constant dense<0.000000e+00> : vector<2x32xf32>
    %397 = tpu.matmul %396, %389, %cst_115 {dimension_numbers = #tpu.dot_dimension_numbers<[1], [0], [0], [1], [0, 0, 1, 1], [], []>} : vector<2x34xf32>, vector<34x32xf32>, vector<2x32xf32> -> vector<2x32xf32>
    %398 = vector.extract_strided_slice %0 {offsets = [23, 0], sizes = [1, 32], strides = [1, 1]} : vector<28x128xf32> to vector<1x32xf32>
    %399 = vector.extract_strided_slice %0 {offsets = [24, 0], sizes = [1, 32], strides = [1, 1]} : vector<28x128xf32> to vector<1x32xf32>
    %cst_116 = arith.constant dense<0.000000e+00> : vector<2xf32>
    %400 = vector.multi_reduction <add>, %397, %cst_116 [1] : vector<2x32xf32> to vector<2xf32>
    %401 = vector.shape_cast %400 : vector<2xf32> to vector<2x1xf32>
    %cst_117 = arith.constant 3.200000e+01 : f32
    %402 = vector.broadcast %cst_117 : f32 to vector<2x1xf32>
    %403 = arith.divf %401, %402 : vector<2x1xf32>
    %404 = vector.broadcast %403 : vector<2x1xf32> to vector<2x32xf32>
    %405 = arith.subf %397, %404 : vector<2x32xf32>
    %406 = arith.mulf %405, %405 : vector<2x32xf32>
    %cst_118 = arith.constant dense<0.000000e+00> : vector<2xf32>
    %407 = vector.multi_reduction <add>, %406, %cst_118 [1] : vector<2x32xf32> to vector<2xf32>
    %408 = vector.shape_cast %407 : vector<2xf32> to vector<2x1xf32>
    %cst_119 = arith.constant 3.200000e+01 : f32
    %409 = vector.broadcast %cst_119 : f32 to vector<2x1xf32>
    %410 = arith.divf %408, %409 : vector<2x1xf32>
    %411 = vector.broadcast %403 : vector<2x1xf32> to vector<2x32xf32>
    %412 = arith.subf %397, %411 : vector<2x32xf32>
    %cst_120 = arith.constant 9.99999974E-6 : f32
    %413 = vector.broadcast %cst_120 : f32 to vector<2x1xf32>
    %414 = arith.addf %410, %413 : vector<2x1xf32>
    %415 = math.rsqrt %414 : vector<2x1xf32>
    %416 = vector.broadcast %415 : vector<2x1xf32> to vector<2x32xf32>
    %417 = arith.mulf %412, %416 : vector<2x32xf32>
    %418 = vector.broadcast %398 : vector<1x32xf32> to vector<2x32xf32>
    %419 = arith.mulf %417, %418 : vector<2x32xf32>
    %420 = vector.broadcast %399 : vector<1x32xf32> to vector<2x32xf32>
    %421 = arith.addf %419, %420 : vector<2x32xf32>
    %422 = arith.truncf %421 : vector<2x32xf32> to vector<2x32xbf16>
    %c1_121 = arith.constant 1 : index
    %c0_122 = arith.constant 0 : index
    %c0_123 = arith.constant 0 : index
    %423 = vector.load %arg9[%c1_121, %c0_122, %c0_123] : memref<2x32x16xbf16, #tpu.memory_space<vmem>>, vector<1x32x16xbf16>
    %424 = vector.shape_cast %423 : vector<1x32x16xbf16> to vector<32x16xbf16>
    %cst_124 = arith.constant dense<0.000000e+00> : vector<2x16xf32>
    %425 = tpu.matmul %422, %424, %cst_124 {dimension_numbers = #tpu.dot_dimension_numbers<[1], [0], [0], [1], [0, 0, 1, 1], [], []>} : vector<2x32xbf16>, vector<32x16xbf16>, vector<2x16xf32> -> vector<2x16xf32>
    %426 = vector.extract_strided_slice %0 {offsets = [25, 0], sizes = [1, 16], strides = [1, 1]} : vector<28x128xf32> to vector<1x16xf32>
    %427 = vector.broadcast %426 : vector<1x16xf32> to vector<2x16xf32>
    %428 = arith.addf %425, %427 : vector<2x16xf32>
    %429 = arith.truncf %204 : vector<2x16xf32> to vector<2x16xbf16>
    %c0_125 = arith.constant 0 : index
    %c0_126 = arith.constant 0 : index
    %430 = vector.load %arg11[%c0_125, %c0_126] : memref<16x48xbf16, #tpu.memory_space<vmem>>, vector<16x48xbf16>
    %cst_127 = arith.constant dense<0.000000e+00> : vector<2x48xf32>
    %431 = tpu.matmul %429, %430, %cst_127 {dimension_numbers = #tpu.dot_dimension_numbers<[1], [0], [0], [1], [0, 0, 1, 1], [], []>} : vector<2x16xbf16>, vector<16x48xbf16>, vector<2x48xf32> -> vector<2x48xf32>
    %432 = arith.truncf %428 : vector<2x16xf32> to vector<2x16xbf16>
    %c0_128 = arith.constant 0 : index
    %c0_129 = arith.constant 0 : index
    %433 = vector.load %arg12[%c0_128, %c0_129] : memref<16x48xbf16, #tpu.memory_space<vmem>>, vector<16x48xbf16>
    %cst_130 = arith.constant dense<0.000000e+00> : vector<2x48xf32>
    %434 = tpu.matmul %432, %433, %cst_130 {dimension_numbers = #tpu.dot_dimension_numbers<[1], [0], [0], [1], [0, 0, 1, 1], [], []>} : vector<2x16xbf16>, vector<16x48xbf16>, vector<2x48xf32> -> vector<2x48xf32>
    %435 = arith.addf %431, %434 : vector<2x48xf32>
    %436 = vector.extract_strided_slice %0 {offsets = [26, 0], sizes = [1, 48], strides = [1, 1]} : vector<28x128xf32> to vector<1x48xf32>
    %437 = vector.broadcast %436 : vector<1x48xf32> to vector<2x48xf32>
    %438 = arith.addf %435, %437 : vector<2x48xf32>
    %cst_131 = arith.constant 0.000000e+00 : f32
    %439 = vector.broadcast %cst_131 : f32 to vector<2x48xf32>
    %440 = arith.maximumf %438, %439 : vector<2x48xf32>
    %441 = arith.truncf %440 : vector<2x48xf32> to vector<2x48xbf16>
    %c0_132 = arith.constant 0 : index
    %c0_133 = arith.constant 0 : index
    %442 = vector.load %arg13[%c0_132, %c0_133] : memref<48x128xbf16, #tpu.memory_space<vmem>>, vector<48x128xbf16>
    %cst_134 = arith.constant dense<0.000000e+00> : vector<2x128xf32>
    %443 = tpu.matmul %441, %442, %cst_134 {dimension_numbers = #tpu.dot_dimension_numbers<[1], [0], [0], [1], [0, 0, 1, 1], [], []>} : vector<2x48xbf16>, vector<48x128xbf16>, vector<2x128xf32> -> vector<2x128xf32>
    %444 = vector.extract_strided_slice %0 {offsets = [27, 0], sizes = [1, 128], strides = [1, 1]} : vector<28x128xf32> to vector<1x128xf32>
    %445 = vector.broadcast %444 : vector<1x128xf32> to vector<2x128xf32>
    %446 = arith.addf %443, %445 : vector<2x128xf32>
    %c0_135 = arith.constant 0 : index
    %c0_136 = arith.constant 0 : index
    %447 = vector.load %arg14[%c0_135, %c0_136] : memref<2x128xf32, #tpu.memory_space<vmem>>, vector<2x128xf32>
    tpu.vector_store %arg14[%c0_135, %c0_136], %446 {strides = array<i32>} : memref<2x128xf32, #tpu.memory_space<vmem>>, vector<2x128xf32>,
    return
  }
}

</mosaic_0001>

<llo_original>
// kernel: _forward_impl.1
$region0: #{_forward_impl.1}
  #allocation0 [shape = 'u32[]', space=smem, size = 0x4, offset = 0x4, fixed_abs, tag = 'smem constant byte address 0x4 - core index']
  #allocation1 [shape = 'u32[144,128]{1,0:T(1,128)}', space=vmem, size = 0x12000, scoped, tag = 'internal scratch']
  #allocation2 [shape = 'f32[34,32]{1,0:T(8,128)}', space=vmem, size = 0x5000, scoped, tag = 'scratch operand']
  %s0 = inlined_call_operand.vmem [shape: f32[16,32], index: 0, kind: input, shape index: {}]
  %s1 = inlined_call_operand.vmem [shape: f32[2,8], index: 1, kind: input, shape index: {}]
  %s2 = inlined_call_operand.vmem [shape: f32[32,192], index: 2, kind: input, shape index: {}]
  %s3 = inlined_call_operand.vmem [shape: f32[17,32], index: 3, kind: input, shape index: {}]
  %s4 = inlined_call_operand.vmem [shape: f32[28,128], index: 4, kind: input, shape index: {}]
  %s5 = inlined_call_operand.vmem [shape: bf16[2,32,96], index: 5, kind: input, shape index: {}]
  %s6 = inlined_call_operand.vmem [shape: bf16[2,32,32], index: 6, kind: input, shape index: {}]
  %s7 = inlined_call_operand.vmem [shape: bf16[2,32,64], index: 7, kind: input, shape index: {}]
  %s8 = inlined_call_operand.vmem [shape: bf16[2,64,32], index: 8, kind: input, shape index: {}]
  %s9 = inlined_call_operand.vmem [shape: bf16[2,32,16], index: 9, kind: input, shape index: {}]
  %s10 = inlined_call_operand.vmem [shape: bf16[192,32], index: 10, kind: input, shape index: {}]
  %s11 = inlined_call_operand.vmem [shape: bf16[16,48], index: 11, kind: input, shape index: {}]
  %s12 = inlined_call_operand.vmem [shape: bf16[16,48], index: 12, kind: input, shape index: {}]
  %s13 = inlined_call_operand.vmem [shape: bf16[48,128], index: 13, kind: input, shape index: {}]
  %s14 = inlined_call_operand.vmem [shape: f32[2,128], index: 14, kind: output, shape index: {}]
  %s15 = sld [smem:[#allocation0]]
  $region66: #{_forward_impl.1} parent=0
    _
  %s17 = ssub.s32 1, %s15
  %s18 = scalar_select 0, %s17, %s15
  // Predicated region
  $region2: #{_forward_impl.1} parent=0 // pred_check
    _
  $region3: #{_forward_impl.1} parent=0 // pred_check_branch
    %20 = sbr.rel (0) target = $region5
  $region4: #{_forward_impl.1} parent=0 // pred_region
    _
  $region5: #{_forward_impl.1} parent=0 // pred_fallthru
    _
  // Predicated region
  $region6: #{_forward_impl.1} parent=0 // pred_check
    _
  $region7: #{_forward_impl.1} parent=0 // pred_check_branch
    %22 = sbr.rel (0) target = $region9
  $region8: #{_forward_impl.1} parent=0 // pred_region
    _
  $region9: #{_forward_impl.1} parent=0 // pred_fallthru
    _
  // Predicated region
  $region10: #{_forward_impl.1} parent=0 // pred_check
    _
  $region11: #{_forward_impl.1} parent=0 // pred_check_branch
    %24 = sbr.rel (0) target = $region13
  $region12: #{_forward_impl.1} parent=0 // pred_region
    _
  $region13: #{_forward_impl.1} parent=0 // pred_fallthru
    _
  // Predicated region
  $region14: #{_forward_impl.1} parent=0 // pred_check
    _
  $region15: #{_forward_impl.1} parent=0 // pred_check_branch
    %26 = sbr.rel (0) target = $region17
  $region16: #{_forward_impl.1} parent=0 // pred_region
    _
  $region17: #{_forward_impl.1} parent=0 // pred_fallthru
    _
  // Predicated region
  $region18: #{_forward_impl.1} parent=0 // pred_check
    _
  $region19: #{_forward_impl.1} parent=0 // pred_check_branch
    %28 = sbr.rel (0) target = $region21
  $region20: #{_forward_impl.1} parent=0 // pred_region
    _
  $region21: #{_forward_impl.1} parent=0 // pred_fallthru
    _
  // Predicated region
  $region22: #{_forward_impl.1} parent=0 // pred_check
    _
  $region23: #{_forward_impl.1} parent=0 // pred_check_branch
    %30 = sbr.rel (0) target = $region25
  $region24: #{_forward_impl.1} parent=0 // pred_region
    _
  $region25: #{_forward_impl.1} parent=0 // pred_fallthru
    _
  // Predicated region
  $region26: #{_forward_impl.1} parent=0 // pred_check
    _
  $region27: #{_forward_impl.1} parent=0 // pred_check_branch
    %32 = sbr.rel (0) target = $region29
  $region28: #{_forward_impl.1} parent=0 // pred_region
    _
  $region29: #{_forward_impl.1} parent=0 // pred_fallthru
    _
  // Predicated region
  $region30: #{_forward_impl.1} parent=0 // pred_check
    _
  $region31: #{_forward_impl.1} parent=0 // pred_check_branch
    %34 = sbr.rel (0) target = $region33
  $region32: #{_forward_impl.1} parent=0 // pred_region
    _
  $region33: #{_forward_impl.1} parent=0 // pred_fallthru
    _
  // Predicated region
  $region34: #{_forward_impl.1} parent=0 // pred_check
    _
  $region35: #{_forward_impl.1} parent=0 // pred_check_branch
    %36 = sbr.rel (0) target = $region37
  $region36: #{_forward_impl.1} parent=0 // pred_region
    _
  $region37: #{_forward_impl.1} parent=0 // pred_fallthru
    _
  // Predicated region
  $region38: #{_forward_impl.1} parent=0 // pred_check
    _
  $region39: #{_forward_impl.1} parent=0 // pred_check_branch
    %38 = sbr.rel (0) target = $region41
  $region40: #{_forward_impl.1} parent=0 // pred_region
    _
  $region41: #{_forward_impl.1} parent=0 // pred_fallthru
    _
  // Predicated region
  $region42: #{_forward_impl.1} parent=0 // pred_check
    _
  $region43: #{_forward_impl.1} parent=0 // pred_check_branch
    %40 = sbr.rel (0) target = $region45
  $region44: #{_forward_impl.1} parent=0 // pred_region
    _
  $region45: #{_forward_impl.1} parent=0 // pred_fallthru
    _
  // Predicated region
  $region46: #{_forward_impl.1} parent=0 // pred_check
    _
  $region47: #{_forward_impl.1} parent=0 // pred_check_branch
    %42 = sbr.rel (0) target = $region49
  $region48: #{_forward_impl.1} parent=0 // pred_region
    _
  $region49: #{_forward_impl.1} parent=0 // pred_fallthru
    _
  // Predicated region
  $region50: #{_forward_impl.1} parent=0 // pred_check
    _
  $region51: #{_forward_impl.1} parent=0 // pred_check_branch
    %44 = sbr.rel (0) target = $region53
  $region52: #{_forward_impl.1} parent=0 // pred_region
    _
  $region53: #{_forward_impl.1} parent=0 // pred_fallthru
    _
  // Predicated region
  $region54: #{_forward_impl.1} parent=0 // pred_check
    _
  $region55: #{_forward_impl.1} parent=0 // pred_check_branch
    %46 = sbr.rel (0) target = $region57
  $region56: #{_forward_impl.1} parent=0 // pred_region
    _
  $region57: #{_forward_impl.1} parent=0 // pred_fallthru
    _
  %v48 = vld [vmem:[%s4] sm:$0xff]
  %v49 = vld [vmem:[%s4 + $0x8] sm:$0xff]
  %v50 = vld [vmem:[%s4 + $0x10] sm:$0xff]
  %v51 = vld [vmem:[%s4 + $0x18] sm:$0xf]
  %v52 = vld [vmem:[%s0] sm:$0xff]
  %v53 = vld [vmem:[%s0 + $0x8] sm:$0xff]
  %v54 = vld [vmem:[%s1] sm:$0x3]
  %v55 = vlaneseq
  %v56 = vshrl.u32 %v55, 7
  %v57 = vlaneseq
  %v58 = vand.u32 %v57, 127
  %vm59 = vcmp.le.s32.totalorder %v58, %v56
  %v60 = vsel %vm59, 0.0, -1e+09
  %vm61 = vcmp.gt.f32.partialorder %v54, 0.0
  %v62 = vsel %vm61, 0.0, -1e+09
  %v65 = vunpack.c.l.s4 1966171168
  %v66 = vunpack.c.0.s8 %v65
  %v67 = vlaneseq
  %v68 = vshrl.u32 %v67, 7
  %v69 = vsub.s32 %v66, %v68
  %v70 = vrot.slane %v62, %v69
  %v71 = vcombine.high %v70, %v70
  %v73 = vunpack.c.l.s4 1966171168
  %v74 = vunpack.c.0.s8 %v73
  %v75 = vlaneseq
  %v76 = vshrl.u32 %v75, 7
  %v77 = vsub.s32 %v74, %v76
  %v78 = vrot.slane %v70, %v77
  %v80 = vunpack.c.l.s4 1966171168
  %v81 = vunpack.c.0.s8 %v80
  %v82 = vlaneseq
  %v83 = vshrl.u32 %v82, 7
  %v84 = vsub.s32 %v81, %v83
  %v85 = vrot.slane %v71, %v84
  %v86 = vlaneseq
  %v87 = vshrl.u32 %v86, 7
  %v88 = vsub.s32 0, %v87
  %v89 = vrot.slane %v78, %v88
  %v90 = vlaneseq
  %v91 = vshrl.u32 %v90, 7
  %v92 = vsub.s32 0, %v91
  %v93 = vrot.slane %v85, %v92
  %v96 = vadd.f32 %v60, %v89
  %v97 = vadd.f32 %v60, %v93
  %v98 = vld [vmem:[%s5] sm:$0xf]
  %v99 = vld [vmem:[%s5 + $0x4] sm:$0xf]
  %v100 = vld [vmem:[%s5 + $0x8] sm:$0xf]
  %v101 = vld [vmem:[%s5 + $0xc] sm:$0xf]
  %v102 = vld [vmem:[%s6] sm:$0xf]
  %v103 = vld [vmem:[%s6 + $0x4] sm:$0xf]
  %v104 = vld [vmem:[%s6 + $0x8] sm:$0xf]
  %v105 = vld [vmem:[%s6 + $0xc] sm:$0xf]
  %v106 = vld [vmem:[%s7] sm:$0xf]
  %v107 = vld [vmem:[%s7 + $0x4] sm:$0xf]
  %v108 = vld [vmem:[%s7 + $0x8] sm:$0xf]
  %v109 = vld [vmem:[%s7 + $0xc] sm:$0xf]
  %v110 = vld [vmem:[%s8] sm:$0xf]
  %v111 = vld [vmem:[%s8 + $0x4] sm:$0xf]
  %v112 = vld [vmem:[%s8 + $0x8] sm:$0xf]
  %v113 = vld [vmem:[%s8 + $0xc] sm:$0xf]
  %v114 = vld [vmem:[%s8 + $0x10] sm:$0xf]
  %v115 = vld [vmem:[%s8 + $0x14] sm:$0xf]
  %v116 = vld [vmem:[%s8 + $0x18] sm:$0xf]
  %v117 = vld [vmem:[%s8 + $0x1c] sm:$0xf]
  %vm118 = vcmask 261120
  %v119 = vsel %vm118, %v52, 0.0
  %120 = vadd.xlane.f32.xlu0 %v119
  %v121 = vpop.xlane.xlu0 %120
  %v122 = vsel %vm118, %v53, 0.0
  %123 = vadd.xlane.f32.xlu0 %v122
  %v124 = vpop.xlane.xlu0 %123
  %v125 = vrcp.pop 32.0
  %v126 = vmul.f32 %v121, %v125
  %v127 = vmul.f32 %v124, %v125
  %v128 = vsub.f32 %v52, %v126
  %v129 = vsub.f32 %v53, %v127
  %v130 = vmul.f32 %v128, %v128
  %v131 = vmul.f32 %v129, %v129
  %v132 = vsel %vm118, %v130, 0.0
  %133 = vadd.xlane.f32.xlu0 %v132
  %v134 = vpop.xlane.xlu0 %133
  %v135 = vsel %vm118, %v131, 0.0
  %136 = vadd.xlane.f32.xlu0 %v135
  %v137 = vpop.xlane.xlu0 %136
  %v138 = vmul.f32 %v134, %v125
  %v139 = vmul.f32 %v137, %v125
  %v140 = vadd.f32 %v138, 1e-05
  %v141 = vadd.f32 %v139, 1e-05
  %v142 = vrsqrt.pop %v140
  %v143 = vrsqrt.pop %v141
  %v144 = vmul.f32 %v128, %v142
  %v145 = vmul.f32 %v129, %v143
  %v146 = vlaneseq
  %v147 = vshrl.u32 %v146, 7
  %v148 = vsub.s32 0, %v147
  %v149 = vrot.slane %v48, %v148
  %v150 = vmul.f32 %v144, %v149
  %v151 = vmul.f32 %v145, %v149
  %v152 = vlaneseq
  %v153 = vshrl.u32 %v152, 7
  %v154 = vsub.s32 1, %v153
  %v155 = vrot.slane %v48, %v154
  %v156 = vadd.f32 %v150, %v155
  %v157 = vadd.f32 %v151, %v155
  %v158 = vpack.c.bf16 %v157, %v156
  %v159 = vlaneseq
  %v160 = vshrl.u32 %v159, 7
  %v161 = vsub.s32 2, %v160
  %v162 = vrot.slane %v48, %v161
  %v167 = vunpack.c.l.b16 %v98
  %v168 = vunpack.c.l.b16 %v99
  %v169 = vunpack.c.l.b16 %v100
  %v170 = vunpack.c.l.b16 %v101
  %v171 = vpack.c.b16 %v168, %v167
  %v172 = vpack.c.b16 %v170, %v169
  %v176 = vsel %vm118, %v158, 0
  %178 = vmatprep.subr.bf16.mxu0 0
  %179 = vmatpush1.bf16.msra.mxu0 %v171
  %180 = vmatprep.subr.bf16.mxu0 0
  %181 = vmatpush1.bf16.msra.mxu0 %v172
  %182 = vmatprep.subr.bf16.mxu0 0
  %183 = vmatpush1.bf16.msra.mxu0 0
  %184 = vmatprep.subr.bf16.mxu0 0
  %185 = vmatpush1.bf16.msra.mxu0 0
  %186 = vmatprep.subr.bf16.mxu0 0
  %187 = vmatpush1.bf16.msra.mxu0 0
  %188 = vmatprep.subr.bf16.mxu0 0
  %189 = vmatpush1.bf16.msra.mxu0 0
  %190 = vmatprep.subr.bf16.mxu0 0
  %191 = vmatpush1.bf16.msra.mxu0 0
  %192 = vmatprep.subr.bf16.mxu0 0
  %193 = vmatpush1.bf16.msra.mxu0 0
  %194 = vmatprep.subr.bf16.mxu0 0
  %195 = vmatpush1.bf16.msra.mxu0 0
  %196 = vmatprep.subr.bf16.mxu0 0
  %197 = vmatpush1.bf16.msra.mxu0 0
  %198 = vmatprep.subr.bf16.mxu0 0
  %199 = vmatpush1.bf16.msra.mxu0 0
  %200 = vmatprep.subr.bf16.mxu0 0
  %201 = vmatpush1.bf16.msra.mxu0 0
  %202 = vmatprep.subr.bf16.mxu0 0
  %203 = vmatpush1.bf16.msra.mxu0 0
  %204 = vmatprep.subr.bf16.mxu0 0
  %205 = vmatpush1.bf16.msra.mxu0 0
  %206 = vmatprep.subr.bf16.mxu0 0
  %207 = vmatpush1.bf16.msra.mxu0 0
  %208 = vmatprep.subr.bf16.mxu0 0
  %209 = vmatpush1.bf16.msra.mxu0 0
  %210 = vmatprep.mubr.bf16.mxu0 0
  %211 = vmatmul.mubr.bf16.gmra.mrb[0].mxu0 %v176
  %v212 = vpop.f32.mrb[0].mxu0
  %v213 = vadd.f32 %v162, %v212
  %v214 = vpop.f32.mrb[0].mxu0
  %v215 = vpop.f32.mrb[0].mxu0
  %v216 = vadd.f32 %v162, %v215
  %v217 = vpop.f32.mrb[0].mxu0
  %218 = vdwg.mxu0
  %v219 = vpack.c.bf16 %v213, %v213
  %v220 = vpack.c.bf16 %v216, %v216
  %222 = vrot.lane.b32.xlu0 %v219, 96
  %v223 = vpop.permute.xlu0 %222
  %vm224 = vcmask 130048
  %v226 = vsel %vm224, %v219, 0
  %v229 = vsel %vm224, %v223, 0
  %231 = vmatprep.subr.bf16.mxu0 0
  %232 = vmatpush1.bf16.xpose.msra.mxu0 %v229
  %233 = vmatprep.subr.bf16.mxu0 0
  %234 = vmatpush1.bf16.xpose.msra.mxu0 0
  %235 = vmatprep.subr.bf16.mxu0 0
  %236 = vmatpush1.bf16.xpose.msra.mxu0 0
  %237 = vmatprep.subr.bf16.mxu0 0
  %238 = vmatpush1.bf16.xpose.msra.mxu0 0
  %239 = vmatprep.subr.bf16.mxu0 0
  %240 = vmatpush1.bf16.xpose.msra.mxu0 0
  %241 = vmatprep.subr.bf16.mxu0 0
  %242 = vmatpush1.bf16.xpose.msra.mxu0 0
  %243 = vmatprep.subr.bf16.mxu0 0
  %244 = vmatpush1.bf16.xpose.msra.mxu0 0
  %245 = vmatprep.subr.bf16.mxu0 0
  %246 = vmatpush1.bf16.xpose.msra.mxu0 0
  %247 = vmatprep.subr.bf16.mxu0 0
  %248 = vmatpush1.bf16.xpose.msra.mxu0 0
  %249 = vmatprep.subr.bf16.mxu0 0
  %250 = vmatpush1.bf16.xpose.msra.mxu0 0
  %251 = vmatprep.subr.bf16.mxu0 0
  %252 = vmatpush1.bf16.xpose.msra.mxu0 0
  %253 = vmatprep.subr.bf16.mxu0 0
  %254 = vmatpush1.bf16.xpose.msra.mxu0 0
  %255 = vmatprep.subr.bf16.mxu0 0
  %256 = vmatpush1.bf16.xpose.msra.mxu0 0
  %257 = vmatprep.subr.bf16.mxu0 0
  %258 = vmatpush1.bf16.xpose.msra.mxu0 0
  %259 = vmatprep.subr.bf16.mxu0 0
  %260 = vmatpush1.bf16.xpose.msra.mxu0 0
  %261 = vmatprep.subr.bf16.mxu0 0
  %262 = vmatpush1.bf16.xpose.msra.mxu0 0
  %263 = vmatprep.mubr.bf16.mxu0 0
  %264 = vmatmul.mubr.bf16.gmra.mrb[0].mxu0 %v226
  %v265 = vpop.f32.mrb[0].mxu0
  %v266 = vadd.f32 %v96, %v265
  %v267 = vpop.f32.mrb[0].mxu0
  %v268 = vpop.f32.mrb[0].mxu0
  %v269 = vpop.f32.mrb[0].mxu0
  %270 = vdwg.mxu0
  %272 = vrot.lane.b32.xlu0 %v220, 96
  %v273 = vpop.permute.xlu0 %272
  %v275 = vsel %vm224, %v220, 0
  %v278 = vsel %vm224, %v273, 0
  %280 = vmatprep.subr.bf16.mxu0 0
  %281 = vmatpush1.bf16.xpose.msra.mxu0 %v278
  %282 = vmatprep.subr.bf16.mxu0 0
  %283 = vmatpush1.bf16.xpose.msra.mxu0 0
  %284 = vmatprep.subr.bf16.mxu0 0
  %285 = vmatpush1.bf16.xpose.msra.mxu0 0
  %286 = vmatprep.subr.bf16.mxu0 0
  %287 = vmatpush1.bf16.xpose.msra.mxu0 0
  %288 = vmatprep.subr.bf16.mxu0 0
  %289 = vmatpush1.bf16.xpose.msra.mxu0 0
  %290 = vmatprep.subr.bf16.mxu0 0
  %291 = vmatpush1.bf16.xpose.msra.mxu0 0
  %292 = vmatprep.subr.bf16.mxu0 0
  %293 = vmatpush1.bf16.xpose.msra.mxu0 0
  %294 = vmatprep.subr.bf16.mxu0 0
  %295 = vmatpush1.bf16.xpose.msra.mxu0 0
  %296 = vmatprep.subr.bf16.mxu0 0
  %297 = vmatpush1.bf16.xpose.msra.mxu0 0
  %298 = vmatprep.subr.bf16.mxu0 0
  %299 = vmatpush1.bf16.xpose.msra.mxu0 0
  %300 = vmatprep.subr.bf16.mxu0 0
  %301 = vmatpush1.bf16.xpose.msra.mxu0 0
  %302 = vmatprep.subr.bf16.mxu0 0
  %303 = vmatpush1.bf16.xpose.msra.mxu0 0
  %304 = vmatprep.subr.bf16.mxu0 0
  %305 = vmatpush1.bf16.xpose.msra.mxu0 0
  %306 = vmatprep.subr.bf16.mxu0 0
  %307 = vmatpush1.bf16.xpose.msra.mxu0 0
  %308 = vmatprep.subr.bf16.mxu0 0
  %309 = vmatpush1.bf16.xpose.msra.mxu0 0
  %310 = vmatprep.subr.bf16.mxu0 0
  %311 = vmatpush1.bf16.xpose.msra.mxu0 0
  %312 = vmatprep.mubr.bf16.mxu0 0
  %313 = vmatmul.mubr.bf16.gmra.mrb[0].mxu0 %v275
  %v314 = vpop.f32.mrb[0].mxu0
  %v315 = vadd.f32 %v97, %v314
  %v316 = vpop.f32.mrb[0].mxu0
  %v317 = vpop.f32.mrb[0].mxu0
  %v318 = vpop.f32.mrb[0].mxu0
  %319 = vdwg.mxu0
  %vm320 = vcmask 64512
  %v321 = vsel %vm320, %v266, -inf
  %322 = vmax.xlane.f32.xlu0 %v321
  %v323 = vpop.xlane.xlu0 %322
  %v324 = vsel %vm320, %v315, -inf
  %325 = vmax.xlane.f32.xlu0 %v324
  %v326 = vpop.xlane.xlu0 %325
  %v327 = vsub.f32 %v266, %v323
  %v328 = vsub.f32 %v315, %v326
  %v329 = vmul.f32 %v327, 1.442695
  %v330 = vpow.pop %v329
  %v331 = vmul.f32 %v328, 1.442695
  %v332 = vpow.pop %v331
  %v333 = vsel %vm320, %v330, 0.0
  %334 = vadd.xlane.f32.xlu0 %v333
  %v335 = vpop.xlane.xlu0 %334
  %v336 = vsel %vm320, %v332, 0.0
  %337 = vadd.xlane.f32.xlu0 %v336
  %v338 = vpop.xlane.xlu0 %337
  %v339 = vrcp.pop %v335
  %v340 = vrcp.pop %v338
  %v341 = vmul.f32 %v330, %v339
  %v342 = vmul.f32 %v332, %v340
  %v343 = vpack.c.bf16 %v341, %v341
  %v344 = vpack.c.bf16 %v342, %v342
  %345 = vrot.lane.b32.xlu0 %v219, 64
  %v346 = vpop.permute.xlu0 %345
  %v348 = vsel %vm320, %v343, 0
  %vm350 = vcmask 1043456
  %v352 = vsel %vm350, %v346, 0
  %354 = vmatprep.subr.bf16.mxu0 0
  %355 = vmatpush1.bf16.msra.mxu0 %v352
  %356 = vmatprep.subr.bf16.mxu0 0
  %357 = vmatpush1.bf16.msra.mxu0 0
  %358 = vmatprep.subr.bf16.mxu0 0
  %359 = vmatpush1.bf16.msra.mxu0 0
  %360 = vmatprep.subr.bf16.mxu0 0
  %361 = vmatpush1.bf16.msra.mxu0 0
  %362 = vmatprep.subr.bf16.mxu0 0
  %363 = vmatpush1.bf16.msra.mxu0 0
  %364 = vmatprep.subr.bf16.mxu0 0
  %365 = vmatpush1.bf16.msra.mxu0 0
  %366 = vmatprep.subr.bf16.mxu0 0
  %367 = vmatpush1.bf16.msra.mxu0 0
  %368 = vmatprep.subr.bf16.mxu0 0
  %369 = vmatpush1.bf16.msra.mxu0 0
  %370 = vmatprep.subr.bf16.mxu0 0
  %371 = vmatpush1.bf16.msra.mxu0 0
  %372 = vmatprep.subr.bf16.mxu0 0
  %373 = vmatpush1.bf16.msra.mxu0 0
  %374 = vmatprep.subr.bf16.mxu0 0
  %375 = vmatpush1.bf16.msra.mxu0 0
  %376 = vmatprep.subr.bf16.mxu0 0
  %377 = vmatpush1.bf16.msra.mxu0 0
  %378 = vmatprep.subr.bf16.mxu0 0
  %379 = vmatpush1.bf16.msra.mxu0 0
  %380 = vmatprep.subr.bf16.mxu0 0
  %381 = vmatpush1.bf16.msra.mxu0 0
  %382 = vmatprep.subr.bf16.mxu0 0
  %383 = vmatpush1.bf16.msra.mxu0 0
  %384 = vmatprep.subr.bf16.mxu0 0
  %385 = vmatpush1.bf16.msra.mxu0 0
  %386 = vmatprep.mubr.bf16.mxu0 0
  %387 = vmatmul.mubr.bf16.gmra.mrb[0].mxu0 %v348
  %v388 = vpop.f32.mrb[0].mxu0
  %v389 = vadd.f32 0.0, %v388
  %v390 = vpop.f32.mrb[0].mxu0
  %v391 = vpop.f32.mrb[0].mxu0
  %v392 = vpop.f32.mrb[0].mxu0
  %393 = vdwg.mxu0
  %394 = vrot.lane.b32.xlu0 %v220, 64
  %v395 = vpop.permute.xlu0 %394
  %v397 = vsel %vm320, %v344, 0
  %v400 = vsel %vm350, %v395, 0
  %402 = vmatprep.subr.bf16.mxu0 0
  %403 = vmatpush1.bf16.msra.mxu0 %v400
  %404 = vmatprep.subr.bf16.mxu0 0
  %405 = vmatpush1.bf16.msra.mxu0 0
  %406 = vmatprep.subr.bf16.mxu0 0
  %407 = vmatpush1.bf16.msra.mxu0 0
  %408 = vmatprep.subr.bf16.mxu0 0
  %409 = vmatpush1.bf16.msra.mxu0 0
  %410 = vmatprep.subr.bf16.mxu0 0
  %411 = vmatpush1.bf16.msra.mxu0 0
  %412 = vmatprep.subr.bf16.mxu0 0
  %413 = vmatpush1.bf16.msra.mxu0 0
  %414 = vmatprep.subr.bf16.mxu0 0
  %415 = vmatpush1.bf16.msra.mxu0 0
  %416 = vmatprep.subr.bf16.mxu0 0
  %417 = vmatpush1.bf16.msra.mxu0 0
  %418 = vmatprep.subr.bf16.mxu0 0
  %419 = vmatpush1.bf16.msra.mxu0 0
  %420 = vmatprep.subr.bf16.mxu0 0
  %421 = vmatpush1.bf16.msra.mxu0 0
  %422 = vmatprep.subr.bf16.mxu0 0
  %423 = vmatpush1.bf16.msra.mxu0 0
  %424 = vmatprep.subr.bf16.mxu0 0
  %425 = vmatpush1.bf16.msra.mxu0 0
  %426 = vmatprep.subr.bf16.mxu0 0
  %427 = vmatpush1.bf16.msra.mxu0 0
  %428 = vmatprep.subr.bf16.mxu0 0
  %429 = vmatpush1.bf16.msra.mxu0 0
  %430 = vmatprep.subr.bf16.mxu0 0
  %431 = vmatpush1.bf16.msra.mxu0 0
  %432 = vmatprep.subr.bf16.mxu0 0
  %433 = vmatpush1.bf16.msra.mxu0 0
  %434 = vmatprep.mubr.bf16.mxu0 0
  %435 = vmatmul.mubr.bf16.gmra.mrb[0].mxu0 %v397
  %v436 = vpop.f32.mrb[0].mxu0
  %v437 = vadd.f32 0.0, %v436
  %v438 = vpop.f32.mrb[0].mxu0
  %v439 = vpop.f32.mrb[0].mxu0
  %v440 = vpop.f32.mrb[0].mxu0
  %441 = vdwg.mxu0
  %v442 = vpack.c.bf16 %v437, %v389
  %443 = vrot.lane.b32.xlu0 %v219, 112
  %v444 = vpop.permute.xlu0 %443
  %445 = vrot.lane.b32.xlu0 %v219, 80
  %v446 = vpop.permute.xlu0 %445
  %v448 = vsel %vm224, %v444, 0
  %v451 = vsel %vm224, %v446, 0
  %453 = vmatprep.subr.bf16.mxu0 0
  %454 = vmatpush1.bf16.xpose.msra.mxu0 %v451
  %455 = vmatprep.subr.bf16.mxu0 0
  %456 = vmatpush1.bf16.xpose.msra.mxu0 0
  %457 = vmatprep.subr.bf16.mxu0 0
  %458 = vmatpush1.bf16.xpose.msra.mxu0 0
  %459 = vmatprep.subr.bf16.mxu0 0
  %460 = vmatpush1.bf16.xpose.msra.mxu0 0
  %461 = vmatprep.subr.bf16.mxu0 0
  %462 = vmatpush1.bf16.xpose.msra.mxu0 0
  %463 = vmatprep.subr.bf16.mxu0 0
  %464 = vmatpush1.bf16.xpose.msra.mxu0 0
  %465 = vmatprep.subr.bf16.mxu0 0
  %466 = vmatpush1.bf16.xpose.msra.mxu0 0
  %467 = vmatprep.subr.bf16.mxu0 0
  %468 = vmatpush1.bf16.xpose.msra.mxu0 0
  %469 = vmatprep.subr.bf16.mxu0 0
  %470 = vmatpush1.bf16.xpose.msra.mxu0 0
  %471 = vmatprep.subr.bf16.mxu0 0
  %472 = vmatpush1.bf16.xpose.msra.mxu0 0
  %473 = vmatprep.subr.bf16.mxu0 0
  %474 = vmatpush1.bf16.xpose.msra.mxu0 0
  %475 = vmatprep.subr.bf16.mxu0 0
  %476 = vmatpush1.bf16.xpose.msra.mxu0 0
  %477 = vmatprep.subr.bf16.mxu0 0
  %478 = vmatpush1.bf16.xpose.msra.mxu0 0
  %479 = vmatprep.subr.bf16.mxu0 0
  %480 = vmatpush1.bf16.xpose.msra.mxu0 0
  %481 = vmatprep.subr.bf16.mxu0 0
  %482 = vmatpush1.bf16.xpose.msra.mxu0 0
  %483 = vmatprep.subr.bf16.mxu0 0
  %484 = vmatpush1.bf16.xpose.msra.mxu0 0
  %485 = vmatprep.mubr.bf16.mxu0 0
  %486 = vmatmul.mubr.bf16.gmra.mrb[0].mxu0 %v448
  %v487 = vpop.f32.mrb[0].mxu0
  %v488 = vadd.f32 %v96, %v487
  %v489 = vpop.f32.mrb[0].mxu0
  %v490 = vpop.f32.mrb[0].mxu0
  %v491 = vpop.f32.mrb[0].mxu0
  %492 = vdwg.mxu0
  %493 = vrot.lane.b32.xlu0 %v220, 112
  %v494 = vpop.permute.xlu0 %493
  %495 = vrot.lane.b32.xlu0 %v220, 80
  %v496 = vpop.permute.xlu0 %495
  %v498 = vsel %vm224, %v494, 0
  %v501 = vsel %vm224, %v496, 0
  %503 = vmatprep.subr.bf16.mxu0 0
  %504 = vmatpush1.bf16.xpose.msra.mxu0 %v501
  %505 = vmatprep.subr.bf16.mxu0 0
  %506 = vmatpush1.bf16.xpose.msra.mxu0 0
  %507 = vmatprep.subr.bf16.mxu0 0
  %508 = vmatpush1.bf16.xpose.msra.mxu0 0
  %509 = vmatprep.subr.bf16.mxu0 0
  %510 = vmatpush1.bf16.xpose.msra.mxu0 0
  %511 = vmatprep.subr.bf16.mxu0 0
  %512 = vmatpush1.bf16.xpose.msra.mxu0 0
  %513 = vmatprep.subr.bf16.mxu0 0
  %514 = vmatpush1.bf16.xpose.msra.mxu0 0
  %515 = vmatprep.subr.bf16.mxu0 0
  %516 = vmatpush1.bf16.xpose.msra.mxu0 0
  %517 = vmatprep.subr.bf16.mxu0 0
  %518 = vmatpush1.bf16.xpose.msra.mxu0 0
  %519 = vmatprep.subr.bf16.mxu0 0
  %520 = vmatpush1.bf16.xpose.msra.mxu0 0
  %521 = vmatprep.subr.bf16.mxu0 0
  %522 = vmatpush1.bf16.xpose.msra.mxu0 0
  %523 = vmatprep.subr.bf16.mxu0 0
  %524 = vmatpush1.bf16.xpose.msra.mxu0 0
  %525 = vmatprep.subr.bf16.mxu0 0
  %526 = vmatpush1.bf16.xpose.msra.mxu0 0
  %527 = vmatprep.subr.bf16.mxu0 0
  %528 = vmatpush1.bf16.xpose.msra.mxu0 0
  %529 = vmatprep.subr.bf16.mxu0 0
  %530 = vmatpush1.bf16.xpose.msra.mxu0 0
  %531 = vmatprep.subr.bf16.mxu0 0
  %532 = vmatpush1.bf16.xpose.msra.mxu0 0
  %533 = vmatprep.subr.bf16.mxu0 0
  %534 = vmatpush1.bf16.xpose.msra.mxu0 0
  %535 = vmatprep.mubr.bf16.mxu0 0
  %536 = vmatmul.mubr.bf16.gmra.mrb[0].mxu0 %v498
  %v537 = vpop.f32.mrb[0].mxu0
  %v538 = vadd.f32 %v97, %v537
  %v539 = vpop.f32.mrb[0].mxu0
  %v540 = vpop.f32.mrb[0].mxu0
  %v541 = vpop.f32.mrb[0].mxu0
  %542 = vdwg.mxu0
  %v543 = vsel %vm320, %v488, -inf
  %544 = vmax.xlane.f32.xlu0 %v543
  %v545 = vpop.xlane.xlu0 %544
  %v546 = vsel %vm320, %v538, -inf
  %547 = vmax.xlane.f32.xlu0 %v546
  %v548 = vpop.xlane.xlu0 %547
  %v549 = vsub.f32 %v488, %v545
  %v550 = vsub.f32 %v538, %v548
  %v551 = vmul.f32 %v549, 1.442695
  %v552 = vpow.pop %v551
  %v553 = vmul.f32 %v550, 1.442695
  %v554 = vpow.pop %v553
  %v555 = vsel %vm320, %v552, 0.0
  %556 = vadd.xlane.f32.xlu0 %v555
  %v557 = vpop.xlane.xlu0 %556
  %v558 = vsel %vm320, %v554, 0.0
  %559 = vadd.xlane.f32.xlu0 %v558
  %v560 = vpop.xlane.xlu0 %559
  %v561 = vrcp.pop %v557
  %v562 = vrcp.pop %v560
  %v563 = vmul.f32 %v552, %v561
  %v564 = vmul.f32 %v554, %v562
  %v565 = vpack.c.bf16 %v563, %v563
  %v566 = vpack.c.bf16 %v564, %v564
  %567 = vrot.lane.b32.xlu0 %v219, 48
  %v568 = vpop.permute.xlu0 %567
  %v570 = vsel %vm320, %v565, 0
  %v573 = vsel %vm350, %v568, 0
  %575 = vmatprep.subr.bf16.mxu0 0
  %576 = vmatpush1.bf16.msra.mxu0 %v573
  %577 = vmatprep.subr.bf16.mxu0 0
  %578 = vmatpush1.bf16.msra.mxu0 0
  %579 = vmatprep.subr.bf16.mxu0 0
  %580 = vmatpush1.bf16.msra.mxu0 0
  %581 = vmatprep.subr.bf16.mxu0 0
  %582 = vmatpush1.bf16.msra.mxu0 0
  %583 = vmatprep.subr.bf16.mxu0 0
  %584 = vmatpush1.bf16.msra.mxu0 0
  %585 = vmatprep.subr.bf16.mxu0 0
  %586 = vmatpush1.bf16.msra.mxu0 0
  %587 = vmatprep.subr.bf16.mxu0 0
  %588 = vmatpush1.bf16.msra.mxu0 0
  %589 = vmatprep.subr.bf16.mxu0 0
  %590 = vmatpush1.bf16.msra.mxu0 0
  %591 = vmatprep.subr.bf16.mxu0 0
  %592 = vmatpush1.bf16.msra.mxu0 0
  %593 = vmatprep.subr.bf16.mxu0 0
  %594 = vmatpush1.bf16.msra.mxu0 0
  %595 = vmatprep.subr.bf16.mxu0 0
  %596 = vmatpush1.bf16.msra.mxu0 0
  %597 = vmatprep.subr.bf16.mxu0 0
  %598 = vmatpush1.bf16.msra.mxu0 0
  %599 = vmatprep.subr.bf16.mxu0 0
  %600 = vmatpush1.bf16.msra.mxu0 0
  %601 = vmatprep.subr.bf16.mxu0 0
  %602 = vmatpush1.bf16.msra.mxu0 0
  %603 = vmatprep.subr.bf16.mxu0 0
  %604 = vmatpush1.bf16.msra.mxu0 0
  %605 = vmatprep.subr.bf16.mxu0 0
  %606 = vmatpush1.bf16.msra.mxu0 0
  %607 = vmatprep.mubr.bf16.mxu0 0
  %608 = vmatmul.mubr.bf16.gmra.mrb[0].mxu0 %v570
  %v609 = vpop.f32.mrb[0].mxu0
  %v610 = vadd.f32 0.0, %v609
  %v611 = vpop.f32.mrb[0].mxu0
  %v612 = vpop.f32.mrb[0].mxu0
  %v613 = vpop.f32.mrb[0].mxu0
  %614 = vdwg.mxu0
  %615 = vrot.lane.b32.xlu0 %v220, 48
  %v616 = vpop.permute.xlu0 %615
  %v618 = vsel %vm320, %v566, 0
  %v621 = vsel %vm350, %v616, 0
  %623 = vmatprep.subr.bf16.mxu0 0
  %624 = vmatpush1.bf16.msra.mxu0 %v621
  %625 = vmatprep.subr.bf16.mxu0 0
  %626 = vmatpush1.bf16.msra.mxu0 0
  %627 = vmatprep.subr.bf16.mxu0 0
  %628 = vmatpush1.bf16.msra.mxu0 0
  %629 = vmatprep.subr.bf16.mxu0 0
  %630 = vmatpush1.bf16.msra.mxu0 0
  %631 = vmatprep.subr.bf16.mxu0 0
  %632 = vmatpush1.bf16.msra.mxu0 0
  %633 = vmatprep.subr.bf16.mxu0 0
  %634 = vmatpush1.bf16.msra.mxu0 0
  %635 = vmatprep.subr.bf16.mxu0 0
  %636 = vmatpush1.bf16.msra.mxu0 0
  %637 = vmatprep.subr.bf16.mxu0 0
  %638 = vmatpush1.bf16.msra.mxu0 0
  %639 = vmatprep.subr.bf16.mxu0 0
  %640 = vmatpush1.bf16.msra.mxu0 0
  %641 = vmatprep.subr.bf16.mxu0 0
  %642 = vmatpush1.bf16.msra.mxu0 0
  %643 = vmatprep.subr.bf16.mxu0 0
  %644 = vmatpush1.bf16.msra.mxu0 0
  %645 = vmatprep.subr.bf16.mxu0 0
  %646 = vmatpush1.bf16.msra.mxu0 0
  %647 = vmatprep.subr.bf16.mxu0 0
  %648 = vmatpush1.bf16.msra.mxu0 0
  %649 = vmatprep.subr.bf16.mxu0 0
  %650 = vmatpush1.bf16.msra.mxu0 0
  %651 = vmatprep.subr.bf16.mxu0 0
  %652 = vmatpush1.bf16.msra.mxu0 0
  %653 = vmatprep.subr.bf16.mxu0 0
  %654 = vmatpush1.bf16.msra.mxu0 0
  %655 = vmatprep.mubr.bf16.mxu0 0
  %656 = vmatmul.mubr.bf16.gmra.mrb[0].mxu0 %v618
  %v657 = vpop.f32.mrb[0].mxu0
  %v658 = vadd.f32 0.0, %v657
  %v659 = vpop.f32.mrb[0].mxu0
  %v660 = vpop.f32.mrb[0].mxu0
  %v661 = vpop.f32.mrb[0].mxu0
  %662 = vdwg.mxu0
  %v663 = vpack.c.bf16 %v658, %v610
  %v666 = vunpack.c.l.b16 %v104
  %v667 = vunpack.c.l.b16 %v105
  %v668 = vpack.c.b16 %v667, %v666
  %v671 = vsel %vm224, %v663, 0
  %673 = vmatprep.subr.bf16.mxu0 0
  %674 = vmatpush1.bf16.msra.mxu0 %v668
  %675 = vmatprep.subr.bf16.mxu0 0
  %676 = vmatpush1.bf16.msra.mxu0 0
  %677 = vmatprep.subr.bf16.mxu0 0
  %678 = vmatpush1.bf16.msra.mxu0 0
  %679 = vmatprep.subr.bf16.mxu0 0
  %680 = vmatpush1.bf16.msra.mxu0 0
  %681 = vmatprep.subr.bf16.mxu0 0
  %682 = vmatpush1.bf16.msra.mxu0 0
  %683 = vmatprep.subr.bf16.mxu0 0
  %684 = vmatpush1.bf16.msra.mxu0 0
  %685 = vmatprep.subr.bf16.mxu0 0
  %686 = vmatpush1.bf16.msra.mxu0 0
  %687 = vmatprep.subr.bf16.mxu0 0
  %688 = vmatpush1.bf16.msra.mxu0 0
  %689 = vmatprep.subr.bf16.mxu0 0
  %690 = vmatpush1.bf16.msra.mxu0 0
  %691 = vmatprep.subr.bf16.mxu0 0
  %692 = vmatpush1.bf16.msra.mxu0 0
  %693 = vmatprep.subr.bf16.mxu0 0
  %694 = vmatpush1.bf16.msra.mxu0 0
  %695 = vmatprep.subr.bf16.mxu0 0
  %696 = vmatpush1.bf16.msra.mxu0 0
  %697 = vmatprep.subr.bf16.mxu0 0
  %698 = vmatpush1.bf16.msra.mxu0 0
  %699 = vmatprep.subr.bf16.mxu0 0
  %700 = vmatpush1.bf16.msra.mxu0 0
  %701 = vmatprep.subr.bf16.mxu0 0
  %702 = vmatpush1.bf16.msra.mxu0 0
  %703 = vmatprep.subr.bf16.mxu0 0
  %704 = vmatpush1.bf16.msra.mxu0 0
  %705 = vmatprep.mubr.bf16.mxu0 0
  %706 = vmatmul.mubr.bf16.gmra.mrb[0].mxu0 %v671
  %v707 = vpop.f32.mrb[0].mxu0
  %v708 = vadd.f32 0.0, %v707
  %v709 = vpop.f32.mrb[0].mxu0
  %v710 = vpop.f32.mrb[0].mxu0
  %v711 = vadd.f32 0.0, %v710
  %v712 = vpop.f32.mrb[0].mxu0
  %713 = vdwg.mxu0
  %v716 = vunpack.c.l.b16 %v102
  %v717 = vunpack.c.l.b16 %v103
  %v718 = vpack.c.b16 %v717, %v716
  %v721 = vsel %vm224, %v442, 0
  %723 = vmatprep.subr.bf16.mxu0 0
  %724 = vmatpush1.bf16.msra.mxu0 %v718
  %725 = vmatprep.subr.bf16.mxu0 0
  %726 = vmatpush1.bf16.msra.mxu0 0
  %727 = vmatprep.subr.bf16.mxu0 0
  %728 = vmatpush1.bf16.msra.mxu0 0
  %729 = vmatprep.subr.bf16.mxu0 0
  %730 = vmatpush1.bf16.msra.mxu0 0
  %731 = vmatprep.subr.bf16.mxu0 0
  %732 = vmatpush1.bf16.msra.mxu0 0
  %733 = vmatprep.subr.bf16.mxu0 0
  %734 = vmatpush1.bf16.msra.mxu0 0
  %735 = vmatprep.subr.bf16.mxu0 0
  %736 = vmatpush1.bf16.msra.mxu0 0
  %737 = vmatprep.subr.bf16.mxu0 0
  %738 = vmatpush1.bf16.msra.mxu0 0
  %739 = vmatprep.subr.bf16.mxu0 0
  %740 = vmatpush1.bf16.msra.mxu0 0
  %741 = vmatprep.subr.bf16.mxu0 0
  %742 = vmatpush1.bf16.msra.mxu0 0
  %743 = vmatprep.subr.bf16.mxu0 0
  %744 = vmatpush1.bf16.msra.mxu0 0
  %745 = vmatprep.subr.bf16.mxu0 0
  %746 = vmatpush1.bf16.msra.mxu0 0
  %747 = vmatprep.subr.bf16.mxu0 0
  %748 = vmatpush1.bf16.msra.mxu0 0
  %749 = vmatprep.subr.bf16.mxu0 0
  %750 = vmatpush1.bf16.msra.mxu0 0
  %751 = vmatprep.subr.bf16.mxu0 0
  %752 = vmatpush1.bf16.msra.mxu0 0
  %753 = vmatprep.subr.bf16.mxu0 0
  %754 = vmatpush1.bf16.msra.mxu0 0
  %755 = vmatprep.mubr.bf16.mxu0 0
  %756 = vmatmul.mubr.bf16.gmra.mrb[0].mxu0 %v721
  %v757 = vpop.f32.mrb[0].mxu0
  %v758 = vadd.f32 %v708, %v757
  %v759 = vpop.f32.mrb[0].mxu0
  %v760 = vpop.f32.mrb[0].mxu0
  %v761 = vadd.f32 %v711, %v760
  %v762 = vpop.f32.mrb[0].mxu0
  %763 = vdwg.mxu0
  %v764 = vadd.f32 %v52, %v758
  %v765 = vadd.f32 %v53, %v761
  %v766 = vlaneseq
  %v767 = vshrl.u32 %v766, 7
  %v768 = vsub.s32 3, %v767
  %v769 = vrot.slane %v48, %v768
  %v770 = vadd.f32 %v764, %v769
  %v771 = vadd.f32 %v765, %v769
  %v772 = vsel %vm118, %v770, 0.0
  %773 = vadd.xlane.f32.xlu0 %v772
  %v774 = vpop.xlane.xlu0 %773
  %v775 = vsel %vm118, %v771, 0.0
  %776 = vadd.xlane.f32.xlu0 %v775
  %v777 = vpop.xlane.xlu0 %776
  %v778 = vmul.f32 %v774, %v125
  %v779 = vmul.f32 %v777, %v125
  %v780 = vsub.f32 %v770, %v778
  %v781 = vsub.f32 %v771, %v779
  %v782 = vmul.f32 %v780, %v780
  %v783 = vmul.f32 %v781, %v781
  %v784 = vsel %vm118, %v782, 0.0
  %785 = vadd.xlane.f32.xlu0 %v784
  %v786 = vpop.xlane.xlu0 %785
  %v787 = vsel %vm118, %v783, 0.0
  %788 = vadd.xlane.f32.xlu0 %v787
  %v789 = vpop.xlane.xlu0 %788
  %v790 = vmul.f32 %v786, %v125
  %v791 = vmul.f32 %v789, %v125
  %v792 = vadd.f32 %v790, 1e-05
  %v793 = vadd.f32 %v791, 1e-05
  %v794 = vrsqrt.pop %v792
  %v795 = vrsqrt.pop %v793
  %v796 = vmul.f32 %v780, %v794
  %v797 = vmul.f32 %v781, %v795
  %v798 = vlaneseq
  %v799 = vshrl.u32 %v798, 7
  %v800 = vsub.s32 4, %v799
  %v801 = vrot.slane %v48, %v800
  %v802 = vmul.f32 %v796, %v801
  %v803 = vmul.f32 %v797, %v801
  %v804 = vlaneseq
  %v805 = vshrl.u32 %v804, 7
  %v806 = vsub.s32 5, %v805
  %v807 = vrot.slane %v48, %v806
  %v808 = vadd.f32 %v802, %v807
  %v809 = vadd.f32 %v803, %v807
  %v810 = vpack.c.bf16 %v809, %v808
  %v811 = vlaneseq
  %v812 = vshrl.u32 %v811, 7
  %v813 = vsub.s32 6, %v812
  %v814 = vrot.slane %v48, %v813
  %v819 = vunpack.c.l.b16 %v106
  %v820 = vunpack.c.l.b16 %v107
  %v821 = vunpack.c.l.b16 %v108
  %v822 = vunpack.c.l.b16 %v109
  %v823 = vpack.c.b16 %v820, %v819
  %v824 = vpack.c.b16 %v822, %v821
  %v828 = vsel %vm118, %v810, 0
  %830 = vmatprep.subr.bf16.mxu0 0
  %831 = vmatpush1.bf16.msra.mxu0 %v823
  %832 = vmatprep.subr.bf16.mxu0 0
  %833 = vmatpush1.bf16.msra.mxu0 %v824
  %834 = vmatprep.subr.bf16.mxu0 0
  %835 = vmatpush1.bf16.msra.mxu0 0
  %836 = vmatprep.subr.bf16.mxu0 0
  %837 = vmatpush1.bf16.msra.mxu0 0
  %838 = vmatprep.subr.bf16.mxu0 0
  %839 = vmatpush1.bf16.msra.mxu0 0
  %840 = vmatprep.subr.bf16.mxu0 0
  %841 = vmatpush1.bf16.msra.mxu0 0
  %842 = vmatprep.subr.bf16.mxu0 0
  %843 = vmatpush1.bf16.msra.mxu0 0
  %844 = vmatprep.subr.bf16.mxu0 0
  %845 = vmatpush1.bf16.msra.mxu0 0
  %846 = vmatprep.subr.bf16.mxu0 0
  %847 = vmatpush1.bf16.msra.mxu0 0
  %848 = vmatprep.subr.bf16.mxu0 0
  %849 = vmatpush1.bf16.msra.mxu0 0
  %850 = vmatprep.subr.bf16.mxu0 0
  %851 = vmatpush1.bf16.msra.mxu0 0
  %852 = vmatprep.subr.bf16.mxu0 0
  %853 = vmatpush1.bf16.msra.mxu0 0
  %854 = vmatprep.subr.bf16.mxu0 0
  %855 = vmatpush1.bf16.msra.mxu0 0
  %856 = vmatprep.subr.bf16.mxu0 0
  %857 = vmatpush1.bf16.msra.mxu0 0
  %858 = vmatprep.subr.bf16.mxu0 0
  %859 = vmatpush1.bf16.msra.mxu0 0
  %860 = vmatprep.subr.bf16.mxu0 0
  %861 = vmatpush1.bf16.msra.mxu0 0
  %862 = vmatprep.mubr.bf16.mxu0 0
  %863 = vmatmul.mubr.bf16.gmra.mrb[0].mxu0 %v828
  %v864 = vpop.f32.mrb[0].mxu0
  %v865 = vadd.f32 %v814, %v864
  %v866 = vpop.f32.mrb[0].mxu0
  %v867 = vpop.f32.mrb[0].mxu0
  %v868 = vadd.f32 %v814, %v867
  %v869 = vpop.f32.mrb[0].mxu0
  %870 = vdwg.mxu0
  %v871 = vmul.f32 %v865, 1.702
  %v872 = vmul.f32 %v868, 1.702
  %v873 = vxor.u32 %v871, 2147483648
  %v874 = vxor.u32 %v872, 2147483648
  %v875 = vmul.f32 %v873, 1.442695
  %v876 = vpow.pop %v875
  %v877 = vmul.f32 %v874, 1.442695
  %v878 = vpow.pop %v877
  %v879 = vadd.f32 %v876, 1.0
  %v880 = vadd.f32 %v878, 1.0
  %v881 = vrcp.pop %v879
  %v882 = vmul.f32 1.0, %v881
  %v883 = vrcp.pop %v880
  %v884 = vmul.f32 1.0, %v883
  %v885 = vmul.f32 %v865, %v882
  %v886 = vmul.f32 %v868, %v884
  %v887 = vpack.c.bf16 %v886, %v885
  %v888 = vlaneseq
  %v889 = vshrl.u32 %v888, 7
  %v890 = vsub.s32 7, %v889
  %v891 = vrot.slane %v48, %v890
  %v900 = vunpack.c.l.b16 %v110
  %v901 = vunpack.c.l.b16 %v111
  %v902 = vunpack.c.l.b16 %v112
  %v903 = vunpack.c.l.b16 %v113
  %v904 = vunpack.c.l.b16 %v114
  %v905 = vunpack.c.l.b16 %v115
  %v906 = vunpack.c.l.b16 %v116
  %v907 = vunpack.c.l.b16 %v117
  %v908 = vpack.c.b16 %v901, %v900
  %v909 = vpack.c.b16 %v903, %v902
  %v910 = vpack.c.b16 %v905, %v904
  %v911 = vpack.c.b16 %v907, %v906
  %vm916 = vcmask 523264
  %v918 = vsel %vm916, %v887, 0
  %920 = vmatprep.subr.bf16.mxu0 0
  %921 = vmatpush1.bf16.msra.mxu0 %v908
  %922 = vmatprep.subr.bf16.mxu0 0
  %923 = vmatpush1.bf16.msra.mxu0 %v909
  %924 = vmatprep.subr.bf16.mxu0 0
  %925 = vmatpush1.bf16.msra.mxu0 %v910
  %926 = vmatprep.subr.bf16.mxu0 0
  %927 = vmatpush1.bf16.msra.mxu0 %v911
  %928 = vmatprep.subr.bf16.mxu0 0
  %929 = vmatpush1.bf16.msra.mxu0 0
  %930 = vmatprep.subr.bf16.mxu0 0
  %931 = vmatpush1.bf16.msra.mxu0 0
  %932 = vmatprep.subr.bf16.mxu0 0
  %933 = vmatpush1.bf16.msra.mxu0 0
  %934 = vmatprep.subr.bf16.mxu0 0
  %935 = vmatpush1.bf16.msra.mxu0 0
  %936 = vmatprep.subr.bf16.mxu0 0
  %937 = vmatpush1.bf16.msra.mxu0 0
  %938 = vmatprep.subr.bf16.mxu0 0
  %939 = vmatpush1.bf16.msra.mxu0 0
  %940 = vmatprep.subr.bf16.mxu0 0
  %941 = vmatpush1.bf16.msra.mxu0 0
  %942 = vmatprep.subr.bf16.mxu0 0
  %943 = vmatpush1.bf16.msra.mxu0 0
  %944 = vmatprep.subr.bf16.mxu0 0
  %945 = vmatpush1.bf16.msra.mxu0 0
  %946 = vmatprep.subr.bf16.mxu0 0
  %947 = vmatpush1.bf16.msra.mxu0 0
  %948 = vmatprep.subr.bf16.mxu0 0
  %949 = vmatpush1.bf16.msra.mxu0 0
  %950 = vmatprep.subr.bf16.mxu0 0
  %951 = vmatpush1.bf16.msra.mxu0 0
  %952 = vmatprep.mubr.bf16.mxu0 0
  %953 = vmatmul.mubr.bf16.gmra.mrb[0].mxu0 %v918
  %v954 = vpop.f32.mrb[0].mxu0
  %v955 = vadd.f32 %v891, %v954
  %v956 = vpop.f32.mrb[0].mxu0
  %v957 = vpop.f32.mrb[0].mxu0
  %v958 = vadd.f32 %v891, %v957
  %v959 = vpop.f32.mrb[0].mxu0
  %960 = vdwg.mxu0
  %v961 = vadd.f32 %v770, %v955
  %v962 = vadd.f32 %v771, %v958
  %vm963 = vcmask 58368
  %v964 = vsel %vm963, %v54, 0.0
  %965 = vadd.xlane.f32.xlu0 %v964
  %v966 = vpop.xlane.xlu0 %965
  %v967 = vsub.f32 %v966, 1.0
  %v968 = vcvt.s32.f32 %v58
  %v969 = vcvt.s32.f32 %v56
  %v970 = vmul.f32 %v969, 8.0
  %v971 = vadd.f32 %v970, %v967
  %vm972 = vcmp.eq.f32.partialorder %v968, %v971
  %v973 = vsel %vm972, 1, 0
  %v974 = vcvt.s32.f32 %v973
  %v976 = vsel %vm224, %v974, 0
  %978 = vmatprep.subr.mxu0 0.0
  %979 = vmatpush1.msra.mxu0 %v961
  %980 = vmatprep.subr.mxu0 0.0
  %981 = vmatpush1.msra.mxu0 %v962
  %982 = vmatprep.subr.mxu0 0.0
  %983 = vmatpush1.msra.mxu0 0.0
  %984 = vmatprep.subr.mxu0 0.0
  %985 = vmatpush1.msra.mxu0 0.0
  %986 = vmatprep.subr.mxu0 0.0
  %987 = vmatpush1.msra.mxu0 0.0
  %988 = vmatprep.subr.mxu0 0.0
  %989 = vmatpush1.msra.mxu0 0.0
  %990 = vmatprep.subr.mxu0 0.0
  %991 = vmatpush1.msra.mxu0 0.0
  %992 = vmatprep.subr.mxu0 0.0
  %993 = vmatpush1.msra.mxu0 0.0
  %994 = vmatprep.subr.mxu0 0.0
  %995 = vmatpush1.msra.mxu0 0.0
  %996 = vmatprep.subr.mxu0 0.0
  %997 = vmatpush1.msra.mxu0 0.0
  %998 = vmatprep.subr.mxu0 0.0
  %999 = vmatpush1.msra.mxu0 0.0
  %1000 = vmatprep.subr.mxu0 0.0
  %1001 = vmatpush1.msra.mxu0 0.0
  %1002 = vmatprep.subr.mxu0 0.0
  %1003 = vmatpush1.msra.mxu0 0.0
  %1004 = vmatprep.subr.mxu0 0.0
  %1005 = vmatpush1.msra.mxu0 0.0
  %1006 = vmatprep.subr.mxu0 0.0
  %1007 = vmatpush1.msra.mxu0 0.0
  %1008 = vmatprep.subr.mxu0 0.0
  %1009 = vmatpush1.msra.mxu0 0.0
  %1010 = vmatprep.subr.mxu0 0.0
  %1011 = vmatpush1.msra.mxu0 0.0
  %1012 = vmatprep.subr.mxu0 0.0
  %1013 = vmatpush1.msra.mxu0 0.0
  %1014 = vmatprep.subr.mxu0 0.0
  %1015 = vmatpush1.msra.mxu0 0.0
  %1016 = vmatprep.subr.mxu0 0.0
  %1017 = vmatpush1.msra.mxu0 0.0
  %1018 = vmatprep.subr.mxu0 0.0
  %1019 = vmatpush1.msra.mxu0 0.0
  %1020 = vmatprep.subr.mxu0 0.0
  %1021 = vmatpush1.msra.mxu0 0.0
  %1022 = vmatprep.subr.mxu0 0.0
  %1023 = vmatpush1.msra.mxu0 0.0
  %1024 = vmatprep.subr.mxu0 0.0
  %1025 = vmatpush1.msra.mxu0 0.0
  %1026 = vmatprep.subr.mxu0 0.0
  %1027 = vmatpush1.msra.mxu0 0.0
  %1028 = vmatprep.subr.mxu0 0.0
  %1029 = vmatpush1.msra.mxu0 0.0
  %1030 = vmatprep.subr.mxu0 0.0
  %1031 = vmatpush1.msra.mxu0 0.0
  %1032 = vmatprep.subr.mxu0 0.0
  %1033 = vmatpush1.msra.mxu0 0.0
  %1034 = vmatprep.subr.mxu0 0.0
  %1035 = vmatpush1.msra.mxu0 0.0
  %1036 = vmatprep.subr.mxu0 0.0
  %1037 = vmatpush1.msra.mxu0 0.0
  %1038 = vmatprep.subr.mxu0 0.0
  %1039 = vmatpush1.msra.mxu0 0.0
  %1040 = vmatprep.subr.mxu0 0.0
  %1041 = vmatpush1.msra.mxu0 0.0
  %1042 = vmatprep.mubr.f32.mxu0 0.0
  %1043 = vmatmul.mubr.f32.gmra.mrb[0].mxu0 %v976
  %v1044 = vpop.f32.mrb[0].mxu0
  %v1045 = vadd.f32 0.0, %v1044
  %v1046 = vpop.f32.mrb[0].mxu0
  %1047 = vdwg.mxu0
  %vm1048 = vcmask 254976
  %v1049 = vsel %vm1048, %v1045, 0.0
  %1050 = vadd.xlane.f32.xlu0 %v1049
  %v1051 = vpop.xlane.xlu0 %1050
  %v1052 = vmul.f32 %v1051, %v125
  %v1053 = vsub.f32 %v1045, %v1052
  %v1054 = vmul.f32 %v1053, %v1053
  %v1055 = vsel %vm1048, %v1054, 0.0
  %1056 = vadd.xlane.f32.xlu0 %v1055
  %v1057 = vpop.xlane.xlu0 %1056
  %v1058 = vmul.f32 %v1057, %v125
  %v1059 = vadd.f32 %v1058, 1e-05
  %v1060 = vrsqrt.pop %v1059
  %v1061 = vmul.f32 %v1053, %v1060
  %v1062 = vlaneseq
  %v1063 = vshrl.u32 %v1062, 7
  %v1064 = vsub.s32 0, %v1063
  %v1065 = vrot.slane %v49, %v1064
  %v1066 = vmul.f32 %v1061, %v1065
  %v1067 = vlaneseq
  %v1068 = vshrl.u32 %v1067, 7
  %v1069 = vsub.s32 1, %v1068
  %v1070 = vrot.slane %v49, %v1069
  %v1071 = vadd.f32 %v1066, %v1070
  %v1072 = vpack.c.bf16 %v1071, %v1071
  %v1073 = vld [vmem:[%s9] sm:$0xf]
  %v1074 = vld [vmem:[%s9 + $0x4] sm:$0xf]
  %v1075 = vld [vmem:[%s9 + $0x8] sm:$0xf]
  %v1076 = vld [vmem:[%s9 + $0xc] sm:$0xf]
  %v1077 = vlaneseq
  %v1078 = vshrl.u32 %v1077, 7
  %v1079 = vsub.s32 2, %v1078
  %v1080 = vrot.slane %v49, %v1079
  %v1085 = vunpack.c.l.b16 %v1073
  %v1086 = vunpack.c.l.b16 %v1074
  %v1087 = vunpack.c.l.b16 %v1075
  %v1088 = vunpack.c.l.b16 %v1076
  %v1089 = vpack.c.b16 %v1086, %v1085
  %v1090 = vpack.c.b16 %v1088, %v1087
  %v1094 = vsel %vm118, %v1072, 0
  %1096 = vmatprep.subr.bf16.mxu0 0
  %1097 = vmatpush1.bf16.msra.mxu0 %v1089
  %1098 = vmatprep.subr.bf16.mxu0 0
  %1099 = vmatpush1.bf16.msra.mxu0 %v1090
  %1100 = vmatprep.subr.bf16.mxu0 0
  %1101 = vmatpush1.bf16.msra.mxu0 0
  %1102 = vmatprep.subr.bf16.mxu0 0
  %1103 = vmatpush1.bf16.msra.mxu0 0
  %1104 = vmatprep.subr.bf16.mxu0 0
  %1105 = vmatpush1.bf16.msra.mxu0 0
  %1106 = vmatprep.subr.bf16.mxu0 0
  %1107 = vmatpush1.bf16.msra.mxu0 0
  %1108 = vmatprep.subr.bf16.mxu0 0
  %1109 = vmatpush1.bf16.msra.mxu0 0
  %1110 = vmatprep.subr.bf16.mxu0 0
  %1111 = vmatpush1.bf16.msra.mxu0 0
  %1112 = vmatprep.subr.bf16.mxu0 0
  %1113 = vmatpush1.bf16.msra.mxu0 0
  %1114 = vmatprep.subr.bf16.mxu0 0
  %1115 = vmatpush1.bf16.msra.mxu0 0
  %1116 = vmatprep.subr.bf16.mxu0 0
  %1117 = vmatpush1.bf16.msra.mxu0 0
  %1118 = vmatprep.subr.bf16.mxu0 0
  %1119 = vmatpush1.bf16.msra.mxu0 0
  %1120 = vmatprep.subr.bf16.mxu0 0
  %1121 = vmatpush1.bf16.msra.mxu0 0
  %1122 = vmatprep.subr.bf16.mxu0 0
  %1123 = vmatpush1.bf16.msra.mxu0 0
  %1124 = vmatprep.subr.bf16.mxu0 0
  %1125 = vmatpush1.bf16.msra.mxu0 0
  %1126 = vmatprep.subr.bf16.mxu0 0
  %1127 = vmatpush1.bf16.msra.mxu0 0
  %1128 = vmatprep.mubr.bf16.mxu0 0
  %1129 = vmatmul.mubr.bf16.gmra.mrb[0].mxu0 %v1094
  %v1130 = vpop.f32.mrb[0].mxu0
  %v1131 = vadd.f32 %v1080, %v1130
  %v1132 = vpop.f32.mrb[0].mxu0
  %v1133 = vpop.f32.mrb[0].mxu0
  %v1134 = vpop.f32.mrb[0].mxu0
  %1135 = vdwg.mxu0
  %v1136 = vld [vmem:[%s2] sm:$0xff]
  %v1137 = vld [vmem:[%s2 + $0x8] sm:$0xff]
  %v1138 = vld [vmem:[%s2 + $0x10] sm:$0xff]
  %v1139 = vld [vmem:[%s2 + $0x18] sm:$0xff]
  %v1140 = vld [vmem:[%s2 + $0x20] sm:$0xff]
  %v1141 = vld [vmem:[%s2 + $0x28] sm:$0xff]
  %v1142 = vld [vmem:[%s2 + $0x30] sm:$0xff]
  %v1143 = vld [vmem:[%s2 + $0x38] sm:$0xff]
  %v1144 = vpack.c.bf16 %v1138, %v1136
  %v1145 = vpack.c.bf16 %v1139, %v1137
  %v1146 = vpack.c.bf16 %v1142, %v1140
  %v1147 = vpack.c.bf16 %v1143, %v1141
  %v1148 = vld [vmem:[%s10] sm:$0xf]
  %v1149 = vld [vmem:[%s10 + $0x4] sm:$0xf]
  %v1150 = vld [vmem:[%s10 + $0x8] sm:$0xf]
  %v1151 = vld [vmem:[%s10 + $0xc] sm:$0xf]
  %v1152 = vld [vmem:[%s10 + $0x10] sm:$0xf]
  %v1153 = vld [vmem:[%s10 + $0x14] sm:$0xf]
  %v1154 = vld [vmem:[%s10 + $0x18] sm:$0xf]
  %v1155 = vld [vmem:[%s10 + $0x1c] sm:$0xf]
  %v1156 = vld [vmem:[%s10 + $0x20] sm:$0xf]
  %v1157 = vld [vmem:[%s10 + $0x24] sm:$0xf]
  %v1158 = vld [vmem:[%s10 + $0x28] sm:$0xf]
  %v1159 = vld [vmem:[%s10 + $0x2c] sm:$0xf]
  %v1160 = vld [vmem:[%s10 + $0x30] sm:$0xf]
  %v1161 = vld [vmem:[%s10 + $0x34] sm:$0xf]
  %v1162 = vld [vmem:[%s10 + $0x38] sm:$0xf]
  %v1163 = vld [vmem:[%s10 + $0x3c] sm:$0xf]
  %v1164 = vld [vmem:[%s10 + $0x40] sm:$0xf]
  %v1165 = vld [vmem:[%s10 + $0x44] sm:$0xf]
  %v1166 = vld [vmem:[%s10 + $0x48] sm:$0xf]
  %v1167 = vld [vmem:[%s10 + $0x4c] sm:$0xf]
  %v1168 = vld [vmem:[%s10 + $0x50] sm:$0xf]
  %v1169 = vld [vmem:[%s10 + $0x54] sm:$0xf]
  %v1170 = vld [vmem:[%s10 + $0x58] sm:$0xf]
  %v1171 = vld [vmem:[%s10 + $0x5c] sm:$0xf]
  %v1196 = vunpack.c.l.b16 %v1148
  %v1197 = vunpack.c.l.b16 %v1149
  %v1198 = vunpack.c.l.b16 %v1150
  %v1199 = vunpack.c.l.b16 %v1151
  %v1200 = vunpack.c.l.b16 %v1152
  %v1201 = vunpack.c.l.b16 %v1153
  %v1202 = vunpack.c.l.b16 %v1154
  %v1203 = vunpack.c.l.b16 %v1155
  %v1204 = vunpack.c.l.b16 %v1156
  %v1205 = vunpack.c.l.b16 %v1157
  %v1206 = vunpack.c.l.b16 %v1158
  %v1207 = vunpack.c.l.b16 %v1159
  %v1208 = vunpack.c.l.b16 %v1160
  %v1209 = vunpack.c.l.b16 %v1161
  %v1210 = vunpack.c.l.b16 %v1162
  %v1211 = vunpack.c.l.b16 %v1163
  %v1212 = vunpack.c.l.b16 %v1164
  %v1213 = vunpack.c.l.b16 %v1165
  %v1214 = vunpack.c.l.b16 %v1166
  %v1215 = vunpack.c.l.b16 %v1167
  %v1216 = vunpack.c.l.b16 %v1168
  %v1217 = vunpack.c.l.b16 %v1169
  %v1218 = vunpack.c.l.b16 %v1170
  %v1219 = vunpack.c.l.b16 %v1171
  %v1220 = vpack.c.b16 %v1197, %v1196
  %v1221 = vpack.c.b16 %v1199, %v1198
  %v1222 = vpack.c.b16 %v1201, %v1200
  %v1223 = vpack.c.b16 %v1203, %v1202
  %v1224 = vpack.c.b16 %v1205, %v1204
  %v1225 = vpack.c.b16 %v1207, %v1206
  %v1226 = vpack.c.b16 %v1209, %v1208
  %v1227 = vpack.c.b16 %v1211, %v1210
  %v1228 = vpack.c.b16 %v1213, %v1212
  %v1229 = vpack.c.b16 %v1215, %v1214
  %v1230 = vpack.c.b16 %v1217, %v1216
  %v1231 = vpack.c.b16 %v1219, %v1218
  %v1245 = vsel %vm916, %v1145, 0
  %v1248 = vsel %vm916, %v1147, 0
  %1250 = vmatprep.subr.bf16.mxu0 0
  %1251 = vmatpush1.bf16.msra.mxu0 %v1220
  %1252 = vmatprep.subr.bf16.mxu0 0
  %1253 = vmatpush1.bf16.msra.mxu0 %v1221
  %1254 = vmatprep.subr.bf16.mxu0 0
  %1255 = vmatpush1.bf16.msra.mxu0 %v1222
  %1256 = vmatprep.subr.bf16.mxu0 0
  %1257 = vmatpush1.bf16.msra.mxu0 %v1223
  %1258 = vmatprep.subr.bf16.mxu0 0
  %1259 = vmatpush1.bf16.msra.mxu0 %v1224
  %1260 = vmatprep.subr.bf16.mxu0 0
  %1261 = vmatpush1.bf16.msra.mxu0 %v1225
  %1262 = vmatprep.subr.bf16.mxu0 0
  %1263 = vmatpush1.bf16.msra.mxu0 %v1226
  %1264 = vmatprep.subr.bf16.mxu0 0
  %1265 = vmatpush1.bf16.msra.mxu0 %v1227
  %1266 = vmatprep.subr.bf16.mxu0 0
  %1267 = vmatpush1.bf16.msra.mxu0 %v1228
  %1268 = vmatprep.subr.bf16.mxu0 0
  %1269 = vmatpush1.bf16.msra.mxu0 %v1229
  %1270 = vmatprep.subr.bf16.mxu0 0
  %1271 = vmatpush1.bf16.msra.mxu0 %v1230
  %1272 = vmatprep.subr.bf16.mxu0 0
  %1273 = vmatpush1.bf16.msra.mxu0 %v1231
  %1274 = vmatprep.subr.bf16.mxu0 0
  %1275 = vmatpush1.bf16.msra.mxu0 0
  %1276 = vmatprep.subr.bf16.mxu0 0
  %1277 = vmatpush1.bf16.msra.mxu0 0
  %1278 = vmatprep.subr.bf16.mxu0 0
  %1279 = vmatpush1.bf16.msra.mxu0 0
  %1280 = vmatprep.subr.bf16.mxu0 0
  %1281 = vmatpush1.bf16.msra.mxu0 0
  %1282 = vmatprep.mubr.bf16.mxu0 %v1245
  %1283 = vmatmul.mubr.bf16.gmra.mrb[0].mxu0 %v1144
  %v1284 = vpop.f32.mrb[0].mxu0
  %v1285 = vadd.f32 0.0, %v1284
  %v1286 = vpop.f32.mrb[0].mxu0
  %v1287 = vpop.f32.mrb[0].mxu0
  %v1288 = vadd.f32 0.0, %v1287
  %v1289 = vpop.f32.mrb[0].mxu0
  %1290 = vmatprep.mubr.bf16.mxu0 %v1248
  %1291 = vmatmul.mubr.bf16.gmra.mrb[0].mxu0 %v1146
  %v1292 = vpop.f32.mrb[0].mxu0
  %v1293 = vadd.f32 0.0, %v1292
  %v1294 = vpop.f32.mrb[0].mxu0
  %v1295 = vpop.f32.mrb[0].mxu0
  %v1296 = vadd.f32 0.0, %v1295
  %v1297 = vpop.f32.mrb[0].mxu0
  %1298 = vdwg.mxu0
  %v1299 = vld [vmem:[%s3] sm:$0xff]
  %v1300 = vld [vmem:[%s3 + $0x8] sm:$0xff]
  %v1301 = vld [vmem:[%s3 + $0x10] sm:$0x1]
  %v1303 = vrot.slane %v1299, 4
  %v1305 = vadd.f32 %v49, %v1303
  %vm1306 = vcmask 258052
  %1307 = vst.msk [vmem:[#allocation2 - $0x4] sm:$0x10] %vm1306, %v1305
  %v1308 = vlaneseq
  %v1309 = vshrl.u32 %v1308, 7
  %v1310 = vsub.s32 3, %v1309
  %v1311 = vrot.slane %v49, %v1310
  %v1312 = vadd.f32 %v1285, %v1311
  %v1313 = vadd.f32 %v1288, %v1311
  %vm1316 = vcmask 1046528
  %v1317 = vrot.slane %v1299, 1
  %v1318 = vrot.slane %v1300, 1
  %v1319 = vsel %vm1316, %v1317, %v1318
  %v1320 = vrot.slane %v1301, 1
  %v1321 = vsel %vm1316, %v1318, %v1320
  %v1324 = vadd.f32 %v1312, %v1319
  %v1325 = vadd.f32 %v1313, %v1321
  %1326 = vst.msk [vmem:[#allocation2 + $0x1] sm:$0xff] %vm118, %v1324
  %1327 = vst.msk [vmem:[#allocation2 + $0x9] sm:$0xff] %vm118, %v1325
  %1328 = vst.msk [vmem:[#allocation2 + $0xd] sm:$0x10] %vm1306, %v1305
  %v1329 = vadd.f32 %v1293, %v1311
  %v1330 = vadd.f32 %v1296, %v1311
  %v1331 = vadd.f32 %v1329, %v1319
  %v1332 = vadd.f32 %v1330, %v1321
  %1333 = vst.msk [vmem:[#allocation2 + $0x12] sm:$0xff] %vm118, %v1331
  %1334 = vst.msk [vmem:[#allocation2 + $0x1a] sm:$0xff] %vm118, %v1332
  %v1335 = vld [vmem:[#allocation2] sm:$0xff]
  %v1336 = vld [vmem:[#allocation2 + $0x8] sm:$0xff]
  %v1337 = vld [vmem:[#allocation2 + $0x10] sm:$0xff]
  %v1338 = vld [vmem:[#allocation2 + $0x18] sm:$0xff]
  %v1339 = vld [vmem:[#allocation2 + $0x20] sm:$0x3]
  %v1340 = vsel %vm118, %v1335, 0.0
  %1341 = vadd.xlane.f32.xlu0 %v1340
  %v1342 = vpop.xlane.xlu0 %1341
  %v1343 = vsel %vm118, %v1336, 0.0
  %1344 = vadd.xlane.f32.xlu0 %v1343
  %v1345 = vpop.xlane.xlu0 %1344
  %v1346 = vsel %vm118, %v1337, 0.0
  %1347 = vadd.xlane.f32.xlu0 %v1346
  %v1348 = vpop.xlane.xlu0 %1347
  %v1349 = vsel %vm118, %v1338, 0.0
  %1350 = vadd.xlane.f32.xlu0 %v1349
  %v1351 = vpop.xlane.xlu0 %1350
  %v1352 = vsel %vm1048, %v1339, 0.0
  %1353 = vadd.xlane.f32.xlu0 %v1352
  %v1354 = vpop.xlane.xlu0 %1353
  %v1355 = vmul.f32 %v1342, %v125
  %v1356 = vmul.f32 %v1345, %v125
  %v1357 = vmul.f32 %v1348, %v125
  %v1358 = vmul.f32 %v1351, %v125
  %v1359 = vmul.f32 %v1354, %v125
  %v1360 = vsub.f32 %v1335, %v1355
  %v1361 = vsub.f32 %v1336, %v1356
  %v1362 = vsub.f32 %v1337, %v1357
  %v1363 = vsub.f32 %v1338, %v1358
  %v1364 = vsub.f32 %v1339, %v1359
  %v1365 = vmul.f32 %v1360, %v1360
  %v1366 = vmul.f32 %v1361, %v1361
  %v1367 = vmul.f32 %v1362, %v1362
  %v1368 = vmul.f32 %v1363, %v1363
  %v1369 = vmul.f32 %v1364, %v1364
  %v1370 = vsel %vm118, %v1365, 0.0
  %1371 = vadd.xlane.f32.xlu0 %v1370
  %v1372 = vpop.xlane.xlu0 %1371
  %v1373 = vsel %vm118, %v1366, 0.0
  %1374 = vadd.xlane.f32.xlu0 %v1373
  %v1375 = vpop.xlane.xlu0 %1374
  %v1376 = vsel %vm118, %v1367, 0.0
  %1377 = vadd.xlane.f32.xlu0 %v1376
  %v1378 = vpop.xlane.xlu0 %1377
  %v1379 = vsel %vm118, %v1368, 0.0
  %1380 = vadd.xlane.f32.xlu0 %v1379
  %v1381 = vpop.xlane.xlu0 %1380
  %v1382 = vsel %vm1048, %v1369, 0.0
  %1383 = vadd.xlane.f32.xlu0 %v1382
  %v1384 = vpop.xlane.xlu0 %1383
  %v1385 = vmul.f32 %v1372, %v125
  %v1386 = vmul.f32 %v1375, %v125
  %v1387 = vmul.f32 %v1378, %v125
  %v1388 = vmul.f32 %v1381, %v125
  %v1389 = vmul.f32 %v1384, %v125
  %v1390 = vadd.f32 %v1385, 1e-05
  %v1391 = vadd.f32 %v1386, 1e-05
  %v1392 = vadd.f32 %v1387, 1e-05
  %v1393 = vadd.f32 %v1388, 1e-05
  %v1394 = vadd.f32 %v1389, 1e-05
  %v1395 = vrsqrt.pop %v1390
  %v1396 = vrsqrt.pop %v1391
  %v1397 = vrsqrt.pop %v1392
  %v1398 = vrsqrt.pop %v1393
  %v1399 = vrsqrt.pop %v1394
  %v1400 = vmul.f32 %v1360, %v1395
  %v1401 = vmul.f32 %v1361, %v1396
  %v1402 = vmul.f32 %v1362, %v1397
  %v1403 = vmul.f32 %v1363, %v1398
  %v1404 = vmul.f32 %v1364, %v1399
  %v1405 = vlaneseq
  %v1406 = vshrl.u32 %v1405, 7
  %v1407 = vsub.s32 5, %v1406
  %v1408 = vrot.slane %v49, %v1407
  %v1409 = vmul.f32 %v1400, %v1408
  %v1410 = vmul.f32 %v1401, %v1408
  %v1411 = vmul.f32 %v1402, %v1408
  %v1412 = vmul.f32 %v1403, %v1408
  %v1413 = vmul.f32 %v1404, %v1408
  %v1414 = vlaneseq
  %v1415 = vshrl.u32 %v1414, 7
  %v1416 = vsub.s32 6, %v1415
  %v1417 = vrot.slane %v49, %v1416
  %v1418 = vadd.f32 %v1409, %v1417
  %v1419 = vadd.f32 %v1410, %v1417
  %v1420 = vadd.f32 %v1411, %v1417
  %v1421 = vadd.f32 %v1412, %v1417
  %v1422 = vadd.f32 %v1413, %v1417
  %s1423 = scalar_lea.vmem %s5, 16
  %v1424 = vld [vmem:[%s1423] sm:$0xf]
  %v1425 = vld [vmem:[%s1423 + $0x4] sm:$0xf]
  %v1426 = vld [vmem:[%s1423 + $0x8] sm:$0xf]
  %v1427 = vld [vmem:[%s1423 + $0xc] sm:$0xf]
  %s1428 = scalar_lea.vmem %s6, 16
  %v1429 = vld [vmem:[%s1428] sm:$0xf]
  %v1430 = vld [vmem:[%s1428 + $0x4] sm:$0xf]
  %v1431 = vld [vmem:[%s1428 + $0x8] sm:$0xf]
  %v1432 = vld [vmem:[%s1428 + $0xc] sm:$0xf]
  %s1433 = scalar_lea.vmem %s7, 16
  %v1434 = vld [vmem:[%s1433] sm:$0xf]
  %v1435 = vld [vmem:[%s1433 + $0x4] sm:$0xf]
  %v1436 = vld [vmem:[%s1433 + $0x8] sm:$0xf]
  %v1437 = vld [vmem:[%s1433 + $0xc] sm:$0xf]
  %s1438 = scalar_lea.vmem %s8, 32
  %v1439 = vld [vmem:[%s1438] sm:$0xf]
  %v1440 = vld [vmem:[%s1438 + $0x4] sm:$0xf]
  %v1441 = vld [vmem:[%s1438 + $0x8] sm:$0xf]
  %v1442 = vld [vmem:[%s1438 + $0xc] sm:$0xf]
  %v1443 = vld [vmem:[%s1438 + $0x10] sm:$0xf]
  %v1444 = vld [vmem:[%s1438 + $0x14] sm:$0xf]
  %v1445 = vld [vmem:[%s1438 + $0x18] sm:$0xf]
  %v1446 = vld [vmem:[%s1438 + $0x1c] sm:$0xf]
  %v1447 = vsel %vm118, %v1418, 0.0
  %1448 = vadd.xlane.f32.xlu0 %v1447
  %v1449 = vpop.xlane.xlu0 %1448
  %v1450 = vsel %vm118, %v1419, 0.0
  %1451 = vadd.xlane.f32.xlu0 %v1450
  %v1452 = vpop.xlane.xlu0 %1451
  %v1453 = vsel %vm118, %v1420, 0.0
  %1454 = vadd.xlane.f32.xlu0 %v1453
  %v1455 = vpop.xlane.xlu0 %1454
  %v1456 = vsel %vm118, %v1421, 0.0
  %1457 = vadd.xlane.f32.xlu0 %v1456
  %v1458 = vpop.xlane.xlu0 %1457
  %v1459 = vsel %vm1048, %v1422, 0.0
  %1460 = vadd.xlane.f32.xlu0 %v1459
  %v1461 = vpop.xlane.xlu0 %1460
  %v1462 = vmul.f32 %v1449, %v125
  %v1463 = vmul.f32 %v1452, %v125
  %v1464 = vmul.f32 %v1455, %v125
  %v1465 = vmul.f32 %v1458, %v125
  %v1466 = vmul.f32 %v1461, %v125
  %v1467 = vsub.f32 %v1418, %v1462
  %v1468 = vsub.f32 %v1419, %v1463
  %v1469 = vsub.f32 %v1420, %v1464
  %v1470 = vsub.f32 %v1421, %v1465
  %v1471 = vsub.f32 %v1422, %v1466
  %v1472 = vmul.f32 %v1467, %v1467
  %v1473 = vmul.f32 %v1468, %v1468
  %v1474 = vmul.f32 %v1469, %v1469
  %v1475 = vmul.f32 %v1470, %v1470
  %v1476 = vmul.f32 %v1471, %v1471
  %v1477 = vsel %vm118, %v1472, 0.0
  %1478 = vadd.xlane.f32.xlu0 %v1477
  %v1479 = vpop.xlane.xlu0 %1478
  %v1480 = vsel %vm118, %v1473, 0.0
  %1481 = vadd.xlane.f32.xlu0 %v1480
  %v1482 = vpop.xlane.xlu0 %1481
  %v1483 = vsel %vm118, %v1474, 0.0
  %1484 = vadd.xlane.f32.xlu0 %v1483
  %v1485 = vpop.xlane.xlu0 %1484
  %v1486 = vsel %vm118, %v1475, 0.0
  %1487 = vadd.xlane.f32.xlu0 %v1486
  %v1488 = vpop.xlane.xlu0 %1487
  %v1489 = vsel %vm1048, %v1476, 0.0
  %1490 = vadd.xlane.f32.xlu0 %v1489
  %v1491 = vpop.xlane.xlu0 %1490
  %v1492 = vmul.f32 %v1479, %v125
  %v1493 = vmul.f32 %v1482, %v125
  %v1494 = vmul.f32 %v1485, %v125
  %v1495 = vmul.f32 %v1488, %v125
  %v1496 = vmul.f32 %v1491, %v125
  %v1497 = vadd.f32 %v1492, 1e-05
  %v1498 = vadd.f32 %v1493, 1e-05
  %v1499 = vadd.f32 %v1494, 1e-05
  %v1500 = vadd.f32 %v1495, 1e-05
  %v1501 = vadd.f32 %v1496, 1e-05
  %v1502 = vrsqrt.pop %v1497
  %v1503 = vrsqrt.pop %v1498
  %v1504 = vrsqrt.pop %v1499
  %v1505 = vrsqrt.pop %v1500
  %v1506 = vrsqrt.pop %v1501
  %v1507 = vmul.f32 %v1467, %v1502
  %v1508 = vmul.f32 %v1468, %v1503
  %v1509 = vmul.f32 %v1469, %v1504
  %v1510 = vmul.f32 %v1470, %v1505
  %v1511 = vmul.f32 %v1471, %v1506
  %v1512 = vlaneseq
  %v1513 = vshrl.u32 %v1512, 7
  %v1514 = vsub.s32 7, %v1513
  %v1515 = vrot.slane %v49, %v1514
  %v1516 = vmul.f32 %v1507, %v1515
  %v1517 = vmul.f32 %v1508, %v1515
  %v1518 = vmul.f32 %v1509, %v1515
  %v1519 = vmul.f32 %v1510, %v1515
  %v1520 = vmul.f32 %v1511, %v1515
  %v1521 = vlaneseq
  %v1522 = vshrl.u32 %v1521, 7
  %v1523 = vsub.s32 0, %v1522
  %v1524 = vrot.slane %v50, %v1523
  %v1525 = vadd.f32 %v1516, %v1524
  %v1526 = vadd.f32 %v1517, %v1524
  %v1527 = vadd.f32 %v1518, %v1524
  %v1528 = vadd.f32 %v1519, %v1524
  %v1529 = vadd.f32 %v1520, %v1524
  %v1530 = vpack.c.bf16 %v1526, %v1525
  %v1531 = vpack.c.bf16 %v1528, %v1527
  %v1532 = vpack.c.bf16 %v1529, %v1529
  %v1533 = vlaneseq
  %v1534 = vshrl.u32 %v1533, 7
  %v1535 = vsub.s32 1, %v1534
  %v1536 = vrot.slane %v50, %v1535
  %v1541 = vunpack.c.l.b16 %v1424
  %v1542 = vunpack.c.l.b16 %v1425
  %v1543 = vunpack.c.l.b16 %v1426
  %v1544 = vunpack.c.l.b16 %v1427
  %v1545 = vpack.c.b16 %v1542, %v1541
  %v1546 = vpack.c.b16 %v1544, %v1543
  %v1550 = vsel %vm118, %v1530, 0
  %v1553 = vsel %vm118, %v1531, 0
  %v1556 = vsel %vm118, %v1532, 0
  %1558 = vmatprep.subr.bf16.mxu0 0
  %1559 = vmatpush1.bf16.msra.mxu0 %v1545
  %1560 = vmatprep.subr.bf16.mxu0 0
  %1561 = vmatpush1.bf16.msra.mxu0 %v1546
  %1562 = vmatprep.subr.bf16.mxu0 0
  %1563 = vmatpush1.bf16.msra.mxu0 0
  %1564 = vmatprep.subr.bf16.mxu0 0
  %1565 = vmatpush1.bf16.msra.mxu0 0
  %1566 = vmatprep.subr.bf16.mxu0 0
  %1567 = vmatpush1.bf16.msra.mxu0 0
  %1568 = vmatprep.subr.bf16.mxu0 0
  %1569 = vmatpush1.bf16.msra.mxu0 0
  %1570 = vmatprep.subr.bf16.mxu0 0
  %1571 = vmatpush1.bf16.msra.mxu0 0
  %1572 = vmatprep.subr.bf16.mxu0 0
  %1573 = vmatpush1.bf16.msra.mxu0 0
  %1574 = vmatprep.subr.bf16.mxu0 0
  %1575 = vmatpush1.bf16.msra.mxu0 0
  %1576 = vmatprep.subr.bf16.mxu0 0
  %1577 = vmatpush1.bf16.msra.mxu0 0
  %1578 = vmatprep.subr.bf16.mxu0 0
  %1579 = vmatpush1.bf16.msra.mxu0 0
  %1580 = vmatprep.subr.bf16.mxu0 0
  %1581 = vmatpush1.bf16.msra.mxu0 0
  %1582 = vmatprep.subr.bf16.mxu0 0
  %1583 = vmatpush1.bf16.msra.mxu0 0
  %1584 = vmatprep.subr.bf16.mxu0 0
  %1585 = vmatpush1.bf16.msra.mxu0 0
  %1586 = vmatprep.subr.bf16.mxu0 0
  %1587 = vmatpush1.bf16.msra.mxu0 0
  %1588 = vmatprep.subr.bf16.mxu0 0
  %1589 = vmatpush1.bf16.msra.mxu0 0
  %1590 = vmatprep.mubr.bf16.mxu0 0
  %1591 = vmatmul.mubr.bf16.gmra.mrb[0].mxu0 %v1550
  %v1592 = vpop.f32.mrb[0].mxu0
  %v1593 = vadd.f32 %v1536, %v1592
  %v1594 = vpop.f32.mrb[0].mxu0
  %v1595 = vpop.f32.mrb[0].mxu0
  %v1596 = vadd.f32 %v1536, %v1595
  %v1597 = vpop.f32.mrb[0].mxu0
  %1598 = vmatprep.mubr.bf16.mxu0 0
  %1599 = vmatmul.mubr.bf16.gmra.mrb[0].mxu0 %v1553
  %v1600 = vpop.f32.mrb[0].mxu0
  %v1601 = vadd.f32 %v1536, %v1600
  %v1602 = vpop.f32.mrb[0].mxu0
  %v1603 = vpop.f32.mrb[0].mxu0
  %v1604 = vadd.f32 %v1536, %v1603
  %v1605 = vpop.f32.mrb[0].mxu0
  %1606 = vmatprep.mubr.bf16.mxu0 0
  %1607 = vmatmul.mubr.bf16.gmra.mrb[0].mxu0 %v1556
  %v1608 = vpop.f32.mrb[0].mxu0
  %v1609 = vadd.f32 %v1536, %v1608
  %v1610 = vpop.f32.mrb[0].mxu0
  %v1611 = vpop.f32.mrb[0].mxu0
  %v1612 = vpop.f32.mrb[0].mxu0
  %1613 = vdwg.mxu0
  %v1619 = vcombine.high %v1593, %v1593
  %v1621 = vunpack.c.l.s4 1966171168
  %v1622 = vunpack.c.0.s8 %v1621
  %v1623 = vlaneseq
  %v1624 = vshrl.u32 %v1623, 7
  %v1625 = vsub.s32 %v1622, %v1624
  %v1626 = vrot.slane %v1593, %v1625
  %v1628 = vunpack.c.l.s4 1966171168
  %v1629 = vunpack.c.0.s8 %v1628
  %v1630 = vlaneseq
  %v1631 = vshrl.u32 %v1630, 7
  %v1632 = vsub.s32 %v1629, %v1631
  %v1633 = vrot.slane %v1619, %v1632
  %v1634 = vcombine.high %v1626, %v1626
  %v1635 = vcombine.high %v1633, %v1633
  %v1637 = vunpack.c.l.s4 1966171168
  %v1638 = vunpack.c.0.s8 %v1637
  %v1639 = vlaneseq
  %v1640 = vshrl.u32 %v1639, 7
  %v1641 = vsub.s32 %v1638, %v1640
  %v1642 = vrot.slane %v1626, %v1641
  %v1644 = vunpack.c.l.s4 1966171168
  %v1645 = vunpack.c.0.s8 %v1644
  %v1646 = vlaneseq
  %v1647 = vshrl.u32 %v1646, 7
  %v1648 = vsub.s32 %v1645, %v1647
  %v1649 = vrot.slane %v1633, %v1648
  %v1651 = vunpack.c.l.s4 1966171168
  %v1652 = vunpack.c.0.s8 %v1651
  %v1653 = vlaneseq
  %v1654 = vshrl.u32 %v1653, 7
  %v1655 = vsub.s32 %v1652, %v1654
  %v1656 = vrot.slane %v1634, %v1655
  %v1658 = vunpack.c.l.s4 1966171168
  %v1659 = vunpack.c.0.s8 %v1658
  %v1660 = vlaneseq
  %v1661 = vshrl.u32 %v1660, 7
  %v1662 = vsub.s32 %v1659, %v1661
  %v1663 = vrot.slane %v1635, %v1662
  %v1664 = vcombine.high %v1642, %v1642
  %v1665 = vcombine.high %v1649, %v1649
  %v1666 = vcombine.high %v1656, %v1656
  %v1667 = vcombine.high %v1663, %v1663
  %v1668 = vcombine.high %v1596, %v1596
  %v1670 = vunpack.c.l.s4 1966171168
  %v1671 = vunpack.c.0.s8 %v1670
  %v1672 = vlaneseq
  %v1673 = vshrl.u32 %v1672, 7
  %v1674 = vsub.s32 %v1671, %v1673
  %v1675 = vrot.slane %v1596, %v1674
  %v1677 = vunpack.c.l.s4 1966171168
  %v1678 = vunpack.c.0.s8 %v1677
  %v1679 = vlaneseq
  %v1680 = vshrl.u32 %v1679, 7
  %v1681 = vsub.s32 %v1678, %v1680
  %v1682 = vrot.slane %v1668, %v1681
  %v1683 = vcombine.high %v1675, %v1675
  %v1684 = vcombine.high %v1682, %v1682
  %v1686 = vunpack.c.l.s4 1966171168
  %v1687 = vunpack.c.0.s8 %v1686
  %v1688 = vlaneseq
  %v1689 = vshrl.u32 %v1688, 7
  %v1690 = vsub.s32 %v1687, %v1689
  %v1691 = vrot.slane %v1675, %v1690
  %v1693 = vunpack.c.l.s4 1966171168
  %v1694 = vunpack.c.0.s8 %v1693
  %v1695 = vlaneseq
  %v1696 = vshrl.u32 %v1695, 7
  %v1697 = vsub.s32 %v1694, %v1696
  %v1698 = vrot.slane %v1682, %v1697
  %v1700 = vunpack.c.l.s4 1966171168
  %v1701 = vunpack.c.0.s8 %v1700
  %v1702 = vlaneseq
  %v1703 = vshrl.u32 %v1702, 7
  %v1704 = vsub.s32 %v1701, %v1703
  %v1705 = vrot.slane %v1683, %v1704
  %v1707 = vunpack.c.l.s4 1966171168
  %v1708 = vunpack.c.0.s8 %v1707
  %v1709 = vlaneseq
  %v1710 = vshrl.u32 %v1709, 7
  %v1711 = vsub.s32 %v1708, %v1710
  %v1712 = vrot.slane %v1684, %v1711
  %v1713 = vcombine.high %v1691, %v1691
  %v1714 = vcombine.high %v1698, %v1698
  %v1715 = vcombine.high %v1705, %v1705
  %v1716 = vcombine.high %v1712, %v1712
  %v1717 = vcombine.high %v1601, %v1601
  %v1719 = vunpack.c.l.s4 1966171168
  %v1720 = vunpack.c.0.s8 %v1719
  %v1721 = vlaneseq
  %v1722 = vshrl.u32 %v1721, 7
  %v1723 = vsub.s32 %v1720, %v1722
  %v1724 = vrot.slane %v1601, %v1723
  %v1726 = vunpack.c.l.s4 1966171168
  %v1727 = vunpack.c.0.s8 %v1726
  %v1728 = vlaneseq
  %v1729 = vshrl.u32 %v1728, 7
  %v1730 = vsub.s32 %v1727, %v1729
  %v1731 = vrot.slane %v1717, %v1730
  %v1732 = vcombine.high %v1724, %v1724
  %v1733 = vcombine.high %v1731, %v1731
  %v1735 = vunpack.c.l.s4 1966171168
  %v1736 = vunpack.c.0.s8 %v1735
  %v1737 = vlaneseq
  %v1738 = vshrl.u32 %v1737, 7
  %v1739 = vsub.s32 %v1736, %v1738
  %v1740 = vrot.slane %v1724, %v1739
  %v1742 = vunpack.c.l.s4 1966171168
  %v1743 = vunpack.c.0.s8 %v1742
  %v1744 = vlaneseq
  %v1745 = vshrl.u32 %v1744, 7
  %v1746 = vsub.s32 %v1743, %v1745
  %v1747 = vrot.slane %v1731, %v1746
  %v1749 = vunpack.c.l.s4 1966171168
  %v1750 = vunpack.c.0.s8 %v1749
  %v1751 = vlaneseq
  %v1752 = vshrl.u32 %v1751, 7
  %v1753 = vsub.s32 %v1750, %v1752
  %v1754 = vrot.slane %v1732, %v1753
  %v1756 = vunpack.c.l.s4 1966171168
  %v1757 = vunpack.c.0.s8 %v1756
  %v1758 = vlaneseq
  %v1759 = vshrl.u32 %v1758, 7
  %v1760 = vsub.s32 %v1757, %v1759
  %v1761 = vrot.slane %v1733, %v1760
  %v1762 = vcombine.high %v1740, %v1740
  %v1763 = vcombine.high %v1747, %v1747
  %v1764 = vcombine.high %v1754, %v1754
  %v1765 = vcombine.high %v1761, %v1761
  %v1766 = vcombine.high %v1604, %v1604
  %v1768 = vunpack.c.l.s4 1966171168
  %v1769 = vunpack.c.0.s8 %v1768
  %v1770 = vlaneseq
  %v1771 = vshrl.u32 %v1770, 7
  %v1772 = vsub.s32 %v1769, %v1771
  %v1773 = vrot.slane %v1604, %v1772
  %v1775 = vunpack.c.l.s4 1966171168
  %v1776 = vunpack.c.0.s8 %v1775
  %v1777 = vlaneseq
  %v1778 = vshrl.u32 %v1777, 7
  %v1779 = vsub.s32 %v1776, %v1778
  %v1780 = vrot.slane %v1766, %v1779
  %v1781 = vcombine.high %v1773, %v1773
  %v1782 = vcombine.high %v1780, %v1780
  %v1784 = vunpack.c.l.s4 1966171168
  %v1785 = vunpack.c.0.s8 %v1784
  %v1786 = vlaneseq
  %v1787 = vshrl.u32 %v1786, 7
  %v1788 = vsub.s32 %v1785, %v1787
  %v1789 = vrot.slane %v1773, %v1788
  %v1791 = vunpack.c.l.s4 1966171168
  %v1792 = vunpack.c.0.s8 %v1791
  %v1793 = vlaneseq
  %v1794 = vshrl.u32 %v1793, 7
  %v1795 = vsub.s32 %v1792, %v1794
  %v1796 = vrot.slane %v1780, %v1795
  %v1798 = vunpack.c.l.s4 1966171168
  %v1799 = vunpack.c.0.s8 %v1798
  %v1800 = vlaneseq
  %v1801 = vshrl.u32 %v1800, 7
  %v1802 = vsub.s32 %v1799, %v1801
  %v1803 = vrot.slane %v1781, %v1802
  %v1805 = vunpack.c.l.s4 1966171168
  %v1806 = vunpack.c.0.s8 %v1805
  %v1807 = vlaneseq
  %v1808 = vshrl.u32 %v1807, 7
  %v1809 = vsub.s32 %v1806, %v1808
  %v1810 = vrot.slane %v1782, %v1809
  %v1811 = vcombine.high %v1789, %v1789
  %v1812 = vcombine.high %v1796, %v1796
  %v1813 = vcombine.high %v1803, %v1803
  %v1814 = vcombine.high %v1810, %v1810
  %v1816 = vunpack.c.l.s4 1966171168
  %v1817 = vunpack.c.0.s8 %v1816
  %v1818 = vlaneseq
  %v1819 = vshrl.u32 %v1818, 7
  %v1820 = vsub.s32 %v1817, %v1819
  %v1821 = vrot.slane %v1609, %v1820
  %v1822 = vcombine.high %v1821, %v1821
  %v1824 = vunpack.c.l.s4 1966171168
  %v1825 = vunpack.c.0.s8 %v1824
  %v1826 = vlaneseq
  %v1827 = vshrl.u32 %v1826, 7
  %v1828 = vsub.s32 %v1825, %v1827
  %v1829 = vrot.slane %v1821, %v1828
  %v1831 = vunpack.c.l.s4 1966171168
  %v1832 = vunpack.c.0.s8 %v1831
  %v1833 = vlaneseq
  %v1834 = vshrl.u32 %v1833, 7
  %v1835 = vsub.s32 %v1832, %v1834
  %v1836 = vrot.slane %v1822, %v1835
  %v1837 = vcombine.low %v1642, %v1656
  %v1838 = vcombine.low %v1664, %v1666
  %v1839 = vcombine.low %v1649, %v1663
  %v1840 = vcombine.low %v1665, %v1667
  %v1842 = vunpack.c.l.s4 1966171168
  %v1843 = vunpack.c.0.s8 %v1842
  %v1844 = vlaneseq
  %v1845 = vshrl.u32 %v1844, 7
  %v1846 = vsub.s32 %v1843, %v1845
  %v1847 = vrot.slane %v1837, %v1846
  %v1849 = vunpack.c.l.s4 1966171168
  %v1850 = vunpack.c.0.s8 %v1849
  %v1851 = vlaneseq
  %v1852 = vshrl.u32 %v1851, 7
  %v1853 = vsub.s32 %v1850, %v1852
  %v1854 = vrot.slane %v1838, %v1853
  %v1856 = vunpack.c.l.s4 1966171168
  %v1857 = vunpack.c.0.s8 %v1856
  %v1858 = vlaneseq
  %v1859 = vshrl.u32 %v1858, 7
  %v1860 = vsub.s32 %v1857, %v1859
  %v1861 = vrot.slane %v1839, %v1860
  %v1863 = vunpack.c.l.s4 1966171168
  %v1864 = vunpack.c.0.s8 %v1863
  %v1865 = vlaneseq
  %v1866 = vshrl.u32 %v1865, 7
  %v1867 = vsub.s32 %v1864, %v1866
  %v1868 = vrot.slane %v1840, %v1867
  %v1869 = vcombine.low %v1847, %v1854
  %v1870 = vcombine.low %v1861, %v1868
  %v1872 = vunpack.c.l.s4 1966171168
  %v1873 = vunpack.c.0.s8 %v1872
  %v1874 = vlaneseq
  %v1875 = vshrl.u32 %v1874, 7
  %v1876 = vsub.s32 %v1873, %v1875
  %v1877 = vrot.slane %v1869, %v1876
  %v1879 = vunpack.c.l.s4 1966171168
  %v1880 = vunpack.c.0.s8 %v1879
  %v1881 = vlaneseq
  %v1882 = vshrl.u32 %v1881, 7
  %v1883 = vsub.s32 %v1880, %v1882
  %v1884 = vrot.slane %v1870, %v1883
  %v1885 = vcombine.low %v1877, %v1884
  %v1886 = vcombine.low %v1691, %v1705
  %v1887 = vcombine.low %v1713, %v1715
  %v1888 = vcombine.low %v1698, %v1712
  %v1889 = vcombine.low %v1714, %v1716
  %v1891 = vunpack.c.l.s4 1966171168
  %v1892 = vunpack.c.0.s8 %v1891
  %v1893 = vlaneseq
  %v1894 = vshrl.u32 %v1893, 7
  %v1895 = vsub.s32 %v1892, %v1894
  %v1896 = vrot.slane %v1886, %v1895
  %v1898 = vunpack.c.l.s4 1966171168
  %v1899 = vunpack.c.0.s8 %v1898
  %v1900 = vlaneseq
  %v1901 = vshrl.u32 %v1900, 7
  %v1902 = vsub.s32 %v1899, %v1901
  %v1903 = vrot.slane %v1887, %v1902
  %v1905 = vunpack.c.l.s4 1966171168
  %v1906 = vunpack.c.0.s8 %v1905
  %v1907 = vlaneseq
  %v1908 = vshrl.u32 %v1907, 7
  %v1909 = vsub.s32 %v1906, %v1908
  %v1910 = vrot.slane %v1888, %v1909
  %v1912 = vunpack.c.l.s4 1966171168
  %v1913 = vunpack.c.0.s8 %v1912
  %v1914 = vlaneseq
  %v1915 = vshrl.u32 %v1914, 7
  %v1916 = vsub.s32 %v1913, %v1915
  %v1917 = vrot.slane %v1889, %v1916
  %v1918 = vcombine.low %v1896, %v1903
  %v1919 = vcombine.low %v1910, %v1917
  %v1921 = vunpack.c.l.s4 1966171168
  %v1922 = vunpack.c.0.s8 %v1921
  %v1923 = vlaneseq
  %v1924 = vshrl.u32 %v1923, 7
  %v1925 = vsub.s32 %v1922, %v1924
  %v1926 = vrot.slane %v1918, %v1925
  %v1928 = vunpack.c.l.s4 1966171168
  %v1929 = vunpack.c.0.s8 %v1928
  %v1930 = vlaneseq
  %v1931 = vshrl.u32 %v1930, 7
  %v1932 = vsub.s32 %v1929, %v1931
  %v1933 = vrot.slane %v1919, %v1932
  %v1934 = vcombine.low %v1926, %v1933
  %v1936 = vunpack.c.l.s4 1966171168
  %v1937 = vunpack.c.0.s8 %v1936
  %v1938 = vlaneseq
  %v1939 = vshrl.u32 %v1938, 7
  %v1940 = vsub.s32 %v1937, %v1939
  %v1941 = vrot.slane %v1740, %v1940
  %v1943 = vunpack.c.l.s4 1966171168
  %v1944 = vunpack.c.0.s8 %v1943
  %v1945 = vlaneseq
  %v1946 = vshrl.u32 %v1945, 7
  %v1947 = vsub.s32 %v1944, %v1946
  %v1948 = vrot.slane %v1941, %v1947
  %v1949 = vcombine.low %v1754, %v1762
  %v1950 = vcombine.low %v1764, %v1747
  %v1951 = vcombine.low %v1761, %v1763
  %v1952 = vcombine.low %v1765, %v1789
  %v1954 = vunpack.c.l.s4 1966171168
  %v1955 = vunpack.c.0.s8 %v1954
  %v1956 = vlaneseq
  %v1957 = vshrl.u32 %v1956, 7
  %v1958 = vsub.s32 %v1955, %v1957
  %v1959 = vrot.slane %v1949, %v1958
  %v1961 = vunpack.c.l.s4 1966171168
  %v1962 = vunpack.c.0.s8 %v1961
  %v1963 = vlaneseq
  %v1964 = vshrl.u32 %v1963, 7
  %v1965 = vsub.s32 %v1962, %v1964
  %v1966 = vrot.slane %v1950, %v1965
  %v1968 = vunpack.c.l.s4 1966171168
  %v1969 = vunpack.c.0.s8 %v1968
  %v1970 = vlaneseq
  %v1971 = vshrl.u32 %v1970, 7
  %v1972 = vsub.s32 %v1969, %v1971
  %v1973 = vrot.slane %v1951, %v1972
  %v1975 = vunpack.c.l.s4 1966171168
  %v1976 = vunpack.c.0.s8 %v1975
  %v1977 = vlaneseq
  %v1978 = vshrl.u32 %v1977, 7
  %v1979 = vsub.s32 %v1976, %v1978
  %v1980 = vrot.slane %v1952, %v1979
  %v1981 = vcombine.low %v1959, %v1966
  %v1982 = vcombine.low %v1973, %v1980
  %v1984 = vunpack.c.l.s4 1966171168
  %v1985 = vunpack.c.0.s8 %v1984
  %v1986 = vlaneseq
  %v1987 = vshrl.u32 %v1986, 7
  %v1988 = vsub.s32 %v1985, %v1987
  %v1989 = vrot.slane %v1981, %v1988
  %v1991 = vunpack.c.l.s4 1966171168
  %v1992 = vunpack.c.0.s8 %v1991
  %v1993 = vlaneseq
  %v1994 = vshrl.u32 %v1993, 7
  %v1995 = vsub.s32 %v1992, %v1994
  %v1996 = vrot.slane %v1982, %v1995
  %v1997 = vcombine.low %v1989, %v1996
  %v1998 = vcombine.low %v1803, %v1811
  %v1999 = vcombine.low %v1813, %v1796
  %v2000 = vcombine.low %v1810, %v1812
  %v2001 = vcombine.low %v1814, %v1829
  %v2003 = vunpack.c.l.s4 1966171168
  %v2004 = vunpack.c.0.s8 %v2003
  %v2005 = vlaneseq
  %v2006 = vshrl.u32 %v2005, 7
  %v2007 = vsub.s32 %v2004, %v2006
  %v2008 = vrot.slane %v1998, %v2007
  %v2010 = vunpack.c.l.s4 1966171168
  %v2011 = vunpack.c.0.s8 %v2010
  %v2012 = vlaneseq
  %v2013 = vshrl.u32 %v2012, 7
  %v2014 = vsub.s32 %v2011, %v2013
  %v2015 = vrot.slane %v1999, %v2014
  %v2017 = vunpack.c.l.s4 1966171168
  %v2018 = vunpack.c.0.s8 %v2017
  %v2019 = vlaneseq
  %v2020 = vshrl.u32 %v2019, 7
  %v2021 = vsub.s32 %v2018, %v2020
  %v2022 = vrot.slane %v2000, %v2021
  %v2024 = vunpack.c.l.s4 1966171168
  %v2025 = vunpack.c.0.s8 %v2024
  %v2026 = vlaneseq
  %v2027 = vshrl.u32 %v2026, 7
  %v2028 = vsub.s32 %v2025, %v2027
  %v2029 = vrot.slane %v2001, %v2028
  %v2030 = vcombine.low %v2008, %v2015
  %v2031 = vcombine.low %v2022, %v2029
  %v2033 = vunpack.c.l.s4 1966171168
  %v2034 = vunpack.c.0.s8 %v2033
  %v2035 = vlaneseq
  %v2036 = vshrl.u32 %v2035, 7
  %v2037 = vsub.s32 %v2034, %v2036
  %v2038 = vrot.slane %v2030, %v2037
  %v2040 = vunpack.c.l.s4 1966171168
  %v2041 = vunpack.c.0.s8 %v2040
  %v2042 = vlaneseq
  %v2043 = vshrl.u32 %v2042, 7
  %v2044 = vsub.s32 %v2041, %v2043
  %v2045 = vrot.slane %v2031, %v2044
  %v2046 = vcombine.low %v2038, %v2045
  %v2048 = vunpack.c.l.s4 1966171168
  %v2049 = vunpack.c.0.s8 %v2048
  %v2050 = vlaneseq
  %v2051 = vshrl.u32 %v2050, 7
  %v2052 = vsub.s32 %v2049, %v2051
  %v2053 = vrot.slane %v1836, %v2052
  %v2055 = vunpack.c.l.s4 1966171168
  %v2056 = vunpack.c.0.s8 %v2055
  %v2057 = vlaneseq
  %v2058 = vshrl.u32 %v2057, 7
  %v2059 = vsub.s32 %v2056, %v2058
  %v2060 = vrot.slane %v2053, %v2059
  %v2067 = vpack.c.bf16 %v1934, %v1885
  %v2068 = vpack.c.bf16 %v1948, %v1948
  %v2069 = vpack.c.bf16 %v2046, %v1997
  %v2070 = vpack.c.bf16 %v2060, %v2060
  %2073 = vrot.lane.b32.xlu0 %v2067, 96
  %v2074 = vpop.permute.xlu0 %2073
  %2075 = vrot.lane.b32.xlu0 %v2068, 96
  %v2076 = vpop.permute.xlu0 %2075
  %v2078 = vsel %vm224, %v2067, 0
  %v2081 = vsel %vm224, %v2068, 0
  %v2084 = vsel %vm224, %v2074, 0
  %v2087 = vsel %vm224, %v2076, 0
  %2089 = vmatprep.subr.bf16.mxu0 0
  %2090 = vmatpush1.bf16.xpose.msra.mxu0 %v2084
  %2091 = vmatprep.subr.bf16.mxu0 0
  %2092 = vmatpush1.bf16.xpose.msra.mxu0 %v2087
  %2093 = vmatprep.subr.bf16.mxu0 0
  %2094 = vmatpush1.bf16.xpose.msra.mxu0 0
  %2095 = vmatprep.subr.bf16.mxu0 0
  %2096 = vmatpush1.bf16.xpose.msra.mxu0 0
  %2097 = vmatprep.subr.bf16.mxu0 0
  %2098 = vmatpush1.bf16.xpose.msra.mxu0 0
  %2099 = vmatprep.subr.bf16.mxu0 0
  %2100 = vmatpush1.bf16.xpose.msra.mxu0 0
  %2101 = vmatprep.subr.bf16.mxu0 0
  %2102 = vmatpush1.bf16.xpose.msra.mxu0 0
  %2103 = vmatprep.subr.bf16.mxu0 0
  %2104 = vmatpush1.bf16.xpose.msra.mxu0 0
  %2105 = vmatprep.subr.bf16.mxu0 0
  %2106 = vmatpush1.bf16.xpose.msra.mxu0 0
  %2107 = vmatprep.subr.bf16.mxu0 0
  %2108 = vmatpush1.bf16.xpose.msra.mxu0 0
  %2109 = vmatprep.subr.bf16.mxu0 0
  %2110 = vmatpush1.bf16.xpose.msra.mxu0 0
  %2111 = vmatprep.subr.bf16.mxu0 0
  %2112 = vmatpush1.bf16.xpose.msra.mxu0 0
  %2113 = vmatprep.subr.bf16.mxu0 0
  %2114 = vmatpush1.bf16.xpose.msra.mxu0 0
  %2115 = vmatprep.subr.bf16.mxu0 0
  %2116 = vmatpush1.bf16.xpose.msra.mxu0 0
  %2117 = vmatprep.subr.bf16.mxu0 0
  %2118 = vmatpush1.bf16.xpose.msra.mxu0 0
  %2119 = vmatprep.subr.bf16.mxu0 0
  %2120 = vmatpush1.bf16.xpose.msra.mxu0 0
  %2121 = vmatprep.mubr.bf16.mxu0 0
  %2122 = vmatmul.mubr.bf16.gmra.mrb[0].mxu0 %v2078
  %v2123 = vpop.f32.mrb[0].mxu0
  %v2124 = vadd.f32 0.0, %v2123
  %v2125 = vpop.f32.mrb[0].mxu0
  %v2126 = vpop.f32.mrb[0].mxu0
  %v2127 = vadd.f32 0.0, %v2126
  %v2128 = vpop.f32.mrb[0].mxu0
  %2129 = vmatprep.mubr.bf16.mxu0 0
  %2130 = vmatmul.mubr.bf16.gmra.mrb[0].mxu0 %v2081
  %v2131 = vpop.f32.mrb[0].mxu0
  %v2132 = vadd.f32 0.0, %v2131
  %v2133 = vpop.f32.mrb[0].mxu0
  %v2134 = vpop.f32.mrb[0].mxu0
  %v2135 = vpop.f32.mrb[0].mxu0
  %2136 = vdwg.mxu0
  %2139 = vrot.lane.b32.xlu0 %v2069, 96
  %v2140 = vpop.permute.xlu0 %2139
  %2141 = vrot.lane.b32.xlu0 %v2070, 96
  %v2142 = vpop.permute.xlu0 %2141
  %v2144 = vsel %vm224, %v2069, 0
  %v2147 = vsel %vm224, %v2070, 0
  %v2150 = vsel %vm224, %v2140, 0
  %v2153 = vsel %vm224, %v2142, 0
  %2155 = vmatprep.subr.bf16.mxu0 0
  %2156 = vmatpush1.bf16.xpose.msra.mxu0 %v2150
  %2157 = vmatprep.subr.bf16.mxu0 0
  %2158 = vmatpush1.bf16.xpose.msra.mxu0 %v2153
  %2159 = vmatprep.subr.bf16.mxu0 0
  %2160 = vmatpush1.bf16.xpose.msra.mxu0 0
  %2161 = vmatprep.subr.bf16.mxu0 0
  %2162 = vmatpush1.bf16.xpose.msra.mxu0 0
  %2163 = vmatprep.subr.bf16.mxu0 0
  %2164 = vmatpush1.bf16.xpose.msra.mxu0 0
  %2165 = vmatprep.subr.bf16.mxu0 0
  %2166 = vmatpush1.bf16.xpose.msra.mxu0 0
  %2167 = vmatprep.subr.bf16.mxu0 0
  %2168 = vmatpush1.bf16.xpose.msra.mxu0 0
  %2169 = vmatprep.subr.bf16.mxu0 0
  %2170 = vmatpush1.bf16.xpose.msra.mxu0 0
  %2171 = vmatprep.subr.bf16.mxu0 0
  %2172 = vmatpush1.bf16.xpose.msra.mxu0 0
  %2173 = vmatprep.subr.bf16.mxu0 0
  %2174 = vmatpush1.bf16.xpose.msra.mxu0 0
  %2175 = vmatprep.subr.bf16.mxu0 0
  %2176 = vmatpush1.bf16.xpose.msra.mxu0 0
  %2177 = vmatprep.subr.bf16.mxu0 0
  %2178 = vmatpush1.bf16.xpose.msra.mxu0 0
  %2179 = vmatprep.subr.bf16.mxu0 0
  %2180 = vmatpush1.bf16.xpose.msra.mxu0 0
  %2181 = vmatprep.subr.bf16.mxu0 0
  %2182 = vmatpush1.bf16.xpose.msra.mxu0 0
  %2183 = vmatprep.subr.bf16.mxu0 0
  %2184 = vmatpush1.bf16.xpose.msra.mxu0 0
  %2185 = vmatprep.subr.bf16.mxu0 0
  %2186 = vmatpush1.bf16.xpose.msra.mxu0 0
  %2187 = vmatprep.mubr.bf16.mxu0 0
  %2188 = vmatmul.mubr.bf16.gmra.mrb[0].mxu0 %v2144
  %v2189 = vpop.f32.mrb[0].mxu0
  %v2190 = vadd.f32 0.0, %v2189
  %v2191 = vpop.f32.mrb[0].mxu0
  %v2192 = vpop.f32.mrb[0].mxu0
  %v2193 = vadd.f32 0.0, %v2192
  %v2194 = vpop.f32.mrb[0].mxu0
  %2195 = vmatprep.mubr.bf16.mxu0 0
  %2196 = vmatmul.mubr.bf16.gmra.mrb[0].mxu0 %v2147
  %v2197 = vpop.f32.mrb[0].mxu0
  %v2198 = vadd.f32 0.0, %v2197
  %v2199 = vpop.f32.mrb[0].mxu0
  %v2200 = vpop.f32.mrb[0].mxu0
  %v2201 = vpop.f32.mrb[0].mxu0
  %2202 = vdwg.mxu0
  %vm2203 = vcmask 138240
  %v2204 = vsel %vm2203, %v2124, -inf
  %2205 = vmax.xlane.f32.xlu0 %v2204
  %v2206 = vpop.xlane.xlu0 %2205
  %v2207 = vsel %vm2203, %v2127, -inf
  %2208 = vmax.xlane.f32.xlu0 %v2207
  %v2209 = vpop.xlane.xlu0 %2208
  %vm2210 = vcmask 131072
  %v2211 = vsel %vm2210, %v2132, -inf
  %2212 = vmax.xlane.f32.xlu0 %v2211
  %v2213 = vpop.xlane.xlu0 %2212
  %v2214 = vsel %vm2203, %v2190, -inf
  %2215 = vmax.xlane.f32.xlu0 %v2214
  %v2216 = vpop.xlane.xlu0 %2215
  %v2217 = vsel %vm2203, %v2193, -inf
  %2218 = vmax.xlane.f32.xlu0 %v2217
  %v2219 = vpop.xlane.xlu0 %2218
  %v2220 = vsel %vm2210, %v2198, -inf
  %2221 = vmax.xlane.f32.xlu0 %v2220
  %v2222 = vpop.xlane.xlu0 %2221
  %v2223 = vsub.f32 %v2124, %v2206
  %v2224 = vsub.f32 %v2127, %v2209
  %v2225 = vsub.f32 %v2132, %v2213
  %v2226 = vsub.f32 %v2190, %v2216
  %v2227 = vsub.f32 %v2193, %v2219
  %v2228 = vsub.f32 %v2198, %v2222
  %v2229 = vmul.f32 %v2223, 1.442695
  %v2230 = vpow.pop %v2229
  %v2231 = vmul.f32 %v2224, 1.442695
  %v2232 = vpow.pop %v2231
  %v2233 = vmul.f32 %v2225, 1.442695
  %v2234 = vpow.pop %v2233
  %v2235 = vmul.f32 %v2226, 1.442695
  %v2236 = vpow.pop %v2235
  %v2237 = vmul.f32 %v2227, 1.442695
  %v2238 = vpow.pop %v2237
  %v2239 = vmul.f32 %v2228, 1.442695
  %v2240 = vpow.pop %v2239
  %v2241 = vsel %vm2203, %v2230, 0.0
  %2242 = vadd.xlane.f32.xlu0 %v2241
  %v2243 = vpop.xlane.xlu0 %2242
  %v2244 = vsel %vm2203, %v2232, 0.0
  %2245 = vadd.xlane.f32.xlu0 %v2244
  %v2246 = vpop.xlane.xlu0 %2245
  %v2247 = vsel %vm2210, %v2234, 0.0
  %2248 = vadd.xlane.f32.xlu0 %v2247
  %v2249 = vpop.xlane.xlu0 %2248
  %v2250 = vsel %vm2203, %v2236, 0.0
  %2251 = vadd.xlane.f32.xlu0 %v2250
  %v2252 = vpop.xlane.xlu0 %2251
  %v2253 = vsel %vm2203, %v2238, 0.0
  %2254 = vadd.xlane.f32.xlu0 %v2253
  %v2255 = vpop.xlane.xlu0 %2254
  %v2256 = vsel %vm2210, %v2240, 0.0
  %2257 = vadd.xlane.f32.xlu0 %v2256
  %v2258 = vpop.xlane.xlu0 %2257
  %v2259 = vrcp.pop %v2243
  %v2260 = vrcp.pop %v2246
  %v2261 = vrcp.pop %v2249
  %v2262 = vrcp.pop %v2252
  %v2263 = vrcp.pop %v2255
  %v2264 = vrcp.pop %v2258
  %v2265 = vmul.f32 %v2230, %v2259
  %v2266 = vmul.f32 %v2232, %v2260
  %v2267 = vmul.f32 %v2234, %v2261
  %v2268 = vmul.f32 %v2236, %v2262
  %v2269 = vmul.f32 %v2238, %v2263
  %v2270 = vmul.f32 %v2240, %v2264
  %v2271 = vpack.c.bf16 %v2266, %v2265
  %v2272 = vpack.c.bf16 %v2267, %v2267
  %v2273 = vpack.c.bf16 %v2269, %v2268
  %v2274 = vpack.c.bf16 %v2270, %v2270
  %2275 = vrot.lane.b32.xlu0 %v2067, 64
  %v2276 = vpop.permute.xlu0 %2275
  %2277 = vrot.lane.b32.xlu0 %v2068, 64
  %v2278 = vpop.permute.xlu0 %2277
  %v2281 = vsel %vm2203, %v2271, 0
  %v2284 = vsel %vm2203, %v2272, 0
  %vm2286 = vcmask 1040384
  %v2287 = vsel 0, 4294967295, 65535
  %v2288 = vsel %vm2286, %v2287, 0
  %v2290 = vand.u32 %v2278, %v2288
  %2292 = vmatprep.subr.bf16.mxu0 0
  %2293 = vmatpush1.bf16.msra.mxu0 %v2276
  %2294 = vmatprep.subr.bf16.mxu0 0
  %2295 = vmatpush1.bf16.msra.mxu0 %v2290
  %2296 = vmatprep.subr.bf16.mxu0 0
  %2297 = vmatpush1.bf16.msra.mxu0 0
  %2298 = vmatprep.subr.bf16.mxu0 0
  %2299 = vmatpush1.bf16.msra.mxu0 0
  %2300 = vmatprep.subr.bf16.mxu0 0
  %2301 = vmatpush1.bf16.msra.mxu0 0
  %2302 = vmatprep.subr.bf16.mxu0 0
  %2303 = vmatpush1.bf16.msra.mxu0 0
  %2304 = vmatprep.subr.bf16.mxu0 0
  %2305 = vmatpush1.bf16.msra.mxu0 0
  %2306 = vmatprep.subr.bf16.mxu0 0
  %2307 = vmatpush1.bf16.msra.mxu0 0
  %2308 = vmatprep.subr.bf16.mxu0 0
  %2309 = vmatpush1.bf16.msra.mxu0 0
  %2310 = vmatprep.subr.bf16.mxu0 0
  %2311 = vmatpush1.bf16.msra.mxu0 0
  %2312 = vmatprep.subr.bf16.mxu0 0
  %2313 = vmatpush1.bf16.msra.mxu0 0
  %2314 = vmatprep.subr.bf16.mxu0 0
  %2315 = vmatpush1.bf16.msra.mxu0 0
  %2316 = vmatprep.subr.bf16.mxu0 0
  %2317 = vmatpush1.bf16.msra.mxu0 0
  %2318 = vmatprep.subr.bf16.mxu0 0
  %2319 = vmatpush1.bf16.msra.mxu0 0
  %2320 = vmatprep.subr.bf16.mxu0 0
  %2321 = vmatpush1.bf16.msra.mxu0 0
  %2322 = vmatprep.subr.bf16.mxu0 0
  %2323 = vmatpush1.bf16.msra.mxu0 0
  %2324 = vmatprep.mubr.bf16.mxu0 0
  %2325 = vmatmul.mubr.bf16.gmra.mrb[0].mxu0 %v2281
  %v2326 = vpop.f32.mrb[0].mxu0
  %v2327 = vadd.f32 0.0, %v2326
  %v2328 = vpop.f32.mrb[0].mxu0
  %v2329 = vpop.f32.mrb[0].mxu0
  %v2330 = vadd.f32 0.0, %v2329
  %v2331 = vpop.f32.mrb[0].mxu0
  %2332 = vmatprep.mubr.bf16.mxu0 0
  %2333 = vmatmul.mubr.bf16.gmra.mrb[0].mxu0 %v2284
  %v2334 = vpop.f32.mrb[0].mxu0
  %v2335 = vadd.f32 0.0, %v2334
  %v2336 = vpop.f32.mrb[0].mxu0
  %v2337 = vpop.f32.mrb[0].mxu0
  %v2338 = vpop.f32.mrb[0].mxu0
  %2339 = vdwg.mxu0
  %2340 = vrot.lane.b32.xlu0 %v2069, 64
  %v2341 = vpop.permute.xlu0 %2340
  %2342 = vrot.lane.b32.xlu0 %v2070, 64
  %v2343 = vpop.permute.xlu0 %2342
  %v2346 = vsel %vm2203, %v2273, 0
  %v2349 = vsel %vm2203, %v2274, 0
  %v2352 = vand.u32 %v2343, %v2288
  %2354 = vmatprep.subr.bf16.mxu0 0
  %2355 = vmatpush1.bf16.msra.mxu0 %v2341
  %2356 = vmatprep.subr.bf16.mxu0 0
  %2357 = vmatpush1.bf16.msra.mxu0 %v2352
  %2358 = vmatprep.subr.bf16.mxu0 0
  %2359 = vmatpush1.bf16.msra.mxu0 0
  %2360 = vmatprep.subr.bf16.mxu0 0
  %2361 = vmatpush1.bf16.msra.mxu0 0
  %2362 = vmatprep.subr.bf16.mxu0 0
  %2363 = vmatpush1.bf16.msra.mxu0 0
  %2364 = vmatprep.subr.bf16.mxu0 0
  %2365 = vmatpush1.bf16.msra.mxu0 0
  %2366 = vmatprep.subr.bf16.mxu0 0
  %2367 = vmatpush1.bf16.msra.mxu0 0
  %2368 = vmatprep.subr.bf16.mxu0 0
  %2369 = vmatpush1.bf16.msra.mxu0 0
  %2370 = vmatprep.subr.bf16.mxu0 0
  %2371 = vmatpush1.bf16.msra.mxu0 0
  %2372 = vmatprep.subr.bf16.mxu0 0
  %2373 = vmatpush1.bf16.msra.mxu0 0
  %2374 = vmatprep.subr.bf16.mxu0 0
  %2375 = vmatpush1.bf16.msra.mxu0 0
  %2376 = vmatprep.subr.bf16.mxu0 0
  %2377 = vmatpush1.bf16.msra.mxu0 0
  %2378 = vmatprep.subr.bf16.mxu0 0
  %2379 = vmatpush1.bf16.msra.mxu0 0
  %2380 = vmatprep.subr.bf16.mxu0 0
  %2381 = vmatpush1.bf16.msra.mxu0 0
  %2382 = vmatprep.subr.bf16.mxu0 0
  %2383 = vmatpush1.bf16.msra.mxu0 0
  %2384 = vmatprep.subr.bf16.mxu0 0
  %2385 = vmatpush1.bf16.msra.mxu0 0
  %2386 = vmatprep.mubr.bf16.mxu0 0
  %2387 = vmatmul.mubr.bf16.gmra.mrb[0].mxu0 %v2346
  %v2388 = vpop.f32.mrb[0].mxu0
  %v2389 = vadd.f32 0.0, %v2388
  %v2390 = vpop.f32.mrb[0].mxu0
  %v2391 = vpop.f32.mrb[0].mxu0
  %v2392 = vadd.f32 0.0, %v2391
  %v2393 = vpop.f32.mrb[0].mxu0
  %2394 = vmatprep.mubr.bf16.mxu0 0
  %2395 = vmatmul.mubr.bf16.gmra.mrb[0].mxu0 %v2349
  %v2396 = vpop.f32.mrb[0].mxu0
  %v2397 = vadd.f32 0.0, %v2396
  %v2398 = vpop.f32.mrb[0].mxu0
  %v2399 = vpop.f32.mrb[0].mxu0
  %v2400 = vpop.f32.mrb[0].mxu0
  %2401 = vdwg.mxu0
  %v2408 = vcombine.high %v2327, %v2327
  %v2410 = vunpack.c.l.s4 1966171168
  %v2411 = vunpack.c.0.s8 %v2410
  %v2412 = vlaneseq
  %v2413 = vshrl.u32 %v2412, 7
  %v2414 = vsub.s32 %v2411, %v2413
  %v2415 = vrot.slane %v2327, %v2414
  %v2417 = vunpack.c.l.s4 1966171168
  %v2418 = vunpack.c.0.s8 %v2417
  %v2419 = vlaneseq
  %v2420 = vshrl.u32 %v2419, 7
  %v2421 = vsub.s32 %v2418, %v2420
  %v2422 = vrot.slane %v2408, %v2421
  %v2423 = vcombine.high %v2415, %v2415
  %v2424 = vcombine.high %v2422, %v2422
  %v2426 = vunpack.c.l.s4 1966171168
  %v2427 = vunpack.c.0.s8 %v2426
  %v2428 = vlaneseq
  %v2429 = vshrl.u32 %v2428, 7
  %v2430 = vsub.s32 %v2427, %v2429
  %v2431 = vrot.slane %v2415, %v2430
  %v2433 = vunpack.c.l.s4 1966171168
  %v2434 = vunpack.c.0.s8 %v2433
  %v2435 = vlaneseq
  %v2436 = vshrl.u32 %v2435, 7
  %v2437 = vsub.s32 %v2434, %v2436
  %v2438 = vrot.slane %v2422, %v2437
  %v2440 = vunpack.c.l.s4 1966171168
  %v2441 = vunpack.c.0.s8 %v2440
  %v2442 = vlaneseq
  %v2443 = vshrl.u32 %v2442, 7
  %v2444 = vsub.s32 %v2441, %v2443
  %v2445 = vrot.slane %v2423, %v2444
  %v2447 = vunpack.c.l.s4 1966171168
  %v2448 = vunpack.c.0.s8 %v2447
  %v2449 = vlaneseq
  %v2450 = vshrl.u32 %v2449, 7
  %v2451 = vsub.s32 %v2448, %v2450
  %v2452 = vrot.slane %v2424, %v2451
  %v2453 = vcombine.high %v2431, %v2431
  %v2454 = vcombine.high %v2438, %v2438
  %v2455 = vcombine.high %v2445, %v2445
  %v2456 = vcombine.high %v2452, %v2452
  %v2457 = vcombine.high %v2330, %v2330
  %v2459 = vunpack.c.l.s4 1966171168
  %v2460 = vunpack.c.0.s8 %v2459
  %v2461 = vlaneseq
  %v2462 = vshrl.u32 %v2461, 7
  %v2463 = vsub.s32 %v2460, %v2462
  %v2464 = vrot.slane %v2330, %v2463
  %v2466 = vunpack.c.l.s4 1966171168
  %v2467 = vunpack.c.0.s8 %v2466
  %v2468 = vlaneseq
  %v2469 = vshrl.u32 %v2468, 7
  %v2470 = vsub.s32 %v2467, %v2469
  %v2471 = vrot.slane %v2457, %v2470
  %v2472 = vcombine.high %v2464, %v2464
  %v2473 = vcombine.high %v2471, %v2471
  %v2475 = vunpack.c.l.s4 1966171168
  %v2476 = vunpack.c.0.s8 %v2475
  %v2477 = vlaneseq
  %v2478 = vshrl.u32 %v2477, 7
  %v2479 = vsub.s32 %v2476, %v2478
  %v2480 = vrot.slane %v2464, %v2479
  %v2482 = vunpack.c.l.s4 1966171168
  %v2483 = vunpack.c.0.s8 %v2482
  %v2484 = vlaneseq
  %v2485 = vshrl.u32 %v2484, 7
  %v2486 = vsub.s32 %v2483, %v2485
  %v2487 = vrot.slane %v2471, %v2486
  %v2489 = vunpack.c.l.s4 1966171168
  %v2490 = vunpack.c.0.s8 %v2489
  %v2491 = vlaneseq
  %v2492 = vshrl.u32 %v2491, 7
  %v2493 = vsub.s32 %v2490, %v2492
  %v2494 = vrot.slane %v2472, %v2493
  %v2496 = vunpack.c.l.s4 1966171168
  %v2497 = vunpack.c.0.s8 %v2496
  %v2498 = vlaneseq
  %v2499 = vshrl.u32 %v2498, 7
  %v2500 = vsub.s32 %v2497, %v2499
  %v2501 = vrot.slane %v2473, %v2500
  %v2502 = vcombine.high %v2480, %v2480
  %v2503 = vcombine.high %v2487, %v2487
  %v2504 = vcombine.high %v2494, %v2494
  %v2505 = vcombine.high %v2501, %v2501
  %v2507 = vunpack.c.l.s4 1966171168
  %v2508 = vunpack.c.0.s8 %v2507
  %v2509 = vlaneseq
  %v2510 = vshrl.u32 %v2509, 7
  %v2511 = vsub.s32 %v2508, %v2510
  %v2512 = vrot.slane %v2335, %v2511
  %v2514 = vunpack.c.l.s4 1966171168
  %v2515 = vunpack.c.0.s8 %v2514
  %v2516 = vlaneseq
  %v2517 = vshrl.u32 %v2516, 7
  %v2518 = vsub.s32 %v2515, %v2517
  %v2519 = vrot.slane %v2512, %v2518
  %v2520 = vcombine.high %v2389, %v2389
  %v2522 = vunpack.c.l.s4 1966171168
  %v2523 = vunpack.c.0.s8 %v2522
  %v2524 = vlaneseq
  %v2525 = vshrl.u32 %v2524, 7
  %v2526 = vsub.s32 %v2523, %v2525
  %v2527 = vrot.slane %v2389, %v2526
  %v2529 = vunpack.c.l.s4 1966171168
  %v2530 = vunpack.c.0.s8 %v2529
  %v2531 = vlaneseq
  %v2532 = vshrl.u32 %v2531, 7
  %v2533 = vsub.s32 %v2530, %v2532
  %v2534 = vrot.slane %v2520, %v2533
  %v2535 = vcombine.high %v2527, %v2527
  %v2536 = vcombine.high %v2534, %v2534
  %v2538 = vunpack.c.l.s4 1966171168
  %v2539 = vunpack.c.0.s8 %v2538
  %v2540 = vlaneseq
  %v2541 = vshrl.u32 %v2540, 7
  %v2542 = vsub.s32 %v2539, %v2541
  %v2543 = vrot.slane %v2527, %v2542
  %v2545 = vunpack.c.l.s4 1966171168
  %v2546 = vunpack.c.0.s8 %v2545
  %v2547 = vlaneseq
  %v2548 = vshrl.u32 %v2547, 7
  %v2549 = vsub.s32 %v2546, %v2548
  %v2550 = vrot.slane %v2534, %v2549
  %v2552 = vunpack.c.l.s4 1966171168
  %v2553 = vunpack.c.0.s8 %v2552
  %v2554 = vlaneseq
  %v2555 = vshrl.u32 %v2554, 7
  %v2556 = vsub.s32 %v2553, %v2555
  %v2557 = vrot.slane %v2535, %v2556
  %v2559 = vunpack.c.l.s4 1966171168
  %v2560 = vunpack.c.0.s8 %v2559
  %v2561 = vlaneseq
  %v2562 = vshrl.u32 %v2561, 7
  %v2563 = vsub.s32 %v2560, %v2562
  %v2564 = vrot.slane %v2536, %v2563
  %v2565 = vcombine.high %v2543, %v2543
  %v2566 = vcombine.high %v2550, %v2550
  %v2567 = vcombine.high %v2557, %v2557
  %v2568 = vcombine.high %v2564, %v2564
  %v2569 = vcombine.high %v2392, %v2392
  %v2571 = vunpack.c.l.s4 1966171168
  %v2572 = vunpack.c.0.s8 %v2571
  %v2573 = vlaneseq
  %v2574 = vshrl.u32 %v2573, 7
  %v2575 = vsub.s32 %v2572, %v2574
  %v2576 = vrot.slane %v2392, %v2575
  %v2578 = vunpack.c.l.s4 1966171168
  %v2579 = vunpack.c.0.s8 %v2578
  %v2580 = vlaneseq
  %v2581 = vshrl.u32 %v2580, 7
  %v2582 = vsub.s32 %v2579, %v2581
  %v2583 = vrot.slane %v2569, %v2582
  %v2584 = vcombine.high %v2576, %v2576
  %v2585 = vcombine.high %v2583, %v2583
  %v2587 = vunpack.c.l.s4 1966171168
  %v2588 = vunpack.c.0.s8 %v2587
  %v2589 = vlaneseq
  %v2590 = vshrl.u32 %v2589, 7
  %v2591 = vsub.s32 %v2588, %v2590
  %v2592 = vrot.slane %v2576, %v2591
  %v2594 = vunpack.c.l.s4 1966171168
  %v2595 = vunpack.c.0.s8 %v2594
  %v2596 = vlaneseq
  %v2597 = vshrl.u32 %v2596, 7
  %v2598 = vsub.s32 %v2595, %v2597
  %v2599 = vrot.slane %v2583, %v2598
  %v2601 = vunpack.c.l.s4 1966171168
  %v2602 = vunpack.c.0.s8 %v2601
  %v2603 = vlaneseq
  %v2604 = vshrl.u32 %v2603, 7
  %v2605 = vsub.s32 %v2602, %v2604
  %v2606 = vrot.slane %v2584, %v2605
  %v2608 = vunpack.c.l.s4 1966171168
  %v2609 = vunpack.c.0.s8 %v2608
  %v2610 = vlaneseq
  %v2611 = vshrl.u32 %v2610, 7
  %v2612 = vsub.s32 %v2609, %v2611
  %v2613 = vrot.slane %v2585, %v2612
  %v2614 = vcombine.high %v2592, %v2592
  %v2615 = vcombine.high %v2599, %v2599
  %v2616 = vcombine.high %v2606, %v2606
  %v2617 = vcombine.high %v2613, %v2613
  %v2619 = vunpack.c.l.s4 1966171168
  %v2620 = vunpack.c.0.s8 %v2619
  %v2621 = vlaneseq
  %v2622 = vshrl.u32 %v2621, 7
  %v2623 = vsub.s32 %v2620, %v2622
  %v2624 = vrot.slane %v2397, %v2623
  %v2626 = vunpack.c.l.s4 1966171168
  %v2627 = vunpack.c.0.s8 %v2626
  %v2628 = vlaneseq
  %v2629 = vshrl.u32 %v2628, 7
  %v2630 = vsub.s32 %v2627, %v2629
  %v2631 = vrot.slane %v2624, %v2630
  %v2632 = vcombine.low %v2431, %v2445
  %v2633 = vcombine.low %v2453, %v2455
  %v2634 = vcombine.low %v2438, %v2452
  %v2635 = vcombine.low %v2454, %v2456
  %v2637 = vunpack.c.l.s4 1966171168
  %v2638 = vunpack.c.0.s8 %v2637
  %v2639 = vlaneseq
  %v2640 = vshrl.u32 %v2639, 7
  %v2641 = vsub.s32 %v2638, %v2640
  %v2642 = vrot.slane %v2632, %v2641
  %v2644 = vunpack.c.l.s4 1966171168
  %v2645 = vunpack.c.0.s8 %v2644
  %v2646 = vlaneseq
  %v2647 = vshrl.u32 %v2646, 7
  %v2648 = vsub.s32 %v2645, %v2647
  %v2649 = vrot.slane %v2633, %v2648
  %v2651 = vunpack.c.l.s4 1966171168
  %v2652 = vunpack.c.0.s8 %v2651
  %v2653 = vlaneseq
  %v2654 = vshrl.u32 %v2653, 7
  %v2655 = vsub.s32 %v2652, %v2654
  %v2656 = vrot.slane %v2634, %v2655
  %v2658 = vunpack.c.l.s4 1966171168
  %v2659 = vunpack.c.0.s8 %v2658
  %v2660 = vlaneseq
  %v2661 = vshrl.u32 %v2660, 7
  %v2662 = vsub.s32 %v2659, %v2661
  %v2663 = vrot.slane %v2635, %v2662
  %v2664 = vcombine.low %v2642, %v2649
  %v2665 = vcombine.low %v2656, %v2663
  %v2667 = vunpack.c.l.s4 1966171168
  %v2668 = vunpack.c.0.s8 %v2667
  %v2669 = vlaneseq
  %v2670 = vshrl.u32 %v2669, 7
  %v2671 = vsub.s32 %v2668, %v2670
  %v2672 = vrot.slane %v2664, %v2671
  %v2674 = vunpack.c.l.s4 1966171168
  %v2675 = vunpack.c.0.s8 %v2674
  %v2676 = vlaneseq
  %v2677 = vshrl.u32 %v2676, 7
  %v2678 = vsub.s32 %v2675, %v2677
  %v2679 = vrot.slane %v2665, %v2678
  %v2680 = vcombine.low %v2672, %v2679
  %v2681 = vcombine.low %v2480, %v2494
  %v2682 = vcombine.low %v2502, %v2504
  %v2683 = vcombine.low %v2487, %v2501
  %v2684 = vcombine.low %v2503, %v2505
  %v2686 = vunpack.c.l.s4 1966171168
  %v2687 = vunpack.c.0.s8 %v2686
  %v2688 = vlaneseq
  %v2689 = vshrl.u32 %v2688, 7
  %v2690 = vsub.s32 %v2687, %v2689
  %v2691 = vrot.slane %v2681, %v2690
  %v2693 = vunpack.c.l.s4 1966171168
  %v2694 = vunpack.c.0.s8 %v2693
  %v2695 = vlaneseq
  %v2696 = vshrl.u32 %v2695, 7
  %v2697 = vsub.s32 %v2694, %v2696
  %v2698 = vrot.slane %v2682, %v2697
  %v2700 = vunpack.c.l.s4 1966171168
  %v2701 = vunpack.c.0.s8 %v2700
  %v2702 = vlaneseq
  %v2703 = vshrl.u32 %v2702, 7
  %v2704 = vsub.s32 %v2701, %v2703
  %v2705 = vrot.slane %v2683, %v2704
  %v2707 = vunpack.c.l.s4 1966171168
  %v2708 = vunpack.c.0.s8 %v2707
  %v2709 = vlaneseq
  %v2710 = vshrl.u32 %v2709, 7
  %v2711 = vsub.s32 %v2708, %v2710
  %v2712 = vrot.slane %v2684, %v2711
  %v2713 = vcombine.low %v2691, %v2698
  %v2714 = vcombine.low %v2705, %v2712
  %v2716 = vunpack.c.l.s4 1966171168
  %v2717 = vunpack.c.0.s8 %v2716
  %v2718 = vlaneseq
  %v2719 = vshrl.u32 %v2718, 7
  %v2720 = vsub.s32 %v2717, %v2719
  %v2721 = vrot.slane %v2713, %v2720
  %v2723 = vunpack.c.l.s4 1966171168
  %v2724 = vunpack.c.0.s8 %v2723
  %v2725 = vlaneseq
  %v2726 = vshrl.u32 %v2725, 7
  %v2727 = vsub.s32 %v2724, %v2726
  %v2728 = vrot.slane %v2714, %v2727
  %v2729 = vcombine.low %v2721, %v2728
  %v2730 = vcombine.low %v2519, %v2543
  %v2731 = vcombine.low %v2557, %v2565
  %v2732 = vcombine.low %v2567, %v2550
  %v2733 = vcombine.low %v2564, %v2566
  %v2735 = vunpack.c.l.s4 1966171168
  %v2736 = vunpack.c.0.s8 %v2735
  %v2737 = vlaneseq
  %v2738 = vshrl.u32 %v2737, 7
  %v2739 = vsub.s32 %v2736, %v2738
  %v2740 = vrot.slane %v2730, %v2739
  %v2742 = vunpack.c.l.s4 1966171168
  %v2743 = vunpack.c.0.s8 %v2742
  %v2744 = vlaneseq
  %v2745 = vshrl.u32 %v2744, 7
  %v2746 = vsub.s32 %v2743, %v2745
  %v2747 = vrot.slane %v2731, %v2746
  %v2749 = vunpack.c.l.s4 1966171168
  %v2750 = vunpack.c.0.s8 %v2749
  %v2751 = vlaneseq
  %v2752 = vshrl.u32 %v2751, 7
  %v2753 = vsub.s32 %v2750, %v2752
  %v2754 = vrot.slane %v2732, %v2753
  %v2756 = vunpack.c.l.s4 1966171168
  %v2757 = vunpack.c.0.s8 %v2756
  %v2758 = vlaneseq
  %v2759 = vshrl.u32 %v2758, 7
  %v2760 = vsub.s32 %v2757, %v2759
  %v2761 = vrot.slane %v2733, %v2760
  %v2762 = vcombine.low %v2740, %v2747
  %v2763 = vcombine.low %v2754, %v2761
  %v2765 = vunpack.c.l.s4 1966171168
  %v2766 = vunpack.c.0.s8 %v2765
  %v2767 = vlaneseq
  %v2768 = vshrl.u32 %v2767, 7
  %v2769 = vsub.s32 %v2766, %v2768
  %v2770 = vrot.slane %v2762, %v2769
  %v2772 = vunpack.c.l.s4 1966171168
  %v2773 = vunpack.c.0.s8 %v2772
  %v2774 = vlaneseq
  %v2775 = vshrl.u32 %v2774, 7
  %v2776 = vsub.s32 %v2773, %v2775
  %v2777 = vrot.slane %v2763, %v2776
  %v2778 = vcombine.low %v2770, %v2777
  %v2779 = vcombine.low %v2568, %v2592
  %v2780 = vcombine.low %v2606, %v2614
  %v2781 = vcombine.low %v2616, %v2599
  %v2782 = vcombine.low %v2613, %v2615
  %v2784 = vunpack.c.l.s4 1966171168
  %v2785 = vunpack.c.0.s8 %v2784
  %v2786 = vlaneseq
  %v2787 = vshrl.u32 %v2786, 7
  %v2788 = vsub.s32 %v2785, %v2787
  %v2789 = vrot.slane %v2779, %v2788
  %v2791 = vunpack.c.l.s4 1966171168
  %v2792 = vunpack.c.0.s8 %v2791
  %v2793 = vlaneseq
  %v2794 = vshrl.u32 %v2793, 7
  %v2795 = vsub.s32 %v2792, %v2794
  %v2796 = vrot.slane %v2780, %v2795
  %v2798 = vunpack.c.l.s4 1966171168
  %v2799 = vunpack.c.0.s8 %v2798
  %v2800 = vlaneseq
  %v2801 = vshrl.u32 %v2800, 7
  %v2802 = vsub.s32 %v2799, %v2801
  %v2803 = vrot.slane %v2781, %v2802
  %v2805 = vunpack.c.l.s4 1966171168
  %v2806 = vunpack.c.0.s8 %v2805
  %v2807 = vlaneseq
  %v2808 = vshrl.u32 %v2807, 7
  %v2809 = vsub.s32 %v2806, %v2808
  %v2810 = vrot.slane %v2782, %v2809
  %v2811 = vcombine.low %v2789, %v2796
  %v2812 = vcombine.low %v2803, %v2810
  %v2814 = vunpack.c.l.s4 1966171168
  %v2815 = vunpack.c.0.s8 %v2814
  %v2816 = vlaneseq
  %v2817 = vshrl.u32 %v2816, 7
  %v2818 = vsub.s32 %v2815, %v2817
  %v2819 = vrot.slane %v2811, %v2818
  %v2821 = vunpack.c.l.s4 1966171168
  %v2822 = vunpack.c.0.s8 %v2821
  %v2823 = vlaneseq
  %v2824 = vshrl.u32 %v2823, 7
  %v2825 = vsub.s32 %v2822, %v2824
  %v2826 = vrot.slane %v2812, %v2825
  %v2827 = vcombine.low %v2819, %v2826
  %v2828 = vcombine.low %v2617, %v2631
  %v2830 = vunpack.c.l.s4 1966171168
  %v2831 = vunpack.c.0.s8 %v2830
  %v2832 = vlaneseq
  %v2833 = vshrl.u32 %v2832, 7
  %v2834 = vsub.s32 %v2831, %v2833
  %v2835 = vrot.slane %v2828, %v2834
  %v2837 = vunpack.c.l.s4 1966171168
  %v2838 = vunpack.c.0.s8 %v2837
  %v2839 = vlaneseq
  %v2840 = vshrl.u32 %v2839, 7
  %v2841 = vsub.s32 %v2838, %v2840
  %v2842 = vrot.slane %v2835, %v2841
  %v2848 = vpack.c.bf16 %v2729, %v2680
  %v2849 = vpack.c.bf16 %v2827, %v2778
  %v2850 = vpack.c.bf16 %v2842, %v2842
  %2851 = vrot.lane.b32.xlu0 %v2067, 112
  %v2852 = vpop.permute.xlu0 %2851
  %2853 = vrot.lane.b32.xlu0 %v2068, 112
  %v2854 = vpop.permute.xlu0 %2853
  %2855 = vrot.lane.b32.xlu0 %v2067, 80
  %v2856 = vpop.permute.xlu0 %2855
  %2857 = vrot.lane.b32.xlu0 %v2068, 80
  %v2858 = vpop.permute.xlu0 %2857
  %v2860 = vsel %vm224, %v2852, 0
  %v2863 = vsel %vm224, %v2854, 0
  %v2866 = vsel %vm224, %v2856, 0
  %v2869 = vsel %vm224, %v2858, 0
  %2871 = vmatprep.subr.bf16.mxu0 0
  %2872 = vmatpush1.bf16.xpose.msra.mxu0 %v2866
  %2873 = vmatprep.subr.bf16.mxu0 0
  %2874 = vmatpush1.bf16.xpose.msra.mxu0 %v2869
  %2875 = vmatprep.subr.bf16.mxu0 0
  %2876 = vmatpush1.bf16.xpose.msra.mxu0 0
  %2877 = vmatprep.subr.bf16.mxu0 0
  %2878 = vmatpush1.bf16.xpose.msra.mxu0 0
  %2879 = vmatprep.subr.bf16.mxu0 0
  %2880 = vmatpush1.bf16.xpose.msra.mxu0 0
  %2881 = vmatprep.subr.bf16.mxu0 0
  %2882 = vmatpush1.bf16.xpose.msra.mxu0 0
  %2883 = vmatprep.subr.bf16.mxu0 0
  %2884 = vmatpush1.bf16.xpose.msra.mxu0 0
  %2885 = vmatprep.subr.bf16.mxu0 0
  %2886 = vmatpush1.bf16.xpose.msra.mxu0 0
  %2887 = vmatprep.subr.bf16.mxu0 0
  %2888 = vmatpush1.bf16.xpose.msra.mxu0 0
  %2889 = vmatprep.subr.bf16.mxu0 0
  %2890 = vmatpush1.bf16.xpose.msra.mxu0 0
  %2891 = vmatprep.subr.bf16.mxu0 0
  %2892 = vmatpush1.bf16.xpose.msra.mxu0 0
  %2893 = vmatprep.subr.bf16.mxu0 0
  %2894 = vmatpush1.bf16.xpose.msra.mxu0 0
  %2895 = vmatprep.subr.bf16.mxu0 0
  %2896 = vmatpush1.bf16.xpose.msra.mxu0 0
  %2897 = vmatprep.subr.bf16.mxu0 0
  %2898 = vmatpush1.bf16.xpose.msra.mxu0 0
  %2899 = vmatprep.subr.bf16.mxu0 0
  %2900 = vmatpush1.bf16.xpose.msra.mxu0 0
  %2901 = vmatprep.subr.bf16.mxu0 0
  %2902 = vmatpush1.bf16.xpose.msra.mxu0 0
  %2903 = vmatprep.mubr.bf16.mxu0 0
  %2904 = vmatmul.mubr.bf16.gmra.mrb[0].mxu0 %v2860
  %v2905 = vpop.f32.mrb[0].mxu0
  %v2906 = vadd.f32 0.0, %v2905
  %v2907 = vpop.f32.mrb[0].mxu0
  %v2908 = vpop.f32.mrb[0].mxu0
  %v2909 = vadd.f32 0.0, %v2908
  %v2910 = vpop.f32.mrb[0].mxu0
  %2911 = vmatprep.mubr.bf16.mxu0 0
  %2912 = vmatmul.mubr.bf16.gmra.mrb[0].mxu0 %v2863
  %v2913 = vpop.f32.mrb[0].mxu0
  %v2914 = vadd.f32 0.0, %v2913
  %v2915 = vpop.f32.mrb[0].mxu0
  %v2916 = vpop.f32.mrb[0].mxu0
  %v2917 = vpop.f32.mrb[0].mxu0
  %2918 = vdwg.mxu0
  %2919 = vrot.lane.b32.xlu0 %v2069, 112
  %v2920 = vpop.permute.xlu0 %2919
  %2921 = vrot.lane.b32.xlu0 %v2070, 112
  %v2922 = vpop.permute.xlu0 %2921
  %2923 = vrot.lane.b32.xlu0 %v2069, 80
  %v2924 = vpop.permute.xlu0 %2923
  %2925 = vrot.lane.b32.xlu0 %v2070, 80
  %v2926 = vpop.permute.xlu0 %2925
  %v2928 = vsel %vm224, %v2920, 0
  %v2931 = vsel %vm224, %v2922, 0
  %v2934 = vsel %vm224, %v2924, 0
  %v2937 = vsel %vm224, %v2926, 0
  %2939 = vmatprep.subr.bf16.mxu0 0
  %2940 = vmatpush1.bf16.xpose.msra.mxu0 %v2934
  %2941 = vmatprep.subr.bf16.mxu0 0
  %2942 = vmatpush1.bf16.xpose.msra.mxu0 %v2937
  %2943 = vmatprep.subr.bf16.mxu0 0
  %2944 = vmatpush1.bf16.xpose.msra.mxu0 0
  %2945 = vmatprep.subr.bf16.mxu0 0
  %2946 = vmatpush1.bf16.xpose.msra.mxu0 0
  %2947 = vmatprep.subr.bf16.mxu0 0
  %2948 = vmatpush1.bf16.xpose.msra.mxu0 0
  %2949 = vmatprep.subr.bf16.mxu0 0
  %2950 = vmatpush1.bf16.xpose.msra.mxu0 0
  %2951 = vmatprep.subr.bf16.mxu0 0
  %2952 = vmatpush1.bf16.xpose.msra.mxu0 0
  %2953 = vmatprep.subr.bf16.mxu0 0
  %2954 = vmatpush1.bf16.xpose.msra.mxu0 0
  %2955 = vmatprep.subr.bf16.mxu0 0
  %2956 = vmatpush1.bf16.xpose.msra.mxu0 0
  %2957 = vmatprep.subr.bf16.mxu0 0
  %2958 = vmatpush1.bf16.xpose.msra.mxu0 0
  %2959 = vmatprep.subr.bf16.mxu0 0
  %2960 = vmatpush1.bf16.xpose.msra.mxu0 0
  %2961 = vmatprep.subr.bf16.mxu0 0
  %2962 = vmatpush1.bf16.xpose.msra.mxu0 0
  %2963 = vmatprep.subr.bf16.mxu0 0
  %2964 = vmatpush1.bf16.xpose.msra.mxu0 0
  %2965 = vmatprep.subr.bf16.mxu0 0
  %2966 = vmatpush1.bf16.xpose.msra.mxu0 0
  %2967 = vmatprep.subr.bf16.mxu0 0
  %2968 = vmatpush1.bf16.xpose.msra.mxu0 0
  %2969 = vmatprep.subr.bf16.mxu0 0
  %2970 = vmatpush1.bf16.xpose.msra.mxu0 0
  %2971 = vmatprep.mubr.bf16.mxu0 0
  %2972 = vmatmul.mubr.bf16.gmra.mrb[0].mxu0 %v2928
  %v2973 = vpop.f32.mrb[0].mxu0
  %v2974 = vadd.f32 0.0, %v2973
  %v2975 = vpop.f32.mrb[0].mxu0
  %v2976 = vpop.f32.mrb[0].mxu0
  %v2977 = vadd.f32 0.0, %v2976
  %v2978 = vpop.f32.mrb[0].mxu0
  %2979 = vmatprep.mubr.bf16.mxu0 0
  %2980 = vmatmul.mubr.bf16.gmra.mrb[0].mxu0 %v2931
  %v2981 = vpop.f32.mrb[0].mxu0
  %v2982 = vadd.f32 0.0, %v2981
  %v2983 = vpop.f32.mrb[0].mxu0
  %v2984 = vpop.f32.mrb[0].mxu0
  %v2985 = vpop.f32.mrb[0].mxu0
  %2986 = vdwg.mxu0
  %v2987 = vsel %vm2203, %v2906, -inf
  %2988 = vmax.xlane.f32.xlu0 %v2987
  %v2989 = vpop.xlane.xlu0 %2988
  %v2990 = vsel %vm2203, %v2909, -inf
  %2991 = vmax.xlane.f32.xlu0 %v2990
  %v2992 = vpop.xlane.xlu0 %2991
  %v2993 = vsel %vm2210, %v2914, -inf
  %2994 = vmax.xlane.f32.xlu0 %v2993
  %v2995 = vpop.xlane.xlu0 %2994
  %v2996 = vsel %vm2203, %v2974, -inf
  %2997 = vmax.xlane.f32.xlu0 %v2996
  %v2998 = vpop.xlane.xlu0 %2997
  %v2999 = vsel %vm2203, %v2977, -inf
  %3000 = vmax.xlane.f32.xlu0 %v2999
  %v3001 = vpop.xlane.xlu0 %3000
  %v3002 = vsel %vm2210, %v2982, -inf
  %3003 = vmax.xlane.f32.xlu0 %v3002
  %v3004 = vpop.xlane.xlu0 %3003
  %v3005 = vsub.f32 %v2906, %v2989
  %v3006 = vsub.f32 %v2909, %v2992
  %v3007 = vsub.f32 %v2914, %v2995
  %v3008 = vsub.f32 %v2974, %v2998
  %v3009 = vsub.f32 %v2977, %v3001
  %v3010 = vsub.f32 %v2982, %v3004
  %v3011 = vmul.f32 %v3005, 1.442695
  %v3012 = vpow.pop %v3011
  %v3013 = vmul.f32 %v3006, 1.442695
  %v3014 = vpow.pop %v3013
  %v3015 = vmul.f32 %v3007, 1.442695
  %v3016 = vpow.pop %v3015
  %v3017 = vmul.f32 %v3008, 1.442695
  %v3018 = vpow.pop %v3017
  %v3019 = vmul.f32 %v3009, 1.442695
  %v3020 = vpow.pop %v3019
  %v3021 = vmul.f32 %v3010, 1.442695
  %v3022 = vpow.pop %v3021
  %v3023 = vsel %vm2203, %v3012, 0.0
  %3024 = vadd.xlane.f32.xlu0 %v3023
  %v3025 = vpop.xlane.xlu0 %3024
  %v3026 = vsel %vm2203, %v3014, 0.0
  %3027 = vadd.xlane.f32.xlu0 %v3026
  %v3028 = vpop.xlane.xlu0 %3027
  %v3029 = vsel %vm2210, %v3016, 0.0
  %3030 = vadd.xlane.f32.xlu0 %v3029
  %v3031 = vpop.xlane.xlu0 %3030
  %v3032 = vsel %vm2203, %v3018, 0.0
  %3033 = vadd.xlane.f32.xlu0 %v3032
  %v3034 = vpop.xlane.xlu0 %3033
  %v3035 = vsel %vm2203, %v3020, 0.0
  %3036 = vadd.xlane.f32.xlu0 %v3035
  %v3037 = vpop.xlane.xlu0 %3036
  %v3038 = vsel %vm2210, %v3022, 0.0
  %3039 = vadd.xlane.f32.xlu0 %v3038
  %v3040 = vpop.xlane.xlu0 %3039
  %v3041 = vrcp.pop %v3025
  %v3042 = vrcp.pop %v3028
  %v3043 = vrcp.pop %v3031
  %v3044 = vrcp.pop %v3034
  %v3045 = vrcp.pop %v3037
  %v3046 = vrcp.pop %v3040
  %v3047 = vmul.f32 %v3012, %v3041
  %v3048 = vmul.f32 %v3014, %v3042
  %v3049 = vmul.f32 %v3016, %v3043
  %v3050 = vmul.f32 %v3018, %v3044
  %v3051 = vmul.f32 %v3020, %v3045
  %v3052 = vmul.f32 %v3022, %v3046
  %v3053 = vpack.c.bf16 %v3048, %v3047
  %v3054 = vpack.c.bf16 %v3049, %v3049
  %v3055 = vpack.c.bf16 %v3051, %v3050
  %v3056 = vpack.c.bf16 %v3052, %v3052
  %3057 = vrot.lane.b32.xlu0 %v2067, 48
  %v3058 = vpop.permute.xlu0 %3057
  %3059 = vrot.lane.b32.xlu0 %v2068, 48
  %v3060 = vpop.permute.xlu0 %3059
  %v3063 = vsel %vm2203, %v3053, 0
  %v3066 = vsel %vm2203, %v3054, 0
  %v3069 = vand.u32 %v3060, %v2288
  %3071 = vmatprep.subr.bf16.mxu0 0
  %3072 = vmatpush1.bf16.msra.mxu0 %v3058
  %3073 = vmatprep.subr.bf16.mxu0 0
  %3074 = vmatpush1.bf16.msra.mxu0 %v3069
  %3075 = vmatprep.subr.bf16.mxu0 0
  %3076 = vmatpush1.bf16.msra.mxu0 0
  %3077 = vmatprep.subr.bf16.mxu0 0
  %3078 = vmatpush1.bf16.msra.mxu0 0
  %3079 = vmatprep.subr.bf16.mxu0 0
  %3080 = vmatpush1.bf16.msra.mxu0 0
  %3081 = vmatprep.subr.bf16.mxu0 0
  %3082 = vmatpush1.bf16.msra.mxu0 0
  %3083 = vmatprep.subr.bf16.mxu0 0
  %3084 = vmatpush1.bf16.msra.mxu0 0
  %3085 = vmatprep.subr.bf16.mxu0 0
  %3086 = vmatpush1.bf16.msra.mxu0 0
  %3087 = vmatprep.subr.bf16.mxu0 0
  %3088 = vmatpush1.bf16.msra.mxu0 0
  %3089 = vmatprep.subr.bf16.mxu0 0
  %3090 = vmatpush1.bf16.msra.mxu0 0
  %3091 = vmatprep.subr.bf16.mxu0 0
  %3092 = vmatpush1.bf16.msra.mxu0 0
  %3093 = vmatprep.subr.bf16.mxu0 0
  %3094 = vmatpush1.bf16.msra.mxu0 0
  %3095 = vmatprep.subr.bf16.mxu0 0
  %3096 = vmatpush1.bf16.msra.mxu0 0
  %3097 = vmatprep.subr.bf16.mxu0 0
  %3098 = vmatpush1.bf16.msra.mxu0 0
  %3099 = vmatprep.subr.bf16.mxu0 0
  %3100 = vmatpush1.bf16.msra.mxu0 0
  %3101 = vmatprep.subr.bf16.mxu0 0
  %3102 = vmatpush1.bf16.msra.mxu0 0
  %3103 = vmatprep.mubr.bf16.mxu0 0
  %3104 = vmatmul.mubr.bf16.gmra.mrb[0].mxu0 %v3063
  %v3105 = vpop.f32.mrb[0].mxu0
  %v3106 = vadd.f32 0.0, %v3105
  %v3107 = vpop.f32.mrb[0].mxu0
  %v3108 = vpop.f32.mrb[0].mxu0
  %v3109 = vadd.f32 0.0, %v3108
  %v3110 = vpop.f32.mrb[0].mxu0
  %3111 = vmatprep.mubr.bf16.mxu0 0
  %3112 = vmatmul.mubr.bf16.gmra.mrb[0].mxu0 %v3066
  %v3113 = vpop.f32.mrb[0].mxu0
  %v3114 = vadd.f32 0.0, %v3113
  %v3115 = vpop.f32.mrb[0].mxu0
  %v3116 = vpop.f32.mrb[0].mxu0
  %v3117 = vpop.f32.mrb[0].mxu0
  %3118 = vdwg.mxu0
  %3119 = vrot.lane.b32.xlu0 %v2069, 48
  %v3120 = vpop.permute.xlu0 %3119
  %3121 = vrot.lane.b32.xlu0 %v2070, 48
  %v3122 = vpop.permute.xlu0 %3121
  %v3125 = vsel %vm2203, %v3055, 0
  %v3128 = vsel %vm2203, %v3056, 0
  %v3131 = vand.u32 %v3122, %v2288
  %3133 = vmatprep.subr.bf16.mxu0 0
  %3134 = vmatpush1.bf16.msra.mxu0 %v3120
  %3135 = vmatprep.subr.bf16.mxu0 0
  %3136 = vmatpush1.bf16.msra.mxu0 %v3131
  %3137 = vmatprep.subr.bf16.mxu0 0
  %3138 = vmatpush1.bf16.msra.mxu0 0
  %3139 = vmatprep.subr.bf16.mxu0 0
  %3140 = vmatpush1.bf16.msra.mxu0 0
  %3141 = vmatprep.subr.bf16.mxu0 0
  %3142 = vmatpush1.bf16.msra.mxu0 0
  %3143 = vmatprep.subr.bf16.mxu0 0
  %3144 = vmatpush1.bf16.msra.mxu0 0
  %3145 = vmatprep.subr.bf16.mxu0 0
  %3146 = vmatpush1.bf16.msra.mxu0 0
  %3147 = vmatprep.subr.bf16.mxu0 0
  %3148 = vmatpush1.bf16.msra.mxu0 0
  %3149 = vmatprep.subr.bf16.mxu0 0
  %3150 = vmatpush1.bf16.msra.mxu0 0
  %3151 = vmatprep.subr.bf16.mxu0 0
  %3152 = vmatpush1.bf16.msra.mxu0 0
  %3153 = vmatprep.subr.bf16.mxu0 0
  %3154 = vmatpush1.bf16.msra.mxu0 0
  %3155 = vmatprep.subr.bf16.mxu0 0
  %3156 = vmatpush1.bf16.msra.mxu0 0
  %3157 = vmatprep.subr.bf16.mxu0 0
  %3158 = vmatpush1.bf16.msra.mxu0 0
  %3159 = vmatprep.subr.bf16.mxu0 0
  %3160 = vmatpush1.bf16.msra.mxu0 0
  %3161 = vmatprep.subr.bf16.mxu0 0
  %3162 = vmatpush1.bf16.msra.mxu0 0
  %3163 = vmatprep.subr.bf16.mxu0 0
  %3164 = vmatpush1.bf16.msra.mxu0 0
  %3165 = vmatprep.mubr.bf16.mxu0 0
  %3166 = vmatmul.mubr.bf16.gmra.mrb[0].mxu0 %v3125
  %v3167 = vpop.f32.mrb[0].mxu0
  %v3168 = vadd.f32 0.0, %v3167
  %v3169 = vpop.f32.mrb[0].mxu0
  %v3170 = vpop.f32.mrb[0].mxu0
  %v3171 = vadd.f32 0.0, %v3170
  %v3172 = vpop.f32.mrb[0].mxu0
  %3173 = vmatprep.mubr.bf16.mxu0 0
  %3174 = vmatmul.mubr.bf16.gmra.mrb[0].mxu0 %v3128
  %v3175 = vpop.f32.mrb[0].mxu0
  %v3176 = vadd.f32 0.0, %v3175
  %v3177 = vpop.f32.mrb[0].mxu0
  %v3178 = vpop.f32.mrb[0].mxu0
  %v3179 = vpop.f32.mrb[0].mxu0
  %3180 = vdwg.mxu0
  %v3187 = vcombine.high %v3106, %v3106
  %v3189 = vunpack.c.l.s4 1966171168
  %v3190 = vunpack.c.0.s8 %v3189
  %v3191 = vlaneseq
  %v3192 = vshrl.u32 %v3191, 7
  %v3193 = vsub.s32 %v3190, %v3192
  %v3194 = vrot.slane %v3106, %v3193
  %v3196 = vunpack.c.l.s4 1966171168
  %v3197 = vunpack.c.0.s8 %v3196
  %v3198 = vlaneseq
  %v3199 = vshrl.u32 %v3198, 7
  %v3200 = vsub.s32 %v3197, %v3199
  %v3201 = vrot.slane %v3187, %v3200
  %v3202 = vcombine.high %v3194, %v3194
  %v3203 = vcombine.high %v3201, %v3201
  %v3205 = vunpack.c.l.s4 1966171168
  %v3206 = vunpack.c.0.s8 %v3205
  %v3207 = vlaneseq
  %v3208 = vshrl.u32 %v3207, 7
  %v3209 = vsub.s32 %v3206, %v3208
  %v3210 = vrot.slane %v3194, %v3209
  %v3212 = vunpack.c.l.s4 1966171168
  %v3213 = vunpack.c.0.s8 %v3212
  %v3214 = vlaneseq
  %v3215 = vshrl.u32 %v3214, 7
  %v3216 = vsub.s32 %v3213, %v3215
  %v3217 = vrot.slane %v3201, %v3216
  %v3219 = vunpack.c.l.s4 1966171168
  %v3220 = vunpack.c.0.s8 %v3219
  %v3221 = vlaneseq
  %v3222 = vshrl.u32 %v3221, 7
  %v3223 = vsub.s32 %v3220, %v3222
  %v3224 = vrot.slane %v3202, %v3223
  %v3226 = vunpack.c.l.s4 1966171168
  %v3227 = vunpack.c.0.s8 %v3226
  %v3228 = vlaneseq
  %v3229 = vshrl.u32 %v3228, 7
  %v3230 = vsub.s32 %v3227, %v3229
  %v3231 = vrot.slane %v3203, %v3230
  %v3232 = vcombine.high %v3210, %v3210
  %v3233 = vcombine.high %v3217, %v3217
  %v3234 = vcombine.high %v3224, %v3224
  %v3235 = vcombine.high %v3231, %v3231
  %v3236 = vcombine.high %v3109, %v3109
  %v3238 = vunpack.c.l.s4 1966171168
  %v3239 = vunpack.c.0.s8 %v3238
  %v3240 = vlaneseq
  %v3241 = vshrl.u32 %v3240, 7
  %v3242 = vsub.s32 %v3239, %v3241
  %v3243 = vrot.slane %v3109, %v3242
  %v3245 = vunpack.c.l.s4 1966171168
  %v3246 = vunpack.c.0.s8 %v3245
  %v3247 = vlaneseq
  %v3248 = vshrl.u32 %v3247, 7
  %v3249 = vsub.s32 %v3246, %v3248
  %v3250 = vrot.slane %v3236, %v3249
  %v3251 = vcombine.high %v3243, %v3243
  %v3252 = vcombine.high %v3250, %v3250
  %v3254 = vunpack.c.l.s4 1966171168
  %v3255 = vunpack.c.0.s8 %v3254
  %v3256 = vlaneseq
  %v3257 = vshrl.u32 %v3256, 7
  %v3258 = vsub.s32 %v3255, %v3257
  %v3259 = vrot.slane %v3243, %v3258
  %v3261 = vunpack.c.l.s4 1966171168
  %v3262 = vunpack.c.0.s8 %v3261
  %v3263 = vlaneseq
  %v3264 = vshrl.u32 %v3263, 7
  %v3265 = vsub.s32 %v3262, %v3264
  %v3266 = vrot.slane %v3250, %v3265
  %v3268 = vunpack.c.l.s4 1966171168
  %v3269 = vunpack.c.0.s8 %v3268
  %v3270 = vlaneseq
  %v3271 = vshrl.u32 %v3270, 7
  %v3272 = vsub.s32 %v3269, %v3271
  %v3273 = vrot.slane %v3251, %v3272
  %v3275 = vunpack.c.l.s4 1966171168
  %v3276 = vunpack.c.0.s8 %v3275
  %v3277 = vlaneseq
  %v3278 = vshrl.u32 %v3277, 7
  %v3279 = vsub.s32 %v3276, %v3278
  %v3280 = vrot.slane %v3252, %v3279
  %v3281 = vcombine.high %v3259, %v3259
  %v3282 = vcombine.high %v3266, %v3266
  %v3283 = vcombine.high %v3273, %v3273
  %v3284 = vcombine.high %v3280, %v3280
  %v3286 = vunpack.c.l.s4 1966171168
  %v3287 = vunpack.c.0.s8 %v3286
  %v3288 = vlaneseq
  %v3289 = vshrl.u32 %v3288, 7
  %v3290 = vsub.s32 %v3287, %v3289
  %v3291 = vrot.slane %v3114, %v3290
  %v3293 = vunpack.c.l.s4 1966171168
  %v3294 = vunpack.c.0.s8 %v3293
  %v3295 = vlaneseq
  %v3296 = vshrl.u32 %v3295, 7
  %v3297 = vsub.s32 %v3294, %v3296
  %v3298 = vrot.slane %v3291, %v3297
  %v3299 = vcombine.high %v3168, %v3168
  %v3301 = vunpack.c.l.s4 1966171168
  %v3302 = vunpack.c.0.s8 %v3301
  %v3303 = vlaneseq
  %v3304 = vshrl.u32 %v3303, 7
  %v3305 = vsub.s32 %v3302, %v3304
  %v3306 = vrot.slane %v3168, %v3305
  %v3308 = vunpack.c.l.s4 1966171168
  %v3309 = vunpack.c.0.s8 %v3308
  %v3310 = vlaneseq
  %v3311 = vshrl.u32 %v3310, 7
  %v3312 = vsub.s32 %v3309, %v3311
  %v3313 = vrot.slane %v3299, %v3312
  %v3314 = vcombine.high %v3306, %v3306
  %v3315 = vcombine.high %v3313, %v3313
  %v3317 = vunpack.c.l.s4 1966171168
  %v3318 = vunpack.c.0.s8 %v3317
  %v3319 = vlaneseq
  %v3320 = vshrl.u32 %v3319, 7
  %v3321 = vsub.s32 %v3318, %v3320
  %v3322 = vrot.slane %v3306, %v3321
  %v3324 = vunpack.c.l.s4 1966171168
  %v3325 = vunpack.c.0.s8 %v3324
  %v3326 = vlaneseq
  %v3327 = vshrl.u32 %v3326, 7
  %v3328 = vsub.s32 %v3325, %v3327
  %v3329 = vrot.slane %v3313, %v3328
  %v3331 = vunpack.c.l.s4 1966171168
  %v3332 = vunpack.c.0.s8 %v3331
  %v3333 = vlaneseq
  %v3334 = vshrl.u32 %v3333, 7
  %v3335 = vsub.s32 %v3332, %v3334
  %v3336 = vrot.slane %v3314, %v3335
  %v3338 = vunpack.c.l.s4 1966171168
  %v3339 = vunpack.c.0.s8 %v3338
  %v3340 = vlaneseq
  %v3341 = vshrl.u32 %v3340, 7
  %v3342 = vsub.s32 %v3339, %v3341
  %v3343 = vrot.slane %v3315, %v3342
  %v3344 = vcombine.high %v3322, %v3322
  %v3345 = vcombine.high %v3329, %v3329
  %v3346 = vcombine.high %v3336, %v3336
  %v3347 = vcombine.high %v3343, %v3343
  %v3348 = vcombine.high %v3171, %v3171
  %v3350 = vunpack.c.l.s4 1966171168
  %v3351 = vunpack.c.0.s8 %v3350
  %v3352 = vlaneseq
  %v3353 = vshrl.u32 %v3352, 7
  %v3354 = vsub.s32 %v3351, %v3353
  %v3355 = vrot.slane %v3171, %v3354
  %v3357 = vunpack.c.l.s4 1966171168
  %v3358 = vunpack.c.0.s8 %v3357
  %v3359 = vlaneseq
  %v3360 = vshrl.u32 %v3359, 7
  %v3361 = vsub.s32 %v3358, %v3360
  %v3362 = vrot.slane %v3348, %v3361
  %v3363 = vcombine.high %v3355, %v3355
  %v3364 = vcombine.high %v3362, %v3362
  %v3366 = vunpack.c.l.s4 1966171168
  %v3367 = vunpack.c.0.s8 %v3366
  %v3368 = vlaneseq
  %v3369 = vshrl.u32 %v3368, 7
  %v3370 = vsub.s32 %v3367, %v3369
  %v3371 = vrot.slane %v3355, %v3370
  %v3373 = vunpack.c.l.s4 1966171168
  %v3374 = vunpack.c.0.s8 %v3373
  %v3375 = vlaneseq
  %v3376 = vshrl.u32 %v3375, 7
  %v3377 = vsub.s32 %v3374, %v3376
  %v3378 = vrot.slane %v3362, %v3377
  %v3380 = vunpack.c.l.s4 1966171168
  %v3381 = vunpack.c.0.s8 %v3380
  %v3382 = vlaneseq
  %v3383 = vshrl.u32 %v3382, 7
  %v3384 = vsub.s32 %v3381, %v3383
  %v3385 = vrot.slane %v3363, %v3384
  %v3387 = vunpack.c.l.s4 1966171168
  %v3388 = vunpack.c.0.s8 %v3387
  %v3389 = vlaneseq
  %v3390 = vshrl.u32 %v3389, 7
  %v3391 = vsub.s32 %v3388, %v3390
  %v3392 = vrot.slane %v3364, %v3391
  %v3393 = vcombine.high %v3371, %v3371
  %v3394 = vcombine.high %v3378, %v3378
  %v3395 = vcombine.high %v3385, %v3385
  %v3396 = vcombine.high %v3392, %v3392
  %v3398 = vunpack.c.l.s4 1966171168
  %v3399 = vunpack.c.0.s8 %v3398
  %v3400 = vlaneseq
  %v3401 = vshrl.u32 %v3400, 7
  %v3402 = vsub.s32 %v3399, %v3401
  %v3403 = vrot.slane %v3176, %v3402
  %v3405 = vunpack.c.l.s4 1966171168
  %v3406 = vunpack.c.0.s8 %v3405
  %v3407 = vlaneseq
  %v3408 = vshrl.u32 %v3407, 7
  %v3409 = vsub.s32 %v3406, %v3408
  %v3410 = vrot.slane %v3403, %v3409
  %v3411 = vcombine.low %v3210, %v3224
  %v3412 = vcombine.low %v3232, %v3234
  %v3413 = vcombine.low %v3217, %v3231
  %v3414 = vcombine.low %v3233, %v3235
  %v3416 = vunpack.c.l.s4 1966171168
  %v3417 = vunpack.c.0.s8 %v3416
  %v3418 = vlaneseq
  %v3419 = vshrl.u32 %v3418, 7
  %v3420 = vsub.s32 %v3417, %v3419
  %v3421 = vrot.slane %v3411, %v3420
  %v3423 = vunpack.c.l.s4 1966171168
  %v3424 = vunpack.c.0.s8 %v3423
  %v3425 = vlaneseq
  %v3426 = vshrl.u32 %v3425, 7
  %v3427 = vsub.s32 %v3424, %v3426
  %v3428 = vrot.slane %v3412, %v3427
  %v3430 = vunpack.c.l.s4 1966171168
  %v3431 = vunpack.c.0.s8 %v3430
  %v3432 = vlaneseq
  %v3433 = vshrl.u32 %v3432, 7
  %v3434 = vsub.s32 %v3431, %v3433
  %v3435 = vrot.slane %v3413, %v3434
  %v3437 = vunpack.c.l.s4 1966171168
  %v3438 = vunpack.c.0.s8 %v3437
  %v3439 = vlaneseq
  %v3440 = vshrl.u32 %v3439, 7
  %v3441 = vsub.s32 %v3438, %v3440
  %v3442 = vrot.slane %v3414, %v3441
  %v3443 = vcombine.low %v3421, %v3428
  %v3444 = vcombine.low %v3435, %v3442
  %v3446 = vunpack.c.l.s4 1966171168
  %v3447 = vunpack.c.0.s8 %v3446
  %v3448 = vlaneseq
  %v3449 = vshrl.u32 %v3448, 7
  %v3450 = vsub.s32 %v3447, %v3449
  %v3451 = vrot.slane %v3443, %v3450
  %v3453 = vunpack.c.l.s4 1966171168
  %v3454 = vunpack.c.0.s8 %v3453
  %v3455 = vlaneseq
  %v3456 = vshrl.u32 %v3455, 7
  %v3457 = vsub.s32 %v3454, %v3456
  %v3458 = vrot.slane %v3444, %v3457
  %v3459 = vcombine.low %v3451, %v3458
  %v3460 = vcombine.low %v3259, %v3273
  %v3461 = vcombine.low %v3281, %v3283
  %v3462 = vcombine.low %v3266, %v3280
  %v3463 = vcombine.low %v3282, %v3284
  %v3465 = vunpack.c.l.s4 1966171168
  %v3466 = vunpack.c.0.s8 %v3465
  %v3467 = vlaneseq
  %v3468 = vshrl.u32 %v3467, 7
  %v3469 = vsub.s32 %v3466, %v3468
  %v3470 = vrot.slane %v3460, %v3469
  %v3472 = vunpack.c.l.s4 1966171168
  %v3473 = vunpack.c.0.s8 %v3472
  %v3474 = vlaneseq
  %v3475 = vshrl.u32 %v3474, 7
  %v3476 = vsub.s32 %v3473, %v3475
  %v3477 = vrot.slane %v3461, %v3476
  %v3479 = vunpack.c.l.s4 1966171168
  %v3480 = vunpack.c.0.s8 %v3479
  %v3481 = vlaneseq
  %v3482 = vshrl.u32 %v3481, 7
  %v3483 = vsub.s32 %v3480, %v3482
  %v3484 = vrot.slane %v3462, %v3483
  %v3486 = vunpack.c.l.s4 1966171168
  %v3487 = vunpack.c.0.s8 %v3486
  %v3488 = vlaneseq
  %v3489 = vshrl.u32 %v3488, 7
  %v3490 = vsub.s32 %v3487, %v3489
  %v3491 = vrot.slane %v3463, %v3490
  %v3492 = vcombine.low %v3470, %v3477
  %v3493 = vcombine.low %v3484, %v3491
  %v3495 = vunpack.c.l.s4 1966171168
  %v3496 = vunpack.c.0.s8 %v3495
  %v3497 = vlaneseq
  %v3498 = vshrl.u32 %v3497, 7
  %v3499 = vsub.s32 %v3496, %v3498
  %v3500 = vrot.slane %v3492, %v3499
  %v3502 = vunpack.c.l.s4 1966171168
  %v3503 = vunpack.c.0.s8 %v3502
  %v3504 = vlaneseq
  %v3505 = vshrl.u32 %v3504, 7
  %v3506 = vsub.s32 %v3503, %v3505
  %v3507 = vrot.slane %v3493, %v3506
  %v3508 = vcombine.low %v3500, %v3507
  %v3509 = vcombine.low %v3298, %v3322
  %v3510 = vcombine.low %v3336, %v3344
  %v3511 = vcombine.low %v3346, %v3329
  %v3512 = vcombine.low %v3343, %v3345
  %v3514 = vunpack.c.l.s4 1966171168
  %v3515 = vunpack.c.0.s8 %v3514
  %v3516 = vlaneseq
  %v3517 = vshrl.u32 %v3516, 7
  %v3518 = vsub.s32 %v3515, %v3517
  %v3519 = vrot.slane %v3509, %v3518
  %v3521 = vunpack.c.l.s4 1966171168
  %v3522 = vunpack.c.0.s8 %v3521
  %v3523 = vlaneseq
  %v3524 = vshrl.u32 %v3523, 7
  %v3525 = vsub.s32 %v3522, %v3524
  %v3526 = vrot.slane %v3510, %v3525
  %v3528 = vunpack.c.l.s4 1966171168
  %v3529 = vunpack.c.0.s8 %v3528
  %v3530 = vlaneseq
  %v3531 = vshrl.u32 %v3530, 7
  %v3532 = vsub.s32 %v3529, %v3531
  %v3533 = vrot.slane %v3511, %v3532
  %v3535 = vunpack.c.l.s4 1966171168
  %v3536 = vunpack.c.0.s8 %v3535
  %v3537 = vlaneseq
  %v3538 = vshrl.u32 %v3537, 7
  %v3539 = vsub.s32 %v3536, %v3538
  %v3540 = vrot.slane %v3512, %v3539
  %v3541 = vcombine.low %v3519, %v3526
  %v3542 = vcombine.low %v3533, %v3540
  %v3544 = vunpack.c.l.s4 1966171168
  %v3545 = vunpack.c.0.s8 %v3544
  %v3546 = vlaneseq
  %v3547 = vshrl.u32 %v3546, 7
  %v3548 = vsub.s32 %v3545, %v3547
  %v3549 = vrot.slane %v3541, %v3548
  %v3551 = vunpack.c.l.s4 1966171168
  %v3552 = vunpack.c.0.s8 %v3551
  %v3553 = vlaneseq
  %v3554 = vshrl.u32 %v3553, 7
  %v3555 = vsub.s32 %v3552, %v3554
  %v3556 = vrot.slane %v3542, %v3555
  %v3557 = vcombine.low %v3549, %v3556
  %v3558 = vcombine.low %v3347, %v3371
  %v3559 = vcombine.low %v3385, %v3393
  %v3560 = vcombine.low %v3395, %v3378
  %v3561 = vcombine.low %v3392, %v3394
  %v3563 = vunpack.c.l.s4 1966171168
  %v3564 = vunpack.c.0.s8 %v3563
  %v3565 = vlaneseq
  %v3566 = vshrl.u32 %v3565, 7
  %v3567 = vsub.s32 %v3564, %v3566
  %v3568 = vrot.slane %v3558, %v3567
  %v3570 = vunpack.c.l.s4 1966171168
  %v3571 = vunpack.c.0.s8 %v3570
  %v3572 = vlaneseq
  %v3573 = vshrl.u32 %v3572, 7
  %v3574 = vsub.s32 %v3571, %v3573
  %v3575 = vrot.slane %v3559, %v3574
  %v3577 = vunpack.c.l.s4 1966171168
  %v3578 = vunpack.c.0.s8 %v3577
  %v3579 = vlaneseq
  %v3580 = vshrl.u32 %v3579, 7
  %v3581 = vsub.s32 %v3578, %v3580
  %v3582 = vrot.slane %v3560, %v3581
  %v3584 = vunpack.c.l.s4 1966171168
  %v3585 = vunpack.c.0.s8 %v3584
  %v3586 = vlaneseq
  %v3587 = vshrl.u32 %v3586, 7
  %v3588 = vsub.s32 %v3585, %v3587
  %v3589 = vrot.slane %v3561, %v3588
  %v3590 = vcombine.low %v3568, %v3575
  %v3591 = vcombine.low %v3582, %v3589
  %v3593 = vunpack.c.l.s4 1966171168
  %v3594 = vunpack.c.0.s8 %v3593
  %v3595 = vlaneseq
  %v3596 = vshrl.u32 %v3595, 7
  %v3597 = vsub.s32 %v3594, %v3596
  %v3598 = vrot.slane %v3590, %v3597
  %v3600 = vunpack.c.l.s4 1966171168
  %v3601 = vunpack.c.0.s8 %v3600
  %v3602 = vlaneseq
  %v3603 = vshrl.u32 %v3602, 7
  %v3604 = vsub.s32 %v3601, %v3603
  %v3605 = vrot.slane %v3591, %v3604
  %v3606 = vcombine.low %v3598, %v3605
  %v3607 = vcombine.low %v3396, %v3410
  %v3609 = vunpack.c.l.s4 1966171168
  %v3610 = vunpack.c.0.s8 %v3609
  %v3611 = vlaneseq
  %v3612 = vshrl.u32 %v3611, 7
  %v3613 = vsub.s32 %v3610, %v3612
  %v3614 = vrot.slane %v3607, %v3613
  %v3616 = vunpack.c.l.s4 1966171168
  %v3617 = vunpack.c.0.s8 %v3616
  %v3618 = vlaneseq
  %v3619 = vshrl.u32 %v3618, 7
  %v3620 = vsub.s32 %v3617, %v3619
  %v3621 = vrot.slane %v3614, %v3620
  %v3627 = vpack.c.bf16 %v3508, %v3459
  %v3628 = vpack.c.bf16 %v3606, %v3557
  %v3629 = vpack.c.bf16 %v3621, %v3621
  %v3632 = vunpack.c.l.b16 %v1431
  %v3633 = vunpack.c.l.b16 %v1432
  %v3634 = vpack.c.b16 %v3633, %v3632
  %v3637 = vsel %vm224, %v3627, 0
  %v3640 = vsel %vm224, %v3628, 0
  %v3643 = vsel %vm224, %v3629, 0
  %3645 = vmatprep.subr.bf16.mxu0 0
  %3646 = vmatpush1.bf16.msra.mxu0 %v3634
  %3647 = vmatprep.subr.bf16.mxu0 0
  %3648 = vmatpush1.bf16.msra.mxu0 0
  %3649 = vmatprep.subr.bf16.mxu0 0
  %3650 = vmatpush1.bf16.msra.mxu0 0
  %3651 = vmatprep.subr.bf16.mxu0 0
  %3652 = vmatpush1.bf16.msra.mxu0 0
  %3653 = vmatprep.subr.bf16.mxu0 0
  %3654 = vmatpush1.bf16.msra.mxu0 0
  %3655 = vmatprep.subr.bf16.mxu0 0
  %3656 = vmatpush1.bf16.msra.mxu0 0
  %3657 = vmatprep.subr.bf16.mxu0 0
  %3658 = vmatpush1.bf16.msra.mxu0 0
  %3659 = vmatprep.subr.bf16.mxu0 0
  %3660 = vmatpush1.bf16.msra.mxu0 0
  %3661 = vmatprep.subr.bf16.mxu0 0
  %3662 = vmatpush1.bf16.msra.mxu0 0
  %3663 = vmatprep.subr.bf16.mxu0 0
  %3664 = vmatpush1.bf16.msra.mxu0 0
  %3665 = vmatprep.subr.bf16.mxu0 0
  %3666 = vmatpush1.bf16.msra.mxu0 0
  %3667 = vmatprep.subr.bf16.mxu0 0
  %3668 = vmatpush1.bf16.msra.mxu0 0
  %3669 = vmatprep.subr.bf16.mxu0 0
  %3670 = vmatpush1.bf16.msra.mxu0 0
  %3671 = vmatprep.subr.bf16.mxu0 0
  %3672 = vmatpush1.bf16.msra.mxu0 0
  %3673 = vmatprep.subr.bf16.mxu0 0
  %3674 = vmatpush1.bf16.msra.mxu0 0
  %3675 = vmatprep.subr.bf16.mxu0 0
  %3676 = vmatpush1.bf16.msra.mxu0 0
  %3677 = vmatprep.mubr.bf16.mxu0 0
  %3678 = vmatmul.mubr.bf16.gmra.mrb[0].mxu0 %v3637
  %v3679 = vpop.f32.mrb[0].mxu0
  %v3680 = vadd.f32 0.0, %v3679
  %v3681 = vpop.f32.mrb[0].mxu0
  %v3682 = vpop.f32.mrb[0].mxu0
  %v3683 = vadd.f32 0.0, %v3682
  %v3684 = vpop.f32.mrb[0].mxu0
  %3685 = vmatprep.mubr.bf16.mxu0 0
  %3686 = vmatmul.mubr.bf16.gmra.mrb[0].mxu0 %v3640
  %v3687 = vpop.f32.mrb[0].mxu0
  %v3688 = vadd.f32 0.0, %v3687
  %v3689 = vpop.f32.mrb[0].mxu0
  %v3690 = vpop.f32.mrb[0].mxu0
  %v3691 = vadd.f32 0.0, %v3690
  %v3692 = vpop.f32.mrb[0].mxu0
  %3693 = vmatprep.mubr.bf16.mxu0 0
  %3694 = vmatmul.mubr.bf16.gmra.mrb[0].mxu0 %v3643
  %v3695 = vpop.f32.mrb[0].mxu0
  %v3696 = vadd.f32 0.0, %v3695
  %v3697 = vpop.f32.mrb[0].mxu0
  %v3698 = vpop.f32.mrb[0].mxu0
  %v3699 = vpop.f32.mrb[0].mxu0
  %3700 = vdwg.mxu0
  %v3703 = vunpack.c.l.b16 %v1429
  %v3704 = vunpack.c.l.b16 %v1430
  %v3705 = vpack.c.b16 %v3704, %v3703
  %v3708 = vsel %vm224, %v2848, 0
  %v3711 = vsel %vm224, %v2849, 0
  %v3714 = vsel %vm224, %v2850, 0
  %3716 = vmatprep.subr.bf16.mxu0 0
  %3717 = vmatpush1.bf16.msra.mxu0 %v3705
  %3718 = vmatprep.subr.bf16.mxu0 0
  %3719 = vmatpush1.bf16.msra.mxu0 0
  %3720 = vmatprep.subr.bf16.mxu0 0
  %3721 = vmatpush1.bf16.msra.mxu0 0
  %3722 = vmatprep.subr.bf16.mxu0 0
  %3723 = vmatpush1.bf16.msra.mxu0 0
  %3724 = vmatprep.subr.bf16.mxu0 0
  %3725 = vmatpush1.bf16.msra.mxu0 0
  %3726 = vmatprep.subr.bf16.mxu0 0
  %3727 = vmatpush1.bf16.msra.mxu0 0
  %3728 = vmatprep.subr.bf16.mxu0 0
  %3729 = vmatpush1.bf16.msra.mxu0 0
  %3730 = vmatprep.subr.bf16.mxu0 0
  %3731 = vmatpush1.bf16.msra.mxu0 0
  %3732 = vmatprep.subr.bf16.mxu0 0
  %3733 = vmatpush1.bf16.msra.mxu0 0
  %3734 = vmatprep.subr.bf16.mxu0 0
  %3735 = vmatpush1.bf16.msra.mxu0 0
  %3736 = vmatprep.subr.bf16.mxu0 0
  %3737 = vmatpush1.bf16.msra.mxu0 0
  %3738 = vmatprep.subr.bf16.mxu0 0
  %3739 = vmatpush1.bf16.msra.mxu0 0
  %3740 = vmatprep.subr.bf16.mxu0 0
  %3741 = vmatpush1.bf16.msra.mxu0 0
  %3742 = vmatprep.subr.bf16.mxu0 0
  %3743 = vmatpush1.bf16.msra.mxu0 0
  %3744 = vmatprep.subr.bf16.mxu0 0
  %3745 = vmatpush1.bf16.msra.mxu0 0
  %3746 = vmatprep.subr.bf16.mxu0 0
  %3747 = vmatpush1.bf16.msra.mxu0 0
  %3748 = vmatprep.mubr.bf16.mxu0 0
  %3749 = vmatmul.mubr.bf16.gmra.mrb[0].mxu0 %v3708
  %v3750 = vpop.f32.mrb[0].mxu0
  %v3751 = vadd.f32 %v3680, %v3750
  %v3752 = vpop.f32.mrb[0].mxu0
  %v3753 = vpop.f32.mrb[0].mxu0
  %v3754 = vadd.f32 %v3683, %v3753
  %v3755 = vpop.f32.mrb[0].mxu0
  %3756 = vmatprep.mubr.bf16.mxu0 0
  %3757 = vmatmul.mubr.bf16.gmra.mrb[0].mxu0 %v3711
  %v3758 = vpop.f32.mrb[0].mxu0
  %v3759 = vadd.f32 %v3688, %v3758
  %v3760 = vpop.f32.mrb[0].mxu0
  %v3761 = vpop.f32.mrb[0].mxu0
  %v3762 = vadd.f32 %v3691, %v3761
  %v3763 = vpop.f32.mrb[0].mxu0
  %3764 = vmatprep.mubr.bf16.mxu0 0
  %3765 = vmatmul.mubr.bf16.gmra.mrb[0].mxu0 %v3714
  %v3766 = vpop.f32.mrb[0].mxu0
  %v3767 = vadd.f32 %v3696, %v3766
  %v3768 = vpop.f32.mrb[0].mxu0
  %v3769 = vpop.f32.mrb[0].mxu0
  %v3770 = vpop.f32.mrb[0].mxu0
  %3771 = vdwg.mxu0
  %v3772 = vadd.f32 %v1418, %v3751
  %v3773 = vadd.f32 %v1419, %v3754
  %v3774 = vadd.f32 %v1420, %v3759
  %v3775 = vadd.f32 %v1421, %v3762
  %v3776 = vadd.f32 %v1422, %v3767
  %v3777 = vlaneseq
  %v3778 = vshrl.u32 %v3777, 7
  %v3779 = vsub.s32 2, %v3778
  %v3780 = vrot.slane %v50, %v3779
  %v3781 = vadd.f32 %v3772, %v3780
  %v3782 = vadd.f32 %v3773, %v3780
  %v3783 = vadd.f32 %v3774, %v3780
  %v3784 = vadd.f32 %v3775, %v3780
  %v3785 = vadd.f32 %v3776, %v3780
  %v3786 = vsel %vm118, %v3781, 0.0
  %3787 = vadd.xlane.f32.xlu0 %v3786
  %v3788 = vpop.xlane.xlu0 %3787
  %v3789 = vsel %vm118, %v3782, 0.0
  %3790 = vadd.xlane.f32.xlu0 %v3789
  %v3791 = vpop.xlane.xlu0 %3790
  %v3792 = vsel %vm118, %v3783, 0.0
  %3793 = vadd.xlane.f32.xlu0 %v3792
  %v3794 = vpop.xlane.xlu0 %3793
  %v3795 = vsel %vm118, %v3784, 0.0
  %3796 = vadd.xlane.f32.xlu0 %v3795
  %v3797 = vpop.xlane.xlu0 %3796
  %v3798 = vsel %vm1048, %v3785, 0.0
  %3799 = vadd.xlane.f32.xlu0 %v3798
  %v3800 = vpop.xlane.xlu0 %3799
  %v3801 = vmul.f32 %v3788, %v125
  %v3802 = vmul.f32 %v3791, %v125
  %v3803 = vmul.f32 %v3794, %v125
  %v3804 = vmul.f32 %v3797, %v125
  %v3805 = vmul.f32 %v3800, %v125
  %v3806 = vsub.f32 %v3781, %v3801
  %v3807 = vsub.f32 %v3782, %v3802
  %v3808 = vsub.f32 %v3783, %v3803
  %v3809 = vsub.f32 %v3784, %v3804
  %v3810 = vsub.f32 %v3785, %v3805
  %v3811 = vmul.f32 %v3806, %v3806
  %v3812 = vmul.f32 %v3807, %v3807
  %v3813 = vmul.f32 %v3808, %v3808
  %v3814 = vmul.f32 %v3809, %v3809
  %v3815 = vmul.f32 %v3810, %v3810
  %v3816 = vsel %vm118, %v3811, 0.0
  %3817 = vadd.xlane.f32.xlu0 %v3816
  %v3818 = vpop.xlane.xlu0 %3817
  %v3819 = vsel %vm118, %v3812, 0.0
  %3820 = vadd.xlane.f32.xlu0 %v3819
  %v3821 = vpop.xlane.xlu0 %3820
  %v3822 = vsel %vm118, %v3813, 0.0
  %3823 = vadd.xlane.f32.xlu0 %v3822
  %v3824 = vpop.xlane.xlu0 %3823
  %v3825 = vsel %vm118, %v3814, 0.0
  %3826 = vadd.xlane.f32.xlu0 %v3825
  %v3827 = vpop.xlane.xlu0 %3826
  %v3828 = vsel %vm1048, %v3815, 0.0
  %3829 = vadd.xlane.f32.xlu0 %v3828
  %v3830 = vpop.xlane.xlu0 %3829
  %v3831 = vmul.f32 %v3818, %v125
  %v3832 = vmul.f32 %v3821, %v125
  %v3833 = vmul.f32 %v3824, %v125
  %v3834 = vmul.f32 %v3827, %v125
  %v3835 = vmul.f32 %v3830, %v125
  %v3836 = vadd.f32 %v3831, 1e-05
  %v3837 = vadd.f32 %v3832, 1e-05
  %v3838 = vadd.f32 %v3833, 1e-05
  %v3839 = vadd.f32 %v3834, 1e-05
  %v3840 = vadd.f32 %v3835, 1e-05
  %v3841 = vrsqrt.pop %v3836
  %v3842 = vrsqrt.pop %v3837
  %v3843 = vrsqrt.pop %v3838
  %v3844 = vrsqrt.pop %v3839
  %v3845 = vrsqrt.pop %v3840
  %v3846 = vmul.f32 %v3806, %v3841
  %v3847 = vmul.f32 %v3807, %v3842
  %v3848 = vmul.f32 %v3808, %v3843
  %v3849 = vmul.f32 %v3809, %v3844
  %v3850 = vmul.f32 %v3810, %v3845
  %v3851 = vlaneseq
  %v3852 = vshrl.u32 %v3851, 7
  %v3853 = vsub.s32 3, %v3852
  %v3854 = vrot.slane %v50, %v3853
  %v3855 = vmul.f32 %v3846, %v3854
  %v3856 = vmul.f32 %v3847, %v3854
  %v3857 = vmul.f32 %v3848, %v3854
  %v3858 = vmul.f32 %v3849, %v3854
  %v3859 = vmul.f32 %v3850, %v3854
  %v3860 = vlaneseq
  %v3861 = vshrl.u32 %v3860, 7
  %v3862 = vsub.s32 4, %v3861
  %v3863 = vrot.slane %v50, %v3862
  %v3864 = vadd.f32 %v3855, %v3863
  %v3865 = vadd.f32 %v3856, %v3863
  %v3866 = vadd.f32 %v3857, %v3863
  %v3867 = vadd.f32 %v3858, %v3863
  %v3868 = vadd.f32 %v3859, %v3863
  %v3869 = vpack.c.bf16 %v3865, %v3864
  %v3870 = vpack.c.bf16 %v3867, %v3866
  %v3871 = vpack.c.bf16 %v3868, %v3868
  %v3872 = vlaneseq
  %v3873 = vshrl.u32 %v3872, 7
  %v3874 = vsub.s32 5, %v3873
  %v3875 = vrot.slane %v50, %v3874
  %v3880 = vunpack.c.l.b16 %v1434
  %v3881 = vunpack.c.l.b16 %v1435
  %v3882 = vunpack.c.l.b16 %v1436
  %v3883 = vunpack.c.l.b16 %v1437
  %v3884 = vpack.c.b16 %v3881, %v3880
  %v3885 = vpack.c.b16 %v3883, %v3882
  %v3889 = vsel %vm118, %v3869, 0
  %v3892 = vsel %vm118, %v3870, 0
  %v3895 = vsel %vm118, %v3871, 0
  %3897 = vmatprep.subr.bf16.mxu0 0
  %3898 = vmatpush1.bf16.msra.mxu0 %v3884
  %3899 = vmatprep.subr.bf16.mxu0 0
  %3900 = vmatpush1.bf16.msra.mxu0 %v3885
  %3901 = vmatprep.subr.bf16.mxu0 0
  %3902 = vmatpush1.bf16.msra.mxu0 0
  %3903 = vmatprep.subr.bf16.mxu0 0
  %3904 = vmatpush1.bf16.msra.mxu0 0
  %3905 = vmatprep.subr.bf16.mxu0 0
  %3906 = vmatpush1.bf16.msra.mxu0 0
  %3907 = vmatprep.subr.bf16.mxu0 0
  %3908 = vmatpush1.bf16.msra.mxu0 0
  %3909 = vmatprep.subr.bf16.mxu0 0
  %3910 = vmatpush1.bf16.msra.mxu0 0
  %3911 = vmatprep.subr.bf16.mxu0 0
  %3912 = vmatpush1.bf16.msra.mxu0 0
  %3913 = vmatprep.subr.bf16.mxu0 0
  %3914 = vmatpush1.bf16.msra.mxu0 0
  %3915 = vmatprep.subr.bf16.mxu0 0
  %3916 = vmatpush1.bf16.msra.mxu0 0
  %3917 = vmatprep.subr.bf16.mxu0 0
  %3918 = vmatpush1.bf16.msra.mxu0 0
  %3919 = vmatprep.subr.bf16.mxu0 0
  %3920 = vmatpush1.bf16.msra.mxu0 0
  %3921 = vmatprep.subr.bf16.mxu0 0
  %3922 = vmatpush1.bf16.msra.mxu0 0
  %3923 = vmatprep.subr.bf16.mxu0 0
  %3924 = vmatpush1.bf16.msra.mxu0 0
  %3925 = vmatprep.subr.bf16.mxu0 0
  %3926 = vmatpush1.bf16.msra.mxu0 0
  %3927 = vmatprep.subr.bf16.mxu0 0
  %3928 = vmatpush1.bf16.msra.mxu0 0
  %3929 = vmatprep.mubr.bf16.mxu0 0
  %3930 = vmatmul.mubr.bf16.gmra.mrb[0].mxu0 %v3889
  %v3931 = vpop.f32.mrb[0].mxu0
  %v3932 = vadd.f32 %v3875, %v3931
  %v3933 = vpop.f32.mrb[0].mxu0
  %v3934 = vpop.f32.mrb[0].mxu0
  %v3935 = vadd.f32 %v3875, %v3934
  %v3936 = vpop.f32.mrb[0].mxu0
  %3937 = vmatprep.mubr.bf16.mxu0 0
  %3938 = vmatmul.mubr.bf16.gmra.mrb[0].mxu0 %v3892
  %v3939 = vpop.f32.mrb[0].mxu0
  %v3940 = vadd.f32 %v3875, %v3939
  %v3941 = vpop.f32.mrb[0].mxu0
  %v3942 = vpop.f32.mrb[0].mxu0
  %v3943 = vadd.f32 %v3875, %v3942
  %v3944 = vpop.f32.mrb[0].mxu0
  %3945 = vmatprep.mubr.bf16.mxu0 0
  %3946 = vmatmul.mubr.bf16.gmra.mrb[0].mxu0 %v3895
  %v3947 = vpop.f32.mrb[0].mxu0
  %v3948 = vadd.f32 %v3875, %v3947
  %v3949 = vpop.f32.mrb[0].mxu0
  %v3950 = vpop.f32.mrb[0].mxu0
  %v3951 = vpop.f32.mrb[0].mxu0
  %3952 = vdwg.mxu0
  %v3953 = vmul.f32 %v3932, 1.702
  %v3954 = vmul.f32 %v3935, 1.702
  %v3955 = vmul.f32 %v3940, 1.702
  %v3956 = vmul.f32 %v3943, 1.702
  %v3957 = vmul.f32 %v3948, 1.702
  %v3958 = vxor.u32 %v3953, 2147483648
  %v3959 = vxor.u32 %v3954, 2147483648
  %v3960 = vxor.u32 %v3955, 2147483648
  %v3961 = vxor.u32 %v3956, 2147483648
  %v3962 = vxor.u32 %v3957, 2147483648
  %v3963 = vmul.f32 %v3958, 1.442695
  %v3964 = vpow.pop %v3963
  %v3965 = vmul.f32 %v3959, 1.442695
  %v3966 = vpow.pop %v3965
  %v3967 = vmul.f32 %v3960, 1.442695
  %v3968 = vpow.pop %v3967
  %v3969 = vmul.f32 %v3961, 1.442695
  %v3970 = vpow.pop %v3969
  %v3971 = vmul.f32 %v3962, 1.442695
  %v3972 = vpow.pop %v3971
  %v3973 = vadd.f32 %v3964, 1.0
  %v3974 = vadd.f32 %v3966, 1.0
  %v3975 = vadd.f32 %v3968, 1.0
  %v3976 = vadd.f32 %v3970, 1.0
  %v3977 = vadd.f32 %v3972, 1.0
  %v3978 = vrcp.pop %v3973
  %v3979 = vmul.f32 1.0, %v3978
  %v3980 = vrcp.pop %v3974
  %v3981 = vmul.f32 1.0, %v3980
  %v3982 = vrcp.pop %v3975
  %v3983 = vmul.f32 1.0, %v3982
  %v3984 = vrcp.pop %v3976
  %v3985 = vmul.f32 1.0, %v3984
  %v3986 = vrcp.pop %v3977
  %v3987 = vmul.f32 1.0, %v3986
  %v3988 = vmul.f32 %v3932, %v3979
  %v3989 = vmul.f32 %v3935, %v3981
  %v3990 = vmul.f32 %v3940, %v3983
  %v3991 = vmul.f32 %v3943, %v3985
  %v3992 = vmul.f32 %v3948, %v3987
  %v3993 = vpack.c.bf16 %v3989, %v3988
  %v3994 = vpack.c.bf16 %v3991, %v3990
  %v3995 = vpack.c.bf16 %v3992, %v3992
  %v3996 = vlaneseq
  %v3997 = vshrl.u32 %v3996, 7
  %v3998 = vsub.s32 6, %v3997
  %v3999 = vrot.slane %v50, %v3998
  %v4008 = vunpack.c.l.b16 %v1439
  %v4009 = vunpack.c.l.b16 %v1440
  %v4010 = vunpack.c.l.b16 %v1441
  %v4011 = vunpack.c.l.b16 %v1442
  %v4012 = vunpack.c.l.b16 %v1443
  %v4013 = vunpack.c.l.b16 %v1444
  %v4014 = vunpack.c.l.b16 %v1445
  %v4015 = vunpack.c.l.b16 %v1446
  %v4016 = vpack.c.b16 %v4009, %v4008
  %v4017 = vpack.c.b16 %v4011, %v4010
  %v4018 = vpack.c.b16 %v4013, %v4012
  %v4019 = vpack.c.b16 %v4015, %v4014
  %v4025 = vsel %vm916, %v3993, 0
  %v4028 = vsel %vm916, %v3994, 0
  %v4031 = vsel %vm916, %v3995, 0
  %4033 = vmatprep.subr.bf16.mxu0 0
  %4034 = vmatpush1.bf16.msra.mxu0 %v4016
  %4035 = vmatprep.subr.bf16.mxu0 0
  %4036 = vmatpush1.bf16.msra.mxu0 %v4017
  %4037 = vmatprep.subr.bf16.mxu0 0
  %4038 = vmatpush1.bf16.msra.mxu0 %v4018
  %4039 = vmatprep.subr.bf16.mxu0 0
  %4040 = vmatpush1.bf16.msra.mxu0 %v4019
  %4041 = vmatprep.subr.bf16.mxu0 0
  %4042 = vmatpush1.bf16.msra.mxu0 0
  %4043 = vmatprep.subr.bf16.mxu0 0
  %4044 = vmatpush1.bf16.msra.mxu0 0
  %4045 = vmatprep.subr.bf16.mxu0 0
  %4046 = vmatpush1.bf16.msra.mxu0 0
  %4047 = vmatprep.subr.bf16.mxu0 0
  %4048 = vmatpush1.bf16.msra.mxu0 0
  %4049 = vmatprep.subr.bf16.mxu0 0
  %4050 = vmatpush1.bf16.msra.mxu0 0
  %4051 = vmatprep.subr.bf16.mxu0 0
  %4052 = vmatpush1.bf16.msra.mxu0 0
  %4053 = vmatprep.subr.bf16.mxu0 0
  %4054 = vmatpush1.bf16.msra.mxu0 0
  %4055 = vmatprep.subr.bf16.mxu0 0
  %4056 = vmatpush1.bf16.msra.mxu0 0
  %4057 = vmatprep.subr.bf16.mxu0 0
  %4058 = vmatpush1.bf16.msra.mxu0 0
  %4059 = vmatprep.subr.bf16.mxu0 0
  %4060 = vmatpush1.bf16.msra.mxu0 0
  %4061 = vmatprep.subr.bf16.mxu0 0
  %4062 = vmatpush1.bf16.msra.mxu0 0
  %4063 = vmatprep.subr.bf16.mxu0 0
  %4064 = vmatpush1.bf16.msra.mxu0 0
  %4065 = vmatprep.mubr.bf16.mxu0 0
  %4066 = vmatmul.mubr.bf16.gmra.mrb[0].mxu0 %v4025
  %v4067 = vpop.f32.mrb[0].mxu0
  %v4068 = vadd.f32 %v3999, %v4067
  %v4069 = vpop.f32.mrb[0].mxu0
  %v4070 = vpop.f32.mrb[0].mxu0
  %v4071 = vadd.f32 %v3999, %v4070
  %v4072 = vpop.f32.mrb[0].mxu0
  %4073 = vmatprep.mubr.bf16.mxu0 0
  %4074 = vmatmul.mubr.bf16.gmra.mrb[0].mxu0 %v4028
  %v4075 = vpop.f32.mrb[0].mxu0
  %v4076 = vadd.f32 %v3999, %v4075
  %v4077 = vpop.f32.mrb[0].mxu0
  %v4078 = vpop.f32.mrb[0].mxu0
  %v4079 = vadd.f32 %v3999, %v4078
  %v4080 = vpop.f32.mrb[0].mxu0
  %4081 = vmatprep.mubr.bf16.mxu0 0
  %4082 = vmatmul.mubr.bf16.gmra.mrb[0].mxu0 %v4031
  %v4083 = vpop.f32.mrb[0].mxu0
  %v4084 = vadd.f32 %v3999, %v4083
  %v4085 = vpop.f32.mrb[0].mxu0
  %v4086 = vpop.f32.mrb[0].mxu0
  %v4087 = vpop.f32.mrb[0].mxu0
  %4088 = vdwg.mxu0
  %v4089 = vadd.f32 %v3781, %v4068
  %v4090 = vadd.f32 %v3782, %v4071
  %v4091 = vadd.f32 %v3783, %v4076
  %v4092 = vadd.f32 %v3784, %v4079
  %v4093 = vadd.f32 %v3785, %v4084
  %v4094 = vmul.u32 %v56, 17
  %vm4095 = vcmp.eq.s32.totalorder %v58, %v4094
  %v4096 = vsel %vm4095, 1, 0
  %v4097 = vcvt.s32.f32 %v4096
  %vm4098 = vcmask 277504
  %v4100 = vsel %vm4098, %v4097, 0
  %vm4102 = vcmask 1041408
  %v4104 = vsel %vm4102, %v4093, 0
  %4106 = vmatprep.subr.mxu0 0.0
  %4107 = vmatpush1.msra.mxu0 %v4089
  %4108 = vmatprep.subr.mxu0 0.0
  %4109 = vmatpush1.msra.mxu0 %v4090
  %4110 = vmatprep.subr.mxu0 0.0
  %4111 = vmatpush1.msra.mxu0 %v4091
  %4112 = vmatprep.subr.mxu0 0.0
  %4113 = vmatpush1.msra.mxu0 %v4092
  %4114 = vmatprep.subr.mxu0 0.0
  %4115 = vmatpush1.msra.mxu0 %v4104
  %4116 = vmatprep.subr.mxu0 0.0
  %4117 = vmatpush1.msra.mxu0 0.0
  %4118 = vmatprep.subr.mxu0 0.0
  %4119 = vmatpush1.msra.mxu0 0.0
  %4120 = vmatprep.subr.mxu0 0.0
  %4121 = vmatpush1.msra.mxu0 0.0
  %4122 = vmatprep.subr.mxu0 0.0
  %4123 = vmatpush1.msra.mxu0 0.0
  %4124 = vmatprep.subr.mxu0 0.0
  %4125 = vmatpush1.msra.mxu0 0.0
  %4126 = vmatprep.subr.mxu0 0.0
  %4127 = vmatpush1.msra.mxu0 0.0
  %4128 = vmatprep.subr.mxu0 0.0
  %4129 = vmatpush1.msra.mxu0 0.0
  %4130 = vmatprep.subr.mxu0 0.0
  %4131 = vmatpush1.msra.mxu0 0.0
  %4132 = vmatprep.subr.mxu0 0.0
  %4133 = vmatpush1.msra.mxu0 0.0
  %4134 = vmatprep.subr.mxu0 0.0
  %4135 = vmatpush1.msra.mxu0 0.0
  %4136 = vmatprep.subr.mxu0 0.0
  %4137 = vmatpush1.msra.mxu0 0.0
  %4138 = vmatprep.subr.mxu0 0.0
  %4139 = vmatpush1.msra.mxu0 0.0
  %4140 = vmatprep.subr.mxu0 0.0
  %4141 = vmatpush1.msra.mxu0 0.0
  %4142 = vmatprep.subr.mxu0 0.0
  %4143 = vmatpush1.msra.mxu0 0.0
  %4144 = vmatprep.subr.mxu0 0.0
  %4145 = vmatpush1.msra.mxu0 0.0
  %4146 = vmatprep.subr.mxu0 0.0
  %4147 = vmatpush1.msra.mxu0 0.0
  %4148 = vmatprep.subr.mxu0 0.0
  %4149 = vmatpush1.msra.mxu0 0.0
  %4150 = vmatprep.subr.mxu0 0.0
  %4151 = vmatpush1.msra.mxu0 0.0
  %4152 = vmatprep.subr.mxu0 0.0
  %4153 = vmatpush1.msra.mxu0 0.0
  %4154 = vmatprep.subr.mxu0 0.0
  %4155 = vmatpush1.msra.mxu0 0.0
  %4156 = vmatprep.subr.mxu0 0.0
  %4157 = vmatpush1.msra.mxu0 0.0
  %4158 = vmatprep.subr.mxu0 0.0
  %4159 = vmatpush1.msra.mxu0 0.0
  %4160 = vmatprep.subr.mxu0 0.0
  %4161 = vmatpush1.msra.mxu0 0.0
  %4162 = vmatprep.subr.mxu0 0.0
  %4163 = vmatpush1.msra.mxu0 0.0
  %4164 = vmatprep.subr.mxu0 0.0
  %4165 = vmatpush1.msra.mxu0 0.0
  %4166 = vmatprep.subr.mxu0 0.0
  %4167 = vmatpush1.msra.mxu0 0.0
  %4168 = vmatprep.subr.mxu0 0.0
  %4169 = vmatpush1.msra.mxu0 0.0
  %4170 = vmatprep.mubr.f32.mxu0 0.0
  %4171 = vmatmul.mubr.f32.gmra.mrb[0].mxu0 %v4100
  %v4172 = vpop.f32.mrb[0].mxu0
  %v4173 = vadd.f32 0.0, %v4172
  %v4174 = vpop.f32.mrb[0].mxu0
  %4175 = vdwg.mxu0
  %v4176 = vsel %vm1048, %v4173, 0.0
  %4177 = vadd.xlane.f32.xlu0 %v4176
  %v4178 = vpop.xlane.xlu0 %4177
  %v4179 = vmul.f32 %v4178, %v125
  %v4180 = vsub.f32 %v4173, %v4179
  %v4181 = vmul.f32 %v4180, %v4180
  %v4182 = vsel %vm1048, %v4181, 0.0
  %4183 = vadd.xlane.f32.xlu0 %v4182
  %v4184 = vpop.xlane.xlu0 %4183
  %v4185 = vmul.f32 %v4184, %v125
  %v4186 = vadd.f32 %v4185, 1e-05
  %v4187 = vrsqrt.pop %v4186
  %v4188 = vmul.f32 %v4180, %v4187
  %v4189 = vlaneseq
  %v4190 = vshrl.u32 %v4189, 7
  %v4191 = vsub.s32 7, %v4190
  %v4192 = vrot.slane %v50, %v4191
  %v4193 = vmul.f32 %v4188, %v4192
  %v4194 = vlaneseq
  %v4195 = vshrl.u32 %v4194, 7
  %v4196 = vsub.s32 0, %v4195
  %v4197 = vrot.slane %v51, %v4196
  %v4198 = vadd.f32 %v4193, %v4197
  %v4199 = vpack.c.bf16 %v4198, %v4198
  %s4200 = scalar_lea.vmem %s9, 16
  %v4201 = vld [vmem:[%s4200] sm:$0xf]
  %v4202 = vld [vmem:[%s4200 + $0x4] sm:$0xf]
  %v4203 = vld [vmem:[%s4200 + $0x8] sm:$0xf]
  %v4204 = vld [vmem:[%s4200 + $0xc] sm:$0xf]
  %v4205 = vlaneseq
  %v4206 = vshrl.u32 %v4205, 7
  %v4207 = vsub.s32 1, %v4206
  %v4208 = vrot.slane %v51, %v4207
  %v4213 = vunpack.c.l.b16 %v4201
  %v4214 = vunpack.c.l.b16 %v4202
  %v4215 = vunpack.c.l.b16 %v4203
  %v4216 = vunpack.c.l.b16 %v4204
  %v4217 = vpack.c.b16 %v4214, %v4213
  %v4218 = vpack.c.b16 %v4216, %v4215
  %v4222 = vsel %vm118, %v4199, 0
  %4224 = vmatprep.subr.bf16.mxu0 0
  %4225 = vmatpush1.bf16.msra.mxu0 %v4217
  %4226 = vmatprep.subr.bf16.mxu0 0
  %4227 = vmatpush1.bf16.msra.mxu0 %v4218
  %4228 = vmatprep.subr.bf16.mxu0 0
  %4229 = vmatpush1.bf16.msra.mxu0 0
  %4230 = vmatprep.subr.bf16.mxu0 0
  %4231 = vmatpush1.bf16.msra.mxu0 0
  %4232 = vmatprep.subr.bf16.mxu0 0
  %4233 = vmatpush1.bf16.msra.mxu0 0
  %4234 = vmatprep.subr.bf16.mxu0 0
  %4235 = vmatpush1.bf16.msra.mxu0 0
  %4236 = vmatprep.subr.bf16.mxu0 0
  %4237 = vmatpush1.bf16.msra.mxu0 0
  %4238 = vmatprep.subr.bf16.mxu0 0
  %4239 = vmatpush1.bf16.msra.mxu0 0
  %4240 = vmatprep.subr.bf16.mxu0 0
  %4241 = vmatpush1.bf16.msra.mxu0 0
  %4242 = vmatprep.subr.bf16.mxu0 0
  %4243 = vmatpush1.bf16.msra.mxu0 0
  %4244 = vmatprep.subr.bf16.mxu0 0
  %4245 = vmatpush1.bf16.msra.mxu0 0
  %4246 = vmatprep.subr.bf16.mxu0 0
  %4247 = vmatpush1.bf16.msra.mxu0 0
  %4248 = vmatprep.subr.bf16.mxu0 0
  %4249 = vmatpush1.bf16.msra.mxu0 0
  %4250 = vmatprep.subr.bf16.mxu0 0
  %4251 = vmatpush1.bf16.msra.mxu0 0
  %4252 = vmatprep.subr.bf16.mxu0 0
  %4253 = vmatpush1.bf16.msra.mxu0 0
  %4254 = vmatprep.subr.bf16.mxu0 0
  %4255 = vmatpush1.bf16.msra.mxu0 0
  %4256 = vmatprep.mubr.bf16.mxu0 0
  %4257 = vmatmul.mubr.bf16.gmra.mrb[0].mxu0 %v4222
  %v4258 = vpop.f32.mrb[0].mxu0
  %v4259 = vadd.f32 %v4208, %v4258
  %v4260 = vpop.f32.mrb[0].mxu0
  %v4261 = vpop.f32.mrb[0].mxu0
  %v4262 = vpop.f32.mrb[0].mxu0
  %4263 = vdwg.mxu0
  %v4264 = vpack.c.bf16 %v1131, %v1131
  %v4265 = vld [vmem:[%s11] sm:$0xf]
  %v4266 = vld [vmem:[%s11 + $0x4] sm:$0xf]
  %v4267 = vpack.c.bf16 %v4259, %v4259
  %v4268 = vld [vmem:[%s12] sm:$0xf]
  %v4269 = vld [vmem:[%s12 + $0x4] sm:$0xf]
  %v4272 = vunpack.c.l.b16 %v4268
  %v4273 = vunpack.c.l.b16 %v4269
  %v4274 = vpack.c.b16 %v4273, %v4272
  %v4277 = vsel %vm224, %v4267, 0
  %4279 = vmatprep.subr.bf16.mxu0 0
  %4280 = vmatpush1.bf16.msra.mxu0 %v4274
  %4281 = vmatprep.subr.bf16.mxu0 0
  %4282 = vmatpush1.bf16.msra.mxu0 0
  %4283 = vmatprep.subr.bf16.mxu0 0
  %4284 = vmatpush1.bf16.msra.mxu0 0
  %4285 = vmatprep.subr.bf16.mxu0 0
  %4286 = vmatpush1.bf16.msra.mxu0 0
  %4287 = vmatprep.subr.bf16.mxu0 0
  %4288 = vmatpush1.bf16.msra.mxu0 0
  %4289 = vmatprep.subr.bf16.mxu0 0
  %4290 = vmatpush1.bf16.msra.mxu0 0
  %4291 = vmatprep.subr.bf16.mxu0 0
  %4292 = vmatpush1.bf16.msra.mxu0 0
  %4293 = vmatprep.subr.bf16.mxu0 0
  %4294 = vmatpush1.bf16.msra.mxu0 0
  %4295 = vmatprep.subr.bf16.mxu0 0
  %4296 = vmatpush1.bf16.msra.mxu0 0
  %4297 = vmatprep.subr.bf16.mxu0 0
  %4298 = vmatpush1.bf16.msra.mxu0 0
  %4299 = vmatprep.subr.bf16.mxu0 0
  %4300 = vmatpush1.bf16.msra.mxu0 0
  %4301 = vmatprep.subr.bf16.mxu0 0
  %4302 = vmatpush1.bf16.msra.mxu0 0
  %4303 = vmatprep.subr.bf16.mxu0 0
  %4304 = vmatpush1.bf16.msra.mxu0 0
  %4305 = vmatprep.subr.bf16.mxu0 0
  %4306 = vmatpush1.bf16.msra.mxu0 0
  %4307 = vmatprep.subr.bf16.mxu0 0
  %4308 = vmatpush1.bf16.msra.mxu0 0
  %4309 = vmatprep.subr.bf16.mxu0 0
  %4310 = vmatpush1.bf16.msra.mxu0 0
  %4311 = vmatprep.mubr.bf16.mxu0 0
  %4312 = vmatmul.mubr.bf16.gmra.mrb[0].mxu0 %v4277
  %v4313 = vpop.f32.mrb[0].mxu0
  %v4314 = vadd.f32 0.0, %v4313
  %v4315 = vpop.f32.mrb[0].mxu0
  %v4316 = vpop.f32.mrb[0].mxu0
  %v4317 = vpop.f32.mrb[0].mxu0
  %4318 = vdwg.mxu0
  %v4321 = vunpack.c.l.b16 %v4265
  %v4322 = vunpack.c.l.b16 %v4266
  %v4323 = vpack.c.b16 %v4322, %v4321
  %v4326 = vsel %vm224, %v4264, 0
  %4328 = vmatprep.subr.bf16.mxu0 0
  %4329 = vmatpush1.bf16.msra.mxu0 %v4323
  %4330 = vmatprep.subr.bf16.mxu0 0
  %4331 = vmatpush1.bf16.msra.mxu0 0
  %4332 = vmatprep.subr.bf16.mxu0 0
  %4333 = vmatpush1.bf16.msra.mxu0 0
  %4334 = vmatprep.subr.bf16.mxu0 0
  %4335 = vmatpush1.bf16.msra.mxu0 0
  %4336 = vmatprep.subr.bf16.mxu0 0
  %4337 = vmatpush1.bf16.msra.mxu0 0
  %4338 = vmatprep.subr.bf16.mxu0 0
  %4339 = vmatpush1.bf16.msra.mxu0 0
  %4340 = vmatprep.subr.bf16.mxu0 0
  %4341 = vmatpush1.bf16.msra.mxu0 0
  %4342 = vmatprep.subr.bf16.mxu0 0
  %4343 = vmatpush1.bf16.msra.mxu0 0
  %4344 = vmatprep.subr.bf16.mxu0 0
  %4345 = vmatpush1.bf16.msra.mxu0 0
  %4346 = vmatprep.subr.bf16.mxu0 0
  %4347 = vmatpush1.bf16.msra.mxu0 0
  %4348 = vmatprep.subr.bf16.mxu0 0
  %4349 = vmatpush1.bf16.msra.mxu0 0
  %4350 = vmatprep.subr.bf16.mxu0 0
  %4351 = vmatpush1.bf16.msra.mxu0 0
  %4352 = vmatprep.subr.bf16.mxu0 0
  %4353 = vmatpush1.bf16.msra.mxu0 0
  %4354 = vmatprep.subr.bf16.mxu0 0
  %4355 = vmatpush1.bf16.msra.mxu0 0
  %4356 = vmatprep.subr.bf16.mxu0 0
  %4357 = vmatpush1.bf16.msra.mxu0 0
  %4358 = vmatprep.subr.bf16.mxu0 0
  %4359 = vmatpush1.bf16.msra.mxu0 0
  %4360 = vmatprep.mubr.bf16.mxu0 0
  %4361 = vmatmul.mubr.bf16.gmra.mrb[0].mxu0 %v4326
  %v4362 = vpop.f32.mrb[0].mxu0
  %v4363 = vadd.f32 %v4314, %v4362
  %v4364 = vpop.f32.mrb[0].mxu0
  %v4365 = vpop.f32.mrb[0].mxu0
  %v4366 = vpop.f32.mrb[0].mxu0
  %4367 = vdwg.mxu0
  %v4368 = vlaneseq
  %v4369 = vshrl.u32 %v4368, 7
  %v4370 = vsub.s32 2, %v4369
  %v4371 = vrot.slane %v51, %v4370
  %v4372 = vadd.f32 %v4363, %v4371
  %v4373 = vmax.f32 %v4372, 0.0
  %v4374 = vpack.c.bf16 %v4373, %v4373
  %v4375 = vld [vmem:[%s13] sm:$0xf]
  %v4376 = vld [vmem:[%s13 + $0x4] sm:$0xf]
  %v4377 = vld [vmem:[%s13 + $0x8] sm:$0xf]
  %v4378 = vld [vmem:[%s13 + $0xc] sm:$0xf]
  %v4379 = vld [vmem:[%s13 + $0x10] sm:$0xf]
  %v4380 = vld [vmem:[%s13 + $0x14] sm:$0xf]
  %v4381 = vlaneseq
  %v4382 = vshrl.u32 %v4381, 7
  %v4383 = vsub.s32 3, %v4382
  %v4384 = vrot.slane %v51, %v4383
  %v4391 = vunpack.c.l.b16 %v4375
  %v4392 = vunpack.c.l.b16 %v4376
  %v4393 = vunpack.c.l.b16 %v4377
  %v4394 = vunpack.c.l.b16 %v4378
  %v4395 = vunpack.c.l.b16 %v4379
  %v4396 = vunpack.c.l.b16 %v4380
  %v4397 = vpack.c.b16 %v4392, %v4391
  %v4398 = vpack.c.b16 %v4394, %v4393
  %v4399 = vpack.c.b16 %v4396, %v4395
  %vm4403 = vcmask 392192
  %v4405 = vsel %vm4403, %v4374, 0
  %4407 = vmatprep.subr.bf16.mxu0 0
  %4408 = vmatpush1.bf16.msra.mxu0 %v4397
  %4409 = vmatprep.subr.bf16.mxu0 0
  %4410 = vmatpush1.bf16.msra.mxu0 %v4398
  %4411 = vmatprep.subr.bf16.mxu0 0
  %4412 = vmatpush1.bf16.msra.mxu0 %v4399
  %4413 = vmatprep.subr.bf16.mxu0 0
  %4414 = vmatpush1.bf16.msra.mxu0 0
  %4415 = vmatprep.subr.bf16.mxu0 0
  %4416 = vmatpush1.bf16.msra.mxu0 0
  %4417 = vmatprep.subr.bf16.mxu0 0
  %4418 = vmatpush1.bf16.msra.mxu0 0
  %4419 = vmatprep.subr.bf16.mxu0 0
  %4420 = vmatpush1.bf16.msra.mxu0 0
  %4421 = vmatprep.subr.bf16.mxu0 0
  %4422 = vmatpush1.bf16.msra.mxu0 0
  %4423 = vmatprep.subr.bf16.mxu0 0
  %4424 = vmatpush1.bf16.msra.mxu0 0
  %4425 = vmatprep.subr.bf16.mxu0 0
  %4426 = vmatpush1.bf16.msra.mxu0 0
  %4427 = vmatprep.subr.bf16.mxu0 0
  %4428 = vmatpush1.bf16.msra.mxu0 0
  %4429 = vmatprep.subr.bf16.mxu0 0
  %4430 = vmatpush1.bf16.msra.mxu0 0
  %4431 = vmatprep.subr.bf16.mxu0 0
  %4432 = vmatpush1.bf16.msra.mxu0 0
  %4433 = vmatprep.subr.bf16.mxu0 0
  %4434 = vmatpush1.bf16.msra.mxu0 0
  %4435 = vmatprep.subr.bf16.mxu0 0
  %4436 = vmatpush1.bf16.msra.mxu0 0
  %4437 = vmatprep.subr.bf16.mxu0 0
  %4438 = vmatpush1.bf16.msra.mxu0 0
  %4439 = vmatprep.mubr.bf16.mxu0 0
  %4440 = vmatmul.mubr.bf16.gmra.mrb[0].mxu0 %v4405
  %v4441 = vpop.f32.mrb[0].mxu0
  %v4442 = vadd.f32 %v4384, %v4441
  %v4443 = vpop.f32.mrb[0].mxu0
  %v4444 = vpop.f32.mrb[0].mxu0
  %v4445 = vpop.f32.mrb[0].mxu0
  %4446 = vdwg.mxu0
  %4447 = vst [vmem:[%s14] sm:$0x3] %v4442
  // Predicated region
  $region58: #{_forward_impl.1} parent=0 // pred_check
    _
  $region59: #{_forward_impl.1} parent=0 // pred_check_branch
    %4449 = sbr.rel (0) target = $region61
  $region60: #{_forward_impl.1} parent=0 // pred_region
    _
  $region61: #{_forward_impl.1} parent=0 // pred_fallthru
    _
  // Predicated region
  $region62: #{_forward_impl.1} parent=0 // pred_check
    _
  $region63: #{_forward_impl.1} parent=0 // pred_check_branch
    %4451 = sbr.rel (0) target = $region65
  $region64: #{_forward_impl.1} parent=0 // pred_region
    _
  $region65: #{_forward_impl.1} parent=0 // pred_fallthru
    _

</llo_original>
